<compile_context>
chip_gen: v6e
topology: v6e:2x2x1
jax: 0.10.0
libtpu: 0.0.40
codegen_flags: <defaults>
</compile_context>

<pallas_src>
import functools

import jax
import jax.numpy as jnp
from jax.experimental import pallas as pl
from jax.experimental.pallas import tpu as pltpu

IN_FEATURES = 1080
HIDDEN = 1080
NUM_CLASSES = 4

LANE = 128
F_PAD = 1152   # round_up(1080, 128)
H_PAD = 1152   # round_up(1080, 128)
C_PAD = 128    # round_up(4, 128) -> lane-dense output store


def _round_up(a, m):
    return (a + m - 1) // m * m


def _mlp_kernel(x_ref, w1_ref, b1_ref, w2_ref, b2_ref, o_ref):
    # Two MXU matmuls (bf16 operands, f32 accumulation) + bias adds + ReLU, fused.
    x = x_ref[...]                                                   # (TB, F_PAD) bf16
    h = jnp.dot(x, w1_ref[...], preferred_element_type=jnp.float32)  # (TB, H_PAD) f32
    h = jnp.maximum(h + b1_ref[...], 0.0)                            # bias + ReLU
    h = h.astype(jnp.bfloat16)                                       # bf16 for 2nd MXU pass
    out = jnp.dot(h, w2_ref[...], preferred_element_type=jnp.float32)
    o_ref[...] = (out + b2_ref[...]).astype(o_ref.dtype)             # (TB, C_PAD)


def classifier_forward(x, w1p, b1p, w2p, b2p):
    """x: any shape (B, ...) flattening to (B, 1080). Params from prepare_params().

    Returns (B, NUM_CLASSES) float32.
    """
    B = x.shape[0]
    x2d = x.reshape(B, -1)
    assert x2d.shape[1] == IN_FEATURES, x2d.shape
    x2d = x2d.astype(jnp.bfloat16)

    # Batch tile: big enough to amortize per-step overhead, small enough that the
    # double-buffered x/out tiles + resident (~3 MiB bf16) weights fit easily even in
    # v7x's 32 MiB default scoped VMEM.
    TB = min(256, _round_up(B, 8))
    B_pad = _round_up(B, TB)

    x_pad = jnp.pad(x2d, ((0, B_pad - B), (0, F_PAD - IN_FEATURES)))

    grid = (B_pad // TB,)

    cost = pl.CostEstimate(
        flops=2 * B_pad * F_PAD * H_PAD + 2 * B_pad * H_PAD * C_PAD,
        transcendentals=0,
        bytes_accessed=(w1p.size * 2 + w2p.size * 2 + b1p.size * 4 + b2p.size * 4
                        + x_pad.size * 2 + B_pad * C_PAD * 4),
    )

    out = pl.pallas_call(
        _mlp_kernel,
        out_shape=jax.ShapeDtypeStruct((B_pad, C_PAD), jnp.float32),
        grid=grid,
        in_specs=[
            pl.BlockSpec((TB, F_PAD), lambda i: (i, 0)),       # x tile (pipelined)
            pl.BlockSpec((F_PAD, H_PAD), lambda i: (0, 0)),    # w1 resident
            pl.BlockSpec((1, H_PAD), lambda i: (0, 0)),        # b1 resident
            pl.BlockSpec((H_PAD, C_PAD), lambda i: (0, 0)),    # w2 resident
            pl.BlockSpec((1, C_PAD), lambda i: (0, 0)),        # b2 resident
        ],
        out_specs=pl.BlockSpec((TB, C_PAD), lambda i: (i, 0)),
        compiler_params=pltpu.CompilerParams(
            dimension_semantics=("parallel",),                 # v7x: shard batch over 2 TCs
        ),
        cost_estimate=cost,
    )(x_pad, w1p, b1p, w2p, b2p)

    return out[:B, :NUM_CLASSES]


def init_params(key):
    """Deterministic synthetic parameters in PyTorch Linear convention (f32)."""
    k1, k2, k3, k4 = jax.random.split(key, 4)
    bound1 = 1.0 / jnp.sqrt(IN_FEATURES)
    w1_pt = jax.random.uniform(k1, (HIDDEN, IN_FEATURES), jnp.float32, -bound1, bound1)
    b1_pt = jax.random.uniform(k2, (HIDDEN,), jnp.float32, -bound1, bound1)
    bound2 = 1.0 / jnp.sqrt(HIDDEN)
    w2_pt = jax.random.uniform(k3, (NUM_CLASSES, HIDDEN), jnp.float32, -bound2, bound2)
    b2_pt = jax.random.uniform(k4, (NUM_CLASSES,), jnp.float32, -bound2, bound2)
    return w1_pt, b1_pt, w2_pt, b2_pt


def prepare_params(w1_pt, b1_pt, w2_pt, b2_pt):
    """PyTorch (out, in) f32 -> kernel layout: (in, out), bf16 weights, lane-padded."""
    # TODO(synk): int8 (v5e/v6e) or fp8 (v7x) weight quantization is a further 2x HBM
    # saving if accuracy allows; kept bf16 here for a single portable build.
    w1 = w1_pt.T.astype(jnp.bfloat16)                       # (1080, 1080)
    w2 = w2_pt.T.astype(jnp.bfloat16)                       # (1080, 4)
    w1p = jnp.pad(w1, ((0, F_PAD - IN_FEATURES), (0, H_PAD - HIDDEN)))
    w2p = jnp.pad(w2, ((0, H_PAD - HIDDEN), (0, C_PAD - NUM_CLASSES)))
    b1p = jnp.pad(b1_pt.astype(jnp.float32).reshape(1, HIDDEN),
                  ((0, 0), (0, H_PAD - HIDDEN)))            # (1, 1152) f32
    b2p = jnp.pad(b2_pt.astype(jnp.float32).reshape(1, NUM_CLASSES),
                  ((0, 0), (0, C_PAD - NUM_CLASSES)))       # (1, 128) f32
    return w1p, b1p, w2p, b2p


if __name__ == "__main__":
    key = jax.random.PRNGKey(0)
    kx, kp = jax.random.split(key)

    # Small batch; features must flatten to 1080.
    B = 2
    x = jax.random.normal(kx, (B, IN_FEATURES), dtype=jnp.float32)
    w1_pt, b1_pt, w2_pt, b2_pt = init_params(kp)
    w1p, b1p, w2p, b2p = prepare_params(w1_pt, b1_pt, w2_pt, b2_pt)

    out = classifier_forward(x, w1p, b1p, w2p, b2p)
    out = jax.block_until_ready(out)
    assert out.shape == (B, NUM_CLASSES)

    # Pure-JAX reference using the same bf16 operand rounding + f32 accumulation.
    xb = x.astype(jnp.bfloat16)
    w1b = w1_pt.T.astype(jnp.bfloat16)
    w2b = w2_pt.T.astype(jnp.bfloat16)
    h_ref = jnp.maximum(
        jnp.dot(xb, w1b, preferred_element_type=jnp.float32) + b1_pt[None, :], 0.0
    ).astype(jnp.bfloat16)
    ref = jnp.dot(h_ref, w2b, preferred_element_type=jnp.float32) + b2_pt[None, :]
    assert jnp.allclose(out, ref, atol=1e-2, rtol=1e-2), (out, ref)

    # Sanity vs the full-f32 PyTorch-semantics reference (looser: bf16 storage).
    ref_f32 = jnp.maximum(x @ w1_pt.T + b1_pt[None, :], 0.0) @ w2_pt.T + b2_pt[None, :]
    assert jnp.allclose(out, ref_f32, atol=5e-2, rtol=5e-2), (out, ref_f32)

    print("KERNEL_OK")
</pallas_src>

<mosaic_0001>
module attributes {stable_mosaic.version = 11 : i64} {
  func.func @_mlp_kernel(%arg0: i32, %arg1: memref<8x1152xbf16, #tpu.memory_space<vmem>>, %arg2: memref<1152x1152xbf16, #tpu.memory_space<vmem>>, %arg3: memref<1x1152xf32, #tpu.memory_space<vmem>>, %arg4: memref<1152x128xbf16, #tpu.memory_space<vmem>>, %arg5: memref<1x128xf32, #tpu.memory_space<vmem>>, %arg6: memref<8x128xf32, #tpu.memory_space<vmem>>) attributes {dimension_semantics = [#tpu.dimension_semantics<parallel>], iteration_bounds = array<i64: 1>, scalar_prefetch = 0 : i64, scratch_operands = 0 : i64, tpu.core_type = #tpu.core_type<tc>, window_params = [{transform_indices = @transform_0, window_bounds = array<i64: 8, 1152>}, {pipeline_mode = #tpu.pipeline_mode<synchronous>, transform_indices = @transform_1, window_bounds = array<i64: 1152, 1152>}, {pipeline_mode = #tpu.pipeline_mode<synchronous>, transform_indices = @transform_2, window_bounds = array<i64: 1, 1152>}, {pipeline_mode = #tpu.pipeline_mode<synchronous>, transform_indices = @transform_3, window_bounds = array<i64: 1152, 128>}, {pipeline_mode = #tpu.pipeline_mode<synchronous>, transform_indices = @transform_4, window_bounds = array<i64: 1, 128>}, {transform_indices = @transform_5, window_bounds = array<i64: 8, 128>}]} {
    %c0 = arith.constant 0 : index
    %c0_0 = arith.constant 0 : index
    %0 = vector.load %arg1[%c0, %c0_0] : memref<8x1152xbf16, #tpu.memory_space<vmem>>, vector<8x1152xbf16>
    %c0_1 = arith.constant 0 : index
    %c0_2 = arith.constant 0 : index
    %1 = vector.load %arg2[%c0_1, %c0_2] : memref<1152x1152xbf16, #tpu.memory_space<vmem>>, vector<1152x1152xbf16>
    %cst = arith.constant dense<0.000000e+00> : vector<8x1152xf32>
    %2 = tpu.matmul %0, %1, %cst {dimension_numbers = #tpu.dot_dimension_numbers<[1], [0], [0], [1], [0, 0, 1, 1], [], []>} : vector<8x1152xbf16>, vector<1152x1152xbf16>, vector<8x1152xf32> -> vector<8x1152xf32>
    %c0_3 = arith.constant 0 : index
    %c0_4 = arith.constant 0 : index
    %3 = vector.load %arg3[%c0_3, %c0_4] : memref<1x1152xf32, #tpu.memory_space<vmem>>, vector<1x1152xf32>
    %4 = vector.broadcast %3 : vector<1x1152xf32> to vector<8x1152xf32>
    %5 = arith.addf %2, %4 : vector<8x1152xf32>
    %cst_5 = arith.constant 0.000000e+00 : f32
    %6 = vector.broadcast %cst_5 : f32 to vector<8x1152xf32>
    %7 = arith.maximumf %5, %6 : vector<8x1152xf32>
    %8 = arith.truncf %7 : vector<8x1152xf32> to vector<8x1152xbf16>
    %c0_6 = arith.constant 0 : index
    %c0_7 = arith.constant 0 : index
    %9 = vector.load %arg4[%c0_6, %c0_7] : memref<1152x128xbf16, #tpu.memory_space<vmem>>, vector<1152x128xbf16>
    %cst_8 = arith.constant dense<0.000000e+00> : vector<8x128xf32>
    %10 = tpu.matmul %8, %9, %cst_8 {dimension_numbers = #tpu.dot_dimension_numbers<[1], [0], [0], [1], [0, 0, 1, 1], [], []>} : vector<8x1152xbf16>, vector<1152x128xbf16>, vector<8x128xf32> -> vector<8x128xf32>
    %c0_9 = arith.constant 0 : index
    %c0_10 = arith.constant 0 : index
    %11 = vector.load %arg5[%c0_9, %c0_10] : memref<1x128xf32, #tpu.memory_space<vmem>>, vector<1x128xf32>
    %12 = vector.broadcast %11 : vector<1x128xf32> to vector<8x128xf32>
    %13 = arith.addf %10, %12 : vector<8x128xf32>
    %c0_11 = arith.constant 0 : index
    %c0_12 = arith.constant 0 : index
    %14 = vector.load %arg6[%c0_11, %c0_12] : memref<8x128xf32, #tpu.memory_space<vmem>>, vector<8x128xf32>
    tpu.vector_store %arg6[%c0_11, %c0_12], %13 {strides = array<i32>} : memref<8x128xf32, #tpu.memory_space<vmem>>, vector<8x128xf32>,
    return
  }
  func.func @transform_0(%arg0: i32) -> (i32, i32) {
    %c0_i32 = arith.constant 0 : i32
    %c0_i32_0 = arith.constant 0 : i32
    return %arg0, %c0_i32 : i32, i32
  }
  func.func @transform_1(%arg0: i32) -> (i32, i32) {
    %c0_i32 = arith.constant 0 : i32
    %c0_i32_0 = arith.constant 0 : i32
    %c0_i32_1 = arith.constant 0 : i32
    return %c0_i32, %c0_i32_0 : i32, i32
  }
  func.func @transform_2(%arg0: i32) -> (i32, i32) {
    %c0_i32 = arith.constant 0 : i32
    %c0_i32_0 = arith.constant 0 : i32
    %c0_i32_1 = arith.constant 0 : i32
    return %c0_i32, %c0_i32_0 : i32, i32
  }
  func.func @transform_3(%arg0: i32) -> (i32, i32) {
    %c0_i32 = arith.constant 0 : i32
    %c0_i32_0 = arith.constant 0 : i32
    %c0_i32_1 = arith.constant 0 : i32
    return %c0_i32, %c0_i32_0 : i32, i32
  }
  func.func @transform_4(%arg0: i32) -> (i32, i32) {
    %c0_i32 = arith.constant 0 : i32
    %c0_i32_0 = arith.constant 0 : i32
    %c0_i32_1 = arith.constant 0 : i32
    return %c0_i32, %c0_i32_0 : i32, i32
  }
  func.func @transform_5(%arg0: i32) -> (i32, i32) {
    %c0_i32 = arith.constant 0 : i32
    %c0_i32_0 = arith.constant 0 : i32
    return %arg0, %c0_i32 : i32, i32
  }
}

</mosaic_0001>

<llo_original>
// kernel: tpu_custom_call.1
$region0: #{tpu_custom_call.1}
  #allocation0 [shape = 'u32[]', space=smem, size = 0x4, offset = 0x4, fixed_abs, tag = 'smem constant byte address 0x4 - core index']
  #allocation1 [shape = 'u32[144,128]{1,0:T(1,128)}', space=vmem, size = 0x12000, scoped, tag = 'internal scratch']
  %s0 = inlined_call_operand.hbm [shape: bf16[8,1152], index: 0, kind: input, shape index: {}]
  %s1 = inlined_call_operand.hbm [shape: bf16[1152,1152], index: 1, kind: input, shape index: {}]
  %s2 = inlined_call_operand.hbm [shape: f32[1,1152], index: 2, kind: input, shape index: {}]
  %s3 = inlined_call_operand.hbm [shape: bf16[1152,128], index: 3, kind: input, shape index: {}]
  %s4 = inlined_call_operand.hbm [shape: f32[1,128], index: 4, kind: input, shape index: {}]
  %s5 = inlined_call_operand.hbm [shape: f32[8,128], index: 5, kind: output, shape index: {}]
  %s6 = sld [smem:[#allocation0]]
  $region50: #{tpu_custom_call.1} parent=0
    _
  %s8 = ssub.s32 1, %s6
  %s9 = scalar_select 0, %s8, %s6
  $region1: #{tpu_custom_call.1} parent=0
    #allocation2 [shape = 'u8[18432]{0}', space=vmem, size = 0x4800, scoped, tag = 'input window, operand 0, single buffered']
    #allocation3 [shape = 's32[1]{0}', space=sflag, size = 0x4, scoped, tag = 'scoped memory for tpu_custom_call.1']
    #allocation4 [shape = 's32[1]{0}', space=sflag, size = 0x4, scoped, tag = 'scoped memory for tpu_custom_call.1']
    #allocation5 [shape = 'u8[2654208]{0}', space=vmem, size = 0x288000, scoped, tag = 'input window, operand 1, single buffered']
    #allocation6 [shape = 's32[1]{0}', space=sflag, size = 0x4, scoped, tag = 'scoped memory for tpu_custom_call.1']
    #allocation7 [shape = 'u8[4608]{0}', space=vmem, size = 0x1400, scoped, tag = 'input window, operand 2, single buffered']
    #allocation8 [shape = 'u8[294912]{0}', space=vmem, size = 0x48000, scoped, tag = 'input window, operand 3, single buffered']
    #allocation9 [shape = 's32[1]{0}', space=sflag, size = 0x4, scoped, tag = 'scoped memory for tpu_custom_call.1']
    #allocation10 [shape = 'u8[512]{0}', space=vmem, size = 0x400, scoped, tag = 'input window, operand 4, single buffered']
    #allocation11 [shape = 'u8[4096]{0}', space=vmem, size = 0x1000, scoped, tag = 'output window, operand 0, single buffered']
    %10 = vsyncpa [#allocation3], 0
    %11 = vsyncpa [#allocation6], 0
    %12 = vsyncpa [#allocation9], 0
    %13 = vsyncpa [#allocation4], 0
    // Predicated region
    $region2: #{tpu_custom_call.1} parent=1 // pred_check
      _
    $region3: #{tpu_custom_call.1} parent=1 // pred_check_branch
      %15 = sbr.rel (0) target = $region5
    $region4: #{tpu_custom_call.1} parent=1 // pred_region
      %s17 = ssub.s32 576, 576
      %18 = vsyncadd [#allocation3], %s17
      %s20 = sshll.u32 [#allocation2], 4
      %s21 = int_to_ptr.vmem [resolvable:$true] %s20
      %23 = dma.hbm_to_vmem [thread:$0]  %s0, 576, %s21, [#allocation3]
    $region5: #{tpu_custom_call.1} parent=1 // pred_fallthru
      _
    // Predicated region
    $region6: #{tpu_custom_call.1} parent=1 // pred_check
      _
    $region7: #{tpu_custom_call.1} parent=1 // pred_check_branch
      %25 = sbr.rel (0) target = $region9
    $region8: #{tpu_custom_call.1} parent=1 // pred_region
      %s27 = ssub.s32 82944, 82944
      %28 = vsyncadd [#allocation6], %s27
      %s29 = sshll.u32 [#allocation5], 4
      %s30 = int_to_ptr.vmem [resolvable:$true] %s29
      %35 = dma.hbm_to_vmem [thread:$0]  %s1, 82944, %s30, [#allocation6], 576, 576, 36
    $region9: #{tpu_custom_call.1} parent=1 // pred_fallthru
      _
    // Predicated region
    $region10: #{tpu_custom_call.1} parent=1 // pred_check
      _
    $region11: #{tpu_custom_call.1} parent=1 // pred_check_branch
      %37 = sbr.rel (0) target = $region13
    $region12: #{tpu_custom_call.1} parent=1 // pred_region
      %s39 = ssub.s32 144, 144
      %40 = vsyncadd [#allocation6], %s39
      %s42 = sshll.u32 [#allocation7], 4
      %s43 = int_to_ptr.vmem [resolvable:$true] %s42
      %45 = dma.hbm_to_vmem [thread:$0]  %s2, 144, %s43, [#allocation6]
    $region13: #{tpu_custom_call.1} parent=1 // pred_fallthru
      _
    // Predicated region
    $region14: #{tpu_custom_call.1} parent=1 // pred_check
      _
    $region15: #{tpu_custom_call.1} parent=1 // pred_check_branch
      %47 = sbr.rel (0) target = $region17
    $region16: #{tpu_custom_call.1} parent=1 // pred_region
      %s49 = ssub.s32 9216, 9216
      %50 = vsyncadd [#allocation9], %s49
      %s51 = sshll.u32 [#allocation8], 4
      %s52 = int_to_ptr.vmem [resolvable:$true] %s51
      %57 = dma.hbm_to_vmem [thread:$0]  %s3, 9216, %s52, [#allocation9], 64, 64, 4
    $region17: #{tpu_custom_call.1} parent=1 // pred_fallthru
      _
    // Predicated region
    $region18: #{tpu_custom_call.1} parent=1 // pred_check
      _
    $region19: #{tpu_custom_call.1} parent=1 // pred_check_branch
      %59 = sbr.rel (0) target = $region21
    $region20: #{tpu_custom_call.1} parent=1 // pred_region
      %s61 = ssub.s32 16, 16
      %62 = vsyncadd [#allocation9], %s61
      %s64 = sshll.u32 [#allocation10], 4
      %s65 = int_to_ptr.vmem [resolvable:$true] %s64
      %67 = dma.hbm_to_vmem [thread:$0]  %s4, 16, %s65, [#allocation9]
    $region21: #{tpu_custom_call.1} parent=1 // pred_fallthru
      _
    // Predicated region
    $region22: #{tpu_custom_call.1} parent=1 // pred_check
      _
    $region23: #{tpu_custom_call.1} parent=1 // pred_check_branch
      %69 = sbr.rel (0) target = $region25
    $region24: #{tpu_custom_call.1} parent=1 // pred_region
      %70 = dma.done [#allocation3], 576
    $region25: #{tpu_custom_call.1} parent=1 // pred_fallthru
      _
    // Predicated region
    $region26: #{tpu_custom_call.1} parent=1 // pred_check
      _
    $region27: #{tpu_custom_call.1} parent=1 // pred_check_branch
      %72 = sbr.rel (0) target = $region29
    $region28: #{tpu_custom_call.1} parent=1 // pred_region
      %73 = dma.done [#allocation6], 82944
    $region29: #{tpu_custom_call.1} parent=1 // pred_fallthru
      _
    // Predicated region
    $region30: #{tpu_custom_call.1} parent=1 // pred_check
      _
    $region31: #{tpu_custom_call.1} parent=1 // pred_check_branch
      %75 = sbr.rel (0) target = $region33
    $region32: #{tpu_custom_call.1} parent=1 // pred_region
      %76 = dma.done [#allocation6], 144
    $region33: #{tpu_custom_call.1} parent=1 // pred_fallthru
      _
    // Predicated region
    $region34: #{tpu_custom_call.1} parent=1 // pred_check
      _
    $region35: #{tpu_custom_call.1} parent=1 // pred_check_branch
      %78 = sbr.rel (0) target = $region37
    $region36: #{tpu_custom_call.1} parent=1 // pred_region
      %79 = dma.done [#allocation9], 9216
    $region37: #{tpu_custom_call.1} parent=1 // pred_fallthru
      _
    // Predicated region
    $region38: #{tpu_custom_call.1} parent=1 // pred_check
      _
    $region39: #{tpu_custom_call.1} parent=1 // pred_check_branch
      %81 = sbr.rel (0) target = $region41
    $region40: #{tpu_custom_call.1} parent=1 // pred_region
      %82 = dma.done [#allocation9], 16
    $region41: #{tpu_custom_call.1} parent=1 // pred_fallthru
      _
    %v84 = vld [vmem:[#allocation2] sm:$0xff]
    %v85 = vld [vmem:[#allocation2 + $0x8] sm:$0xff]
    %v86 = vld [vmem:[#allocation2 + $0x10] sm:$0xff]
    %v87 = vld [vmem:[#allocation2 + $0x18] sm:$0xff]
    %v88 = vld [vmem:[#allocation2 + $0x20] sm:$0xf]
    %v89 = vld [vmem:[#allocation5] sm:$0xff]
    %v90 = vld [vmem:[#allocation5 + $0x8] sm:$0xff]
    %v91 = vld [vmem:[#allocation5 + $0x10] sm:$0xff]
    %v92 = vld [vmem:[#allocation5 + $0x18] sm:$0xff]
    %v93 = vld [vmem:[#allocation5 + $0x20] sm:$0xf]
    %v94 = vld [vmem:[#allocation5 + $0x24] sm:$0xff]
    %v95 = vld [vmem:[#allocation5 + $0x2c] sm:$0xff]
    %v96 = vld [vmem:[#allocation5 + $0x34] sm:$0xff]
    %v97 = vld [vmem:[#allocation5 + $0x3c] sm:$0xff]
    %v98 = vld [vmem:[#allocation5 + $0x44] sm:$0xf]
    %v99 = vld [vmem:[#allocation5 + $0x48] sm:$0xff]
    %v100 = vld [vmem:[#allocation5 + $0x50] sm:$0xff]
    %v101 = vld [vmem:[#allocation5 + $0x58] sm:$0xff]
    %v102 = vld [vmem:[#allocation5 + $0x60] sm:$0xff]
    %v103 = vld [vmem:[#allocation5 + $0x68] sm:$0xf]
    %v104 = vld [vmem:[#allocation5 + $0x6c] sm:$0xff]
    %v105 = vld [vmem:[#allocation5 + $0x74] sm:$0xff]
    %v106 = vld [vmem:[#allocation5 + $0x7c] sm:$0xff]
    %v107 = vld [vmem:[#allocation5 + $0x84] sm:$0xff]
    %v108 = vld [vmem:[#allocation5 + $0x8c] sm:$0xf]
    %v109 = vld [vmem:[#allocation5 + $0x90] sm:$0xff]
    %v110 = vld [vmem:[#allocation5 + $0x98] sm:$0xff]
    %v111 = vld [vmem:[#allocation5 + $0xa0] sm:$0xff]
    %v112 = vld [vmem:[#allocation5 + $0xa8] sm:$0xff]
    %v113 = vld [vmem:[#allocation5 + $0xb0] sm:$0xf]
    %v114 = vld [vmem:[#allocation5 + $0xb4] sm:$0xff]
    %v115 = vld [vmem:[#allocation5 + $0xbc] sm:$0xff]
    %v116 = vld [vmem:[#allocation5 + $0xc4] sm:$0xff]
    %v117 = vld [vmem:[#allocation5 + $0xcc] sm:$0xff]
    %v118 = vld [vmem:[#allocation5 + $0xd4] sm:$0xf]
    %v119 = vld [vmem:[#allocation5 + $0xd8] sm:$0xff]
    %v120 = vld [vmem:[#allocation5 + $0xe0] sm:$0xff]
    %v121 = vld [vmem:[#allocation5 + $0xe8] sm:$0xff]
    %v122 = vld [vmem:[#allocation5 + $0xf0] sm:$0xff]
    %v123 = vld [vmem:[#allocation5 + $0xf8] sm:$0xf]
    %v124 = vld [vmem:[#allocation5 + $0xfc] sm:$0xff]
    %v125 = vld [vmem:[#allocation5 + $0x104] sm:$0xff]
    %v126 = vld [vmem:[#allocation5 + $0x10c] sm:$0xff]
    %v127 = vld [vmem:[#allocation5 + $0x114] sm:$0xff]
    %v128 = vld [vmem:[#allocation5 + $0x11c] sm:$0xf]
    %v129 = vld [vmem:[#allocation5 + $0x120] sm:$0xff]
    %v130 = vld [vmem:[#allocation5 + $0x128] sm:$0xff]
    %v131 = vld [vmem:[#allocation5 + $0x130] sm:$0xff]
    %v132 = vld [vmem:[#allocation5 + $0x138] sm:$0xff]
    %v133 = vld [vmem:[#allocation5 + $0x140] sm:$0xf]
    %v134 = vld [vmem:[#allocation5 + $0x144] sm:$0xff]
    %v135 = vld [vmem:[#allocation5 + $0x14c] sm:$0xff]
    %v136 = vld [vmem:[#allocation5 + $0x154] sm:$0xff]
    %v137 = vld [vmem:[#allocation5 + $0x15c] sm:$0xff]
    %v138 = vld [vmem:[#allocation5 + $0x164] sm:$0xf]
    %v139 = vld [vmem:[#allocation5 + $0x168] sm:$0xff]
    %v140 = vld [vmem:[#allocation5 + $0x170] sm:$0xff]
    %v141 = vld [vmem:[#allocation5 + $0x178] sm:$0xff]
    %v142 = vld [vmem:[#allocation5 + $0x180] sm:$0xff]
    %v143 = vld [vmem:[#allocation5 + $0x188] sm:$0xf]
    %v144 = vld [vmem:[#allocation5 + $0x18c] sm:$0xff]
    %v145 = vld [vmem:[#allocation5 + $0x194] sm:$0xff]
    %v146 = vld [vmem:[#allocation5 + $0x19c] sm:$0xff]
    %v147 = vld [vmem:[#allocation5 + $0x1a4] sm:$0xff]
    %v148 = vld [vmem:[#allocation5 + $0x1ac] sm:$0xf]
    %v149 = vld [vmem:[#allocation5 + $0x1b0] sm:$0xff]
    %v150 = vld [vmem:[#allocation5 + $0x1b8] sm:$0xff]
    %v151 = vld [vmem:[#allocation5 + $0x1c0] sm:$0xff]
    %v152 = vld [vmem:[#allocation5 + $0x1c8] sm:$0xff]
    %v153 = vld [vmem:[#allocation5 + $0x1d0] sm:$0xf]
    %v154 = vld [vmem:[#allocation5 + $0x1d4] sm:$0xff]
    %v155 = vld [vmem:[#allocation5 + $0x1dc] sm:$0xff]
    %v156 = vld [vmem:[#allocation5 + $0x1e4] sm:$0xff]
    %v157 = vld [vmem:[#allocation5 + $0x1ec] sm:$0xff]
    %v158 = vld [vmem:[#allocation5 + $0x1f4] sm:$0xf]
    %v159 = vld [vmem:[#allocation5 + $0x1f8] sm:$0xff]
    %v160 = vld [vmem:[#allocation5 + $0x200] sm:$0xff]
    %v161 = vld [vmem:[#allocation5 + $0x208] sm:$0xff]
    %v162 = vld [vmem:[#allocation5 + $0x210] sm:$0xff]
    %v163 = vld [vmem:[#allocation5 + $0x218] sm:$0xf]
    %v164 = vld [vmem:[#allocation5 + $0x21c] sm:$0xff]
    %v165 = vld [vmem:[#allocation5 + $0x224] sm:$0xff]
    %v166 = vld [vmem:[#allocation5 + $0x22c] sm:$0xff]
    %v167 = vld [vmem:[#allocation5 + $0x234] sm:$0xff]
    %v168 = vld [vmem:[#allocation5 + $0x23c] sm:$0xf]
    %v169 = vld [vmem:[#allocation5 + $0x240] sm:$0xff]
    %v170 = vld [vmem:[#allocation5 + $0x248] sm:$0xff]
    %v171 = vld [vmem:[#allocation5 + $0x250] sm:$0xff]
    %v172 = vld [vmem:[#allocation5 + $0x258] sm:$0xff]
    %v173 = vld [vmem:[#allocation5 + $0x260] sm:$0xf]
    %v174 = vld [vmem:[#allocation5 + $0x264] sm:$0xff]
    %v175 = vld [vmem:[#allocation5 + $0x26c] sm:$0xff]
    %v176 = vld [vmem:[#allocation5 + $0x274] sm:$0xff]
    %v177 = vld [vmem:[#allocation5 + $0x27c] sm:$0xff]
    %v178 = vld [vmem:[#allocation5 + $0x284] sm:$0xf]
    %v179 = vld [vmem:[#allocation5 + $0x288] sm:$0xff]
    %v180 = vld [vmem:[#allocation5 + $0x290] sm:$0xff]
    %v181 = vld [vmem:[#allocation5 + $0x298] sm:$0xff]
    %v182 = vld [vmem:[#allocation5 + $0x2a0] sm:$0xff]
    %v183 = vld [vmem:[#allocation5 + $0x2a8] sm:$0xf]
    %v184 = vld [vmem:[#allocation5 + $0x2ac] sm:$0xff]
    %v185 = vld [vmem:[#allocation5 + $0x2b4] sm:$0xff]
    %v186 = vld [vmem:[#allocation5 + $0x2bc] sm:$0xff]
    %v187 = vld [vmem:[#allocation5 + $0x2c4] sm:$0xff]
    %v188 = vld [vmem:[#allocation5 + $0x2cc] sm:$0xf]
    %v189 = vld [vmem:[#allocation5 + $0x2d0] sm:$0xff]
    %v190 = vld [vmem:[#allocation5 + $0x2d8] sm:$0xff]
    %v191 = vld [vmem:[#allocation5 + $0x2e0] sm:$0xff]
    %v192 = vld [vmem:[#allocation5 + $0x2e8] sm:$0xff]
    %v193 = vld [vmem:[#allocation5 + $0x2f0] sm:$0xf]
    %v194 = vld [vmem:[#allocation5 + $0x2f4] sm:$0xff]
    %v195 = vld [vmem:[#allocation5 + $0x2fc] sm:$0xff]
    %v196 = vld [vmem:[#allocation5 + $0x304] sm:$0xff]
    %v197 = vld [vmem:[#allocation5 + $0x30c] sm:$0xff]
    %v198 = vld [vmem:[#allocation5 + $0x314] sm:$0xf]
    %v199 = vld [vmem:[#allocation5 + $0x318] sm:$0xff]
    %v200 = vld [vmem:[#allocation5 + $0x320] sm:$0xff]
    %v201 = vld [vmem:[#allocation5 + $0x328] sm:$0xff]
    %v202 = vld [vmem:[#allocation5 + $0x330] sm:$0xff]
    %v203 = vld [vmem:[#allocation5 + $0x338] sm:$0xf]
    %v204 = vld [vmem:[#allocation5 + $0x33c] sm:$0xff]
    %v205 = vld [vmem:[#allocation5 + $0x344] sm:$0xff]
    %v206 = vld [vmem:[#allocation5 + $0x34c] sm:$0xff]
    %v207 = vld [vmem:[#allocation5 + $0x354] sm:$0xff]
    %v208 = vld [vmem:[#allocation5 + $0x35c] sm:$0xf]
    %v209 = vld [vmem:[#allocation5 + $0x360] sm:$0xff]
    %v210 = vld [vmem:[#allocation5 + $0x368] sm:$0xff]
    %v211 = vld [vmem:[#allocation5 + $0x370] sm:$0xff]
    %v212 = vld [vmem:[#allocation5 + $0x378] sm:$0xff]
    %v213 = vld [vmem:[#allocation5 + $0x380] sm:$0xf]
    %v214 = vld [vmem:[#allocation5 + $0x384] sm:$0xff]
    %v215 = vld [vmem:[#allocation5 + $0x38c] sm:$0xff]
    %v216 = vld [vmem:[#allocation5 + $0x394] sm:$0xff]
    %v217 = vld [vmem:[#allocation5 + $0x39c] sm:$0xff]
    %v218 = vld [vmem:[#allocation5 + $0x3a4] sm:$0xf]
    %v219 = vld [vmem:[#allocation5 + $0x3a8] sm:$0xff]
    %v220 = vld [vmem:[#allocation5 + $0x3b0] sm:$0xff]
    %v221 = vld [vmem:[#allocation5 + $0x3b8] sm:$0xff]
    %v222 = vld [vmem:[#allocation5 + $0x3c0] sm:$0xff]
    %v223 = vld [vmem:[#allocation5 + $0x3c8] sm:$0xf]
    %v224 = vld [vmem:[#allocation5 + $0x3cc] sm:$0xff]
    %v225 = vld [vmem:[#allocation5 + $0x3d4] sm:$0xff]
    %v226 = vld [vmem:[#allocation5 + $0x3dc] sm:$0xff]
    %v227 = vld [vmem:[#allocation5 + $0x3e4] sm:$0xff]
    %v228 = vld [vmem:[#allocation5 + $0x3ec] sm:$0xf]
    %v229 = vld [vmem:[#allocation5 + $0x3f0] sm:$0xff]
    %v230 = vld [vmem:[#allocation5 + $0x3f8] sm:$0xff]
    %v231 = vld [vmem:[#allocation5 + $0x400] sm:$0xff]
    %v232 = vld [vmem:[#allocation5 + $0x408] sm:$0xff]
    %v233 = vld [vmem:[#allocation5 + $0x410] sm:$0xf]
    %v234 = vld [vmem:[#allocation5 + $0x414] sm:$0xff]
    %v235 = vld [vmem:[#allocation5 + $0x41c] sm:$0xff]
    %v236 = vld [vmem:[#allocation5 + $0x424] sm:$0xff]
    %v237 = vld [vmem:[#allocation5 + $0x42c] sm:$0xff]
    %v238 = vld [vmem:[#allocation5 + $0x434] sm:$0xf]
    %v239 = vld [vmem:[#allocation5 + $0x438] sm:$0xff]
    %v240 = vld [vmem:[#allocation5 + $0x440] sm:$0xff]
    %v241 = vld [vmem:[#allocation5 + $0x448] sm:$0xff]
    %v242 = vld [vmem:[#allocation5 + $0x450] sm:$0xff]
    %v243 = vld [vmem:[#allocation5 + $0x458] sm:$0xf]
    %v244 = vld [vmem:[#allocation5 + $0x45c] sm:$0xff]
    %v245 = vld [vmem:[#allocation5 + $0x464] sm:$0xff]
    %v246 = vld [vmem:[#allocation5 + $0x46c] sm:$0xff]
    %v247 = vld [vmem:[#allocation5 + $0x474] sm:$0xff]
    %v248 = vld [vmem:[#allocation5 + $0x47c] sm:$0xf]
    %v249 = vld [vmem:[#allocation5 + $0x480] sm:$0xff]
    %v250 = vld [vmem:[#allocation5 + $0x488] sm:$0xff]
    %v251 = vld [vmem:[#allocation5 + $0x490] sm:$0xff]
    %v252 = vld [vmem:[#allocation5 + $0x498] sm:$0xff]
    %v253 = vld [vmem:[#allocation5 + $0x4a0] sm:$0xf]
    %v254 = vld [vmem:[#allocation5 + $0x4a4] sm:$0xff]
    %v255 = vld [vmem:[#allocation5 + $0x4ac] sm:$0xff]
    %v256 = vld [vmem:[#allocation5 + $0x4b4] sm:$0xff]
    %v257 = vld [vmem:[#allocation5 + $0x4bc] sm:$0xff]
    %v258 = vld [vmem:[#allocation5 + $0x4c4] sm:$0xf]
    %v259 = vld [vmem:[#allocation5 + $0x4c8] sm:$0xff]
    %v260 = vld [vmem:[#allocation5 + $0x4d0] sm:$0xff]
    %v261 = vld [vmem:[#allocation5 + $0x4d8] sm:$0xff]
    %v262 = vld [vmem:[#allocation5 + $0x4e0] sm:$0xff]
    %v263 = vld [vmem:[#allocation5 + $0x4e8] sm:$0xf]
    %v264 = vld [vmem:[#allocation5 + $0x4ec] sm:$0xff]
    %v265 = vld [vmem:[#allocation5 + $0x4f4] sm:$0xff]
    %v266 = vld [vmem:[#allocation5 + $0x4fc] sm:$0xff]
    %v267 = vld [vmem:[#allocation5 + $0x504] sm:$0xff]
    %v268 = vld [vmem:[#allocation5 + $0x50c] sm:$0xf]
    %v269 = vld [vmem:[#allocation5 + $0x510] sm:$0xff]
    %v270 = vld [vmem:[#allocation5 + $0x518] sm:$0xff]
    %v271 = vld [vmem:[#allocation5 + $0x520] sm:$0xff]
    %v272 = vld [vmem:[#allocation5 + $0x528] sm:$0xff]
    %v273 = vld [vmem:[#allocation5 + $0x530] sm:$0xf]
    %v274 = vld [vmem:[#allocation5 + $0x534] sm:$0xff]
    %v275 = vld [vmem:[#allocation5 + $0x53c] sm:$0xff]
    %v276 = vld [vmem:[#allocation5 + $0x544] sm:$0xff]
    %v277 = vld [vmem:[#allocation5 + $0x54c] sm:$0xff]
    %v278 = vld [vmem:[#allocation5 + $0x554] sm:$0xf]
    %v279 = vld [vmem:[#allocation5 + $0x558] sm:$0xff]
    %v280 = vld [vmem:[#allocation5 + $0x560] sm:$0xff]
    %v281 = vld [vmem:[#allocation5 + $0x568] sm:$0xff]
    %v282 = vld [vmem:[#allocation5 + $0x570] sm:$0xff]
    %v283 = vld [vmem:[#allocation5 + $0x578] sm:$0xf]
    %v284 = vld [vmem:[#allocation5 + $0x57c] sm:$0xff]
    %v285 = vld [vmem:[#allocation5 + $0x584] sm:$0xff]
    %v286 = vld [vmem:[#allocation5 + $0x58c] sm:$0xff]
    %v287 = vld [vmem:[#allocation5 + $0x594] sm:$0xff]
    %v288 = vld [vmem:[#allocation5 + $0x59c] sm:$0xf]
    %v289 = vld [vmem:[#allocation5 + $0x5a0] sm:$0xff]
    %v290 = vld [vmem:[#allocation5 + $0x5a8] sm:$0xff]
    %v291 = vld [vmem:[#allocation5 + $0x5b0] sm:$0xff]
    %v292 = vld [vmem:[#allocation5 + $0x5b8] sm:$0xff]
    %v293 = vld [vmem:[#allocation5 + $0x5c0] sm:$0xf]
    %v294 = vld [vmem:[#allocation5 + $0x5c4] sm:$0xff]
    %v295 = vld [vmem:[#allocation5 + $0x5cc] sm:$0xff]
    %v296 = vld [vmem:[#allocation5 + $0x5d4] sm:$0xff]
    %v297 = vld [vmem:[#allocation5 + $0x5dc] sm:$0xff]
    %v298 = vld [vmem:[#allocation5 + $0x5e4] sm:$0xf]
    %v299 = vld [vmem:[#allocation5 + $0x5e8] sm:$0xff]
    %v300 = vld [vmem:[#allocation5 + $0x5f0] sm:$0xff]
    %v301 = vld [vmem:[#allocation5 + $0x5f8] sm:$0xff]
    %v302 = vld [vmem:[#allocation5 + $0x600] sm:$0xff]
    %v303 = vld [vmem:[#allocation5 + $0x608] sm:$0xf]
    %v304 = vld [vmem:[#allocation5 + $0x60c] sm:$0xff]
    %v305 = vld [vmem:[#allocation5 + $0x614] sm:$0xff]
    %v306 = vld [vmem:[#allocation5 + $0x61c] sm:$0xff]
    %v307 = vld [vmem:[#allocation5 + $0x624] sm:$0xff]
    %v308 = vld [vmem:[#allocation5 + $0x62c] sm:$0xf]
    %v309 = vld [vmem:[#allocation5 + $0x630] sm:$0xff]
    %v310 = vld [vmem:[#allocation5 + $0x638] sm:$0xff]
    %v311 = vld [vmem:[#allocation5 + $0x640] sm:$0xff]
    %v312 = vld [vmem:[#allocation5 + $0x648] sm:$0xff]
    %v313 = vld [vmem:[#allocation5 + $0x650] sm:$0xf]
    %v314 = vld [vmem:[#allocation5 + $0x654] sm:$0xff]
    %v315 = vld [vmem:[#allocation5 + $0x65c] sm:$0xff]
    %v316 = vld [vmem:[#allocation5 + $0x664] sm:$0xff]
    %v317 = vld [vmem:[#allocation5 + $0x66c] sm:$0xff]
    %v318 = vld [vmem:[#allocation5 + $0x674] sm:$0xf]
    %v319 = vld [vmem:[#allocation5 + $0x678] sm:$0xff]
    %v320 = vld [vmem:[#allocation5 + $0x680] sm:$0xff]
    %v321 = vld [vmem:[#allocation5 + $0x688] sm:$0xff]
    %v322 = vld [vmem:[#allocation5 + $0x690] sm:$0xff]
    %v323 = vld [vmem:[#allocation5 + $0x698] sm:$0xf]
    %v324 = vld [vmem:[#allocation5 + $0x69c] sm:$0xff]
    %v325 = vld [vmem:[#allocation5 + $0x6a4] sm:$0xff]
    %v326 = vld [vmem:[#allocation5 + $0x6ac] sm:$0xff]
    %v327 = vld [vmem:[#allocation5 + $0x6b4] sm:$0xff]
    %v328 = vld [vmem:[#allocation5 + $0x6bc] sm:$0xf]
    %v329 = vld [vmem:[#allocation5 + $0x6c0] sm:$0xff]
    %v330 = vld [vmem:[#allocation5 + $0x6c8] sm:$0xff]
    %v331 = vld [vmem:[#allocation5 + $0x6d0] sm:$0xff]
    %v332 = vld [vmem:[#allocation5 + $0x6d8] sm:$0xff]
    %v333 = vld [vmem:[#allocation5 + $0x6e0] sm:$0xf]
    %v334 = vld [vmem:[#allocation5 + $0x6e4] sm:$0xff]
    %v335 = vld [vmem:[#allocation5 + $0x6ec] sm:$0xff]
    %v336 = vld [vmem:[#allocation5 + $0x6f4] sm:$0xff]
    %v337 = vld [vmem:[#allocation5 + $0x6fc] sm:$0xff]
    %v338 = vld [vmem:[#allocation5 + $0x704] sm:$0xf]
    %v339 = vld [vmem:[#allocation5 + $0x708] sm:$0xff]
    %v340 = vld [vmem:[#allocation5 + $0x710] sm:$0xff]
    %v341 = vld [vmem:[#allocation5 + $0x718] sm:$0xff]
    %v342 = vld [vmem:[#allocation5 + $0x720] sm:$0xff]
    %v343 = vld [vmem:[#allocation5 + $0x728] sm:$0xf]
    %v344 = vld [vmem:[#allocation5 + $0x72c] sm:$0xff]
    %v345 = vld [vmem:[#allocation5 + $0x734] sm:$0xff]
    %v346 = vld [vmem:[#allocation5 + $0x73c] sm:$0xff]
    %v347 = vld [vmem:[#allocation5 + $0x744] sm:$0xff]
    %v348 = vld [vmem:[#allocation5 + $0x74c] sm:$0xf]
    %v349 = vld [vmem:[#allocation5 + $0x750] sm:$0xff]
    %v350 = vld [vmem:[#allocation5 + $0x758] sm:$0xff]
    %v351 = vld [vmem:[#allocation5 + $0x760] sm:$0xff]
    %v352 = vld [vmem:[#allocation5 + $0x768] sm:$0xff]
    %v353 = vld [vmem:[#allocation5 + $0x770] sm:$0xf]
    %v354 = vld [vmem:[#allocation5 + $0x774] sm:$0xff]
    %v355 = vld [vmem:[#allocation5 + $0x77c] sm:$0xff]
    %v356 = vld [vmem:[#allocation5 + $0x784] sm:$0xff]
    %v357 = vld [vmem:[#allocation5 + $0x78c] sm:$0xff]
    %v358 = vld [vmem:[#allocation5 + $0x794] sm:$0xf]
    %v359 = vld [vmem:[#allocation5 + $0x798] sm:$0xff]
    %v360 = vld [vmem:[#allocation5 + $0x7a0] sm:$0xff]
    %v361 = vld [vmem:[#allocation5 + $0x7a8] sm:$0xff]
    %v362 = vld [vmem:[#allocation5 + $0x7b0] sm:$0xff]
    %v363 = vld [vmem:[#allocation5 + $0x7b8] sm:$0xf]
    %v364 = vld [vmem:[#allocation5 + $0x7bc] sm:$0xff]
    %v365 = vld [vmem:[#allocation5 + $0x7c4] sm:$0xff]
    %v366 = vld [vmem:[#allocation5 + $0x7cc] sm:$0xff]
    %v367 = vld [vmem:[#allocation5 + $0x7d4] sm:$0xff]
    %v368 = vld [vmem:[#allocation5 + $0x7dc] sm:$0xf]
    %v369 = vld [vmem:[#allocation5 + $0x7e0] sm:$0xff]
    %v370 = vld [vmem:[#allocation5 + $0x7e8] sm:$0xff]
    %v371 = vld [vmem:[#allocation5 + $0x7f0] sm:$0xff]
    %v372 = vld [vmem:[#allocation5 + $0x7f8] sm:$0xff]
    %v373 = vld [vmem:[#allocation5 + $0x800] sm:$0xf]
    %v374 = vld [vmem:[#allocation5 + $0x804] sm:$0xff]
    %v375 = vld [vmem:[#allocation5 + $0x80c] sm:$0xff]
    %v376 = vld [vmem:[#allocation5 + $0x814] sm:$0xff]
    %v377 = vld [vmem:[#allocation5 + $0x81c] sm:$0xff]
    %v378 = vld [vmem:[#allocation5 + $0x824] sm:$0xf]
    %v379 = vld [vmem:[#allocation5 + $0x828] sm:$0xff]
    %v380 = vld [vmem:[#allocation5 + $0x830] sm:$0xff]
    %v381 = vld [vmem:[#allocation5 + $0x838] sm:$0xff]
    %v382 = vld [vmem:[#allocation5 + $0x840] sm:$0xff]
    %v383 = vld [vmem:[#allocation5 + $0x848] sm:$0xf]
    %v384 = vld [vmem:[#allocation5 + $0x84c] sm:$0xff]
    %v385 = vld [vmem:[#allocation5 + $0x854] sm:$0xff]
    %v386 = vld [vmem:[#allocation5 + $0x85c] sm:$0xff]
    %v387 = vld [vmem:[#allocation5 + $0x864] sm:$0xff]
    %v388 = vld [vmem:[#allocation5 + $0x86c] sm:$0xf]
    %v389 = vld [vmem:[#allocation5 + $0x870] sm:$0xff]
    %v390 = vld [vmem:[#allocation5 + $0x878] sm:$0xff]
    %v391 = vld [vmem:[#allocation5 + $0x880] sm:$0xff]
    %v392 = vld [vmem:[#allocation5 + $0x888] sm:$0xff]
    %v393 = vld [vmem:[#allocation5 + $0x890] sm:$0xf]
    %v394 = vld [vmem:[#allocation5 + $0x894] sm:$0xff]
    %v395 = vld [vmem:[#allocation5 + $0x89c] sm:$0xff]
    %v396 = vld [vmem:[#allocation5 + $0x8a4] sm:$0xff]
    %v397 = vld [vmem:[#allocation5 + $0x8ac] sm:$0xff]
    %v398 = vld [vmem:[#allocation5 + $0x8b4] sm:$0xf]
    %v399 = vld [vmem:[#allocation5 + $0x8b8] sm:$0xff]
    %v400 = vld [vmem:[#allocation5 + $0x8c0] sm:$0xff]
    %v401 = vld [vmem:[#allocation5 + $0x8c8] sm:$0xff]
    %v402 = vld [vmem:[#allocation5 + $0x8d0] sm:$0xff]
    %v403 = vld [vmem:[#allocation5 + $0x8d8] sm:$0xf]
    %v404 = vld [vmem:[#allocation5 + $0x8dc] sm:$0xff]
    %v405 = vld [vmem:[#allocation5 + $0x8e4] sm:$0xff]
    %v406 = vld [vmem:[#allocation5 + $0x8ec] sm:$0xff]
    %v407 = vld [vmem:[#allocation5 + $0x8f4] sm:$0xff]
    %v408 = vld [vmem:[#allocation5 + $0x8fc] sm:$0xf]
    %v409 = vld [vmem:[#allocation5 + $0x900] sm:$0xff]
    %v410 = vld [vmem:[#allocation5 + $0x908] sm:$0xff]
    %v411 = vld [vmem:[#allocation5 + $0x910] sm:$0xff]
    %v412 = vld [vmem:[#allocation5 + $0x918] sm:$0xff]
    %v413 = vld [vmem:[#allocation5 + $0x920] sm:$0xf]
    %v414 = vld [vmem:[#allocation5 + $0x924] sm:$0xff]
    %v415 = vld [vmem:[#allocation5 + $0x92c] sm:$0xff]
    %v416 = vld [vmem:[#allocation5 + $0x934] sm:$0xff]
    %v417 = vld [vmem:[#allocation5 + $0x93c] sm:$0xff]
    %v418 = vld [vmem:[#allocation5 + $0x944] sm:$0xf]
    %v419 = vld [vmem:[#allocation5 + $0x948] sm:$0xff]
    %v420 = vld [vmem:[#allocation5 + $0x950] sm:$0xff]
    %v421 = vld [vmem:[#allocation5 + $0x958] sm:$0xff]
    %v422 = vld [vmem:[#allocation5 + $0x960] sm:$0xff]
    %v423 = vld [vmem:[#allocation5 + $0x968] sm:$0xf]
    %v424 = vld [vmem:[#allocation5 + $0x96c] sm:$0xff]
    %v425 = vld [vmem:[#allocation5 + $0x974] sm:$0xff]
    %v426 = vld [vmem:[#allocation5 + $0x97c] sm:$0xff]
    %v427 = vld [vmem:[#allocation5 + $0x984] sm:$0xff]
    %v428 = vld [vmem:[#allocation5 + $0x98c] sm:$0xf]
    %v429 = vld [vmem:[#allocation5 + $0x990] sm:$0xff]
    %v430 = vld [vmem:[#allocation5 + $0x998] sm:$0xff]
    %v431 = vld [vmem:[#allocation5 + $0x9a0] sm:$0xff]
    %v432 = vld [vmem:[#allocation5 + $0x9a8] sm:$0xff]
    %v433 = vld [vmem:[#allocation5 + $0x9b0] sm:$0xf]
    %v434 = vld [vmem:[#allocation5 + $0x9b4] sm:$0xff]
    %v435 = vld [vmem:[#allocation5 + $0x9bc] sm:$0xff]
    %v436 = vld [vmem:[#allocation5 + $0x9c4] sm:$0xff]
    %v437 = vld [vmem:[#allocation5 + $0x9cc] sm:$0xff]
    %v438 = vld [vmem:[#allocation5 + $0x9d4] sm:$0xf]
    %v439 = vld [vmem:[#allocation5 + $0x9d8] sm:$0xff]
    %v440 = vld [vmem:[#allocation5 + $0x9e0] sm:$0xff]
    %v441 = vld [vmem:[#allocation5 + $0x9e8] sm:$0xff]
    %v442 = vld [vmem:[#allocation5 + $0x9f0] sm:$0xff]
    %v443 = vld [vmem:[#allocation5 + $0x9f8] sm:$0xf]
    %v444 = vld [vmem:[#allocation5 + $0x9fc] sm:$0xff]
    %v445 = vld [vmem:[#allocation5 + $0xa04] sm:$0xff]
    %v446 = vld [vmem:[#allocation5 + $0xa0c] sm:$0xff]
    %v447 = vld [vmem:[#allocation5 + $0xa14] sm:$0xff]
    %v448 = vld [vmem:[#allocation5 + $0xa1c] sm:$0xf]
    %v449 = vld [vmem:[#allocation5 + $0xa20] sm:$0xff]
    %v450 = vld [vmem:[#allocation5 + $0xa28] sm:$0xff]
    %v451 = vld [vmem:[#allocation5 + $0xa30] sm:$0xff]
    %v452 = vld [vmem:[#allocation5 + $0xa38] sm:$0xff]
    %v453 = vld [vmem:[#allocation5 + $0xa40] sm:$0xf]
    %v454 = vld [vmem:[#allocation5 + $0xa44] sm:$0xff]
    %v455 = vld [vmem:[#allocation5 + $0xa4c] sm:$0xff]
    %v456 = vld [vmem:[#allocation5 + $0xa54] sm:$0xff]
    %v457 = vld [vmem:[#allocation5 + $0xa5c] sm:$0xff]
    %v458 = vld [vmem:[#allocation5 + $0xa64] sm:$0xf]
    %v459 = vld [vmem:[#allocation5 + $0xa68] sm:$0xff]
    %v460 = vld [vmem:[#allocation5 + $0xa70] sm:$0xff]
    %v461 = vld [vmem:[#allocation5 + $0xa78] sm:$0xff]
    %v462 = vld [vmem:[#allocation5 + $0xa80] sm:$0xff]
    %v463 = vld [vmem:[#allocation5 + $0xa88] sm:$0xf]
    %v464 = vld [vmem:[#allocation5 + $0xa8c] sm:$0xff]
    %v465 = vld [vmem:[#allocation5 + $0xa94] sm:$0xff]
    %v466 = vld [vmem:[#allocation5 + $0xa9c] sm:$0xff]
    %v467 = vld [vmem:[#allocation5 + $0xaa4] sm:$0xff]
    %v468 = vld [vmem:[#allocation5 + $0xaac] sm:$0xf]
    %v469 = vld [vmem:[#allocation5 + $0xab0] sm:$0xff]
    %v470 = vld [vmem:[#allocation5 + $0xab8] sm:$0xff]
    %v471 = vld [vmem:[#allocation5 + $0xac0] sm:$0xff]
    %v472 = vld [vmem:[#allocation5 + $0xac8] sm:$0xff]
    %v473 = vld [vmem:[#allocation5 + $0xad0] sm:$0xf]
    %v474 = vld [vmem:[#allocation5 + $0xad4] sm:$0xff]
    %v475 = vld [vmem:[#allocation5 + $0xadc] sm:$0xff]
    %v476 = vld [vmem:[#allocation5 + $0xae4] sm:$0xff]
    %v477 = vld [vmem:[#allocation5 + $0xaec] sm:$0xff]
    %v478 = vld [vmem:[#allocation5 + $0xaf4] sm:$0xf]
    %v479 = vld [vmem:[#allocation5 + $0xaf8] sm:$0xff]
    %v480 = vld [vmem:[#allocation5 + $0xb00] sm:$0xff]
    %v481 = vld [vmem:[#allocation5 + $0xb08] sm:$0xff]
    %v482 = vld [vmem:[#allocation5 + $0xb10] sm:$0xff]
    %v483 = vld [vmem:[#allocation5 + $0xb18] sm:$0xf]
    %v484 = vld [vmem:[#allocation5 + $0xb1c] sm:$0xff]
    %v485 = vld [vmem:[#allocation5 + $0xb24] sm:$0xff]
    %v486 = vld [vmem:[#allocation5 + $0xb2c] sm:$0xff]
    %v487 = vld [vmem:[#allocation5 + $0xb34] sm:$0xff]
    %v488 = vld [vmem:[#allocation5 + $0xb3c] sm:$0xf]
    %v489 = vld [vmem:[#allocation5 + $0xb40] sm:$0xff]
    %v490 = vld [vmem:[#allocation5 + $0xb48] sm:$0xff]
    %v491 = vld [vmem:[#allocation5 + $0xb50] sm:$0xff]
    %v492 = vld [vmem:[#allocation5 + $0xb58] sm:$0xff]
    %v493 = vld [vmem:[#allocation5 + $0xb60] sm:$0xf]
    %v494 = vld [vmem:[#allocation5 + $0xb64] sm:$0xff]
    %v495 = vld [vmem:[#allocation5 + $0xb6c] sm:$0xff]
    %v496 = vld [vmem:[#allocation5 + $0xb74] sm:$0xff]
    %v497 = vld [vmem:[#allocation5 + $0xb7c] sm:$0xff]
    %v498 = vld [vmem:[#allocation5 + $0xb84] sm:$0xf]
    %v499 = vld [vmem:[#allocation5 + $0xb88] sm:$0xff]
    %v500 = vld [vmem:[#allocation5 + $0xb90] sm:$0xff]
    %v501 = vld [vmem:[#allocation5 + $0xb98] sm:$0xff]
    %v502 = vld [vmem:[#allocation5 + $0xba0] sm:$0xff]
    %v503 = vld [vmem:[#allocation5 + $0xba8] sm:$0xf]
    %v504 = vld [vmem:[#allocation5 + $0xbac] sm:$0xff]
    %v505 = vld [vmem:[#allocation5 + $0xbb4] sm:$0xff]
    %v506 = vld [vmem:[#allocation5 + $0xbbc] sm:$0xff]
    %v507 = vld [vmem:[#allocation5 + $0xbc4] sm:$0xff]
    %v508 = vld [vmem:[#allocation5 + $0xbcc] sm:$0xf]
    %v509 = vld [vmem:[#allocation5 + $0xbd0] sm:$0xff]
    %v510 = vld [vmem:[#allocation5 + $0xbd8] sm:$0xff]
    %v511 = vld [vmem:[#allocation5 + $0xbe0] sm:$0xff]
    %v512 = vld [vmem:[#allocation5 + $0xbe8] sm:$0xff]
    %v513 = vld [vmem:[#allocation5 + $0xbf0] sm:$0xf]
    %v514 = vld [vmem:[#allocation5 + $0xbf4] sm:$0xff]
    %v515 = vld [vmem:[#allocation5 + $0xbfc] sm:$0xff]
    %v516 = vld [vmem:[#allocation5 + $0xc04] sm:$0xff]
    %v517 = vld [vmem:[#allocation5 + $0xc0c] sm:$0xff]
    %v518 = vld [vmem:[#allocation5 + $0xc14] sm:$0xf]
    %v519 = vld [vmem:[#allocation5 + $0xc18] sm:$0xff]
    %v520 = vld [vmem:[#allocation5 + $0xc20] sm:$0xff]
    %v521 = vld [vmem:[#allocation5 + $0xc28] sm:$0xff]
    %v522 = vld [vmem:[#allocation5 + $0xc30] sm:$0xff]
    %v523 = vld [vmem:[#allocation5 + $0xc38] sm:$0xf]
    %v524 = vld [vmem:[#allocation5 + $0xc3c] sm:$0xff]
    %v525 = vld [vmem:[#allocation5 + $0xc44] sm:$0xff]
    %v526 = vld [vmem:[#allocation5 + $0xc4c] sm:$0xff]
    %v527 = vld [vmem:[#allocation5 + $0xc54] sm:$0xff]
    %v528 = vld [vmem:[#allocation5 + $0xc5c] sm:$0xf]
    %v529 = vld [vmem:[#allocation5 + $0xc60] sm:$0xff]
    %v530 = vld [vmem:[#allocation5 + $0xc68] sm:$0xff]
    %v531 = vld [vmem:[#allocation5 + $0xc70] sm:$0xff]
    %v532 = vld [vmem:[#allocation5 + $0xc78] sm:$0xff]
    %v533 = vld [vmem:[#allocation5 + $0xc80] sm:$0xf]
    %v534 = vld [vmem:[#allocation5 + $0xc84] sm:$0xff]
    %v535 = vld [vmem:[#allocation5 + $0xc8c] sm:$0xff]
    %v536 = vld [vmem:[#allocation5 + $0xc94] sm:$0xff]
    %v537 = vld [vmem:[#allocation5 + $0xc9c] sm:$0xff]
    %v538 = vld [vmem:[#allocation5 + $0xca4] sm:$0xf]
    %v539 = vld [vmem:[#allocation5 + $0xca8] sm:$0xff]
    %v540 = vld [vmem:[#allocation5 + $0xcb0] sm:$0xff]
    %v541 = vld [vmem:[#allocation5 + $0xcb8] sm:$0xff]
    %v542 = vld [vmem:[#allocation5 + $0xcc0] sm:$0xff]
    %v543 = vld [vmem:[#allocation5 + $0xcc8] sm:$0xf]
    %v544 = vld [vmem:[#allocation5 + $0xccc] sm:$0xff]
    %v545 = vld [vmem:[#allocation5 + $0xcd4] sm:$0xff]
    %v546 = vld [vmem:[#allocation5 + $0xcdc] sm:$0xff]
    %v547 = vld [vmem:[#allocation5 + $0xce4] sm:$0xff]
    %v548 = vld [vmem:[#allocation5 + $0xcec] sm:$0xf]
    %v549 = vld [vmem:[#allocation5 + $0xcf0] sm:$0xff]
    %v550 = vld [vmem:[#allocation5 + $0xcf8] sm:$0xff]
    %v551 = vld [vmem:[#allocation5 + $0xd00] sm:$0xff]
    %v552 = vld [vmem:[#allocation5 + $0xd08] sm:$0xff]
    %v553 = vld [vmem:[#allocation5 + $0xd10] sm:$0xf]
    %v554 = vld [vmem:[#allocation5 + $0xd14] sm:$0xff]
    %v555 = vld [vmem:[#allocation5 + $0xd1c] sm:$0xff]
    %v556 = vld [vmem:[#allocation5 + $0xd24] sm:$0xff]
    %v557 = vld [vmem:[#allocation5 + $0xd2c] sm:$0xff]
    %v558 = vld [vmem:[#allocation5 + $0xd34] sm:$0xf]
    %v559 = vld [vmem:[#allocation5 + $0xd38] sm:$0xff]
    %v560 = vld [vmem:[#allocation5 + $0xd40] sm:$0xff]
    %v561 = vld [vmem:[#allocation5 + $0xd48] sm:$0xff]
    %v562 = vld [vmem:[#allocation5 + $0xd50] sm:$0xff]
    %v563 = vld [vmem:[#allocation5 + $0xd58] sm:$0xf]
    %v564 = vld [vmem:[#allocation5 + $0xd5c] sm:$0xff]
    %v565 = vld [vmem:[#allocation5 + $0xd64] sm:$0xff]
    %v566 = vld [vmem:[#allocation5 + $0xd6c] sm:$0xff]
    %v567 = vld [vmem:[#allocation5 + $0xd74] sm:$0xff]
    %v568 = vld [vmem:[#allocation5 + $0xd7c] sm:$0xf]
    %v569 = vld [vmem:[#allocation5 + $0xd80] sm:$0xff]
    %v570 = vld [vmem:[#allocation5 + $0xd88] sm:$0xff]
    %v571 = vld [vmem:[#allocation5 + $0xd90] sm:$0xff]
    %v572 = vld [vmem:[#allocation5 + $0xd98] sm:$0xff]
    %v573 = vld [vmem:[#allocation5 + $0xda0] sm:$0xf]
    %v574 = vld [vmem:[#allocation5 + $0xda4] sm:$0xff]
    %v575 = vld [vmem:[#allocation5 + $0xdac] sm:$0xff]
    %v576 = vld [vmem:[#allocation5 + $0xdb4] sm:$0xff]
    %v577 = vld [vmem:[#allocation5 + $0xdbc] sm:$0xff]
    %v578 = vld [vmem:[#allocation5 + $0xdc4] sm:$0xf]
    %v579 = vld [vmem:[#allocation5 + $0xdc8] sm:$0xff]
    %v580 = vld [vmem:[#allocation5 + $0xdd0] sm:$0xff]
    %v581 = vld [vmem:[#allocation5 + $0xdd8] sm:$0xff]
    %v582 = vld [vmem:[#allocation5 + $0xde0] sm:$0xff]
    %v583 = vld [vmem:[#allocation5 + $0xde8] sm:$0xf]
    %v584 = vld [vmem:[#allocation5 + $0xdec] sm:$0xff]
    %v585 = vld [vmem:[#allocation5 + $0xdf4] sm:$0xff]
    %v586 = vld [vmem:[#allocation5 + $0xdfc] sm:$0xff]
    %v587 = vld [vmem:[#allocation5 + $0xe04] sm:$0xff]
    %v588 = vld [vmem:[#allocation5 + $0xe0c] sm:$0xf]
    %v589 = vld [vmem:[#allocation5 + $0xe10] sm:$0xff]
    %v590 = vld [vmem:[#allocation5 + $0xe18] sm:$0xff]
    %v591 = vld [vmem:[#allocation5 + $0xe20] sm:$0xff]
    %v592 = vld [vmem:[#allocation5 + $0xe28] sm:$0xff]
    %v593 = vld [vmem:[#allocation5 + $0xe30] sm:$0xf]
    %v594 = vld [vmem:[#allocation5 + $0xe34] sm:$0xff]
    %v595 = vld [vmem:[#allocation5 + $0xe3c] sm:$0xff]
    %v596 = vld [vmem:[#allocation5 + $0xe44] sm:$0xff]
    %v597 = vld [vmem:[#allocation5 + $0xe4c] sm:$0xff]
    %v598 = vld [vmem:[#allocation5 + $0xe54] sm:$0xf]
    %v599 = vld [vmem:[#allocation5 + $0xe58] sm:$0xff]
    %v600 = vld [vmem:[#allocation5 + $0xe60] sm:$0xff]
    %v601 = vld [vmem:[#allocation5 + $0xe68] sm:$0xff]
    %v602 = vld [vmem:[#allocation5 + $0xe70] sm:$0xff]
    %v603 = vld [vmem:[#allocation5 + $0xe78] sm:$0xf]
    %v604 = vld [vmem:[#allocation5 + $0xe7c] sm:$0xff]
    %v605 = vld [vmem:[#allocation5 + $0xe84] sm:$0xff]
    %v606 = vld [vmem:[#allocation5 + $0xe8c] sm:$0xff]
    %v607 = vld [vmem:[#allocation5 + $0xe94] sm:$0xff]
    %v608 = vld [vmem:[#allocation5 + $0xe9c] sm:$0xf]
    %v609 = vld [vmem:[#allocation5 + $0xea0] sm:$0xff]
    %v610 = vld [vmem:[#allocation5 + $0xea8] sm:$0xff]
    %v611 = vld [vmem:[#allocation5 + $0xeb0] sm:$0xff]
    %v612 = vld [vmem:[#allocation5 + $0xeb8] sm:$0xff]
    %v613 = vld [vmem:[#allocation5 + $0xec0] sm:$0xf]
    %v614 = vld [vmem:[#allocation5 + $0xec4] sm:$0xff]
    %v615 = vld [vmem:[#allocation5 + $0xecc] sm:$0xff]
    %v616 = vld [vmem:[#allocation5 + $0xed4] sm:$0xff]
    %v617 = vld [vmem:[#allocation5 + $0xedc] sm:$0xff]
    %v618 = vld [vmem:[#allocation5 + $0xee4] sm:$0xf]
    %v619 = vld [vmem:[#allocation5 + $0xee8] sm:$0xff]
    %v620 = vld [vmem:[#allocation5 + $0xef0] sm:$0xff]
    %v621 = vld [vmem:[#allocation5 + $0xef8] sm:$0xff]
    %v622 = vld [vmem:[#allocation5 + $0xf00] sm:$0xff]
    %v623 = vld [vmem:[#allocation5 + $0xf08] sm:$0xf]
    %v624 = vld [vmem:[#allocation5 + $0xf0c] sm:$0xff]
    %v625 = vld [vmem:[#allocation5 + $0xf14] sm:$0xff]
    %v626 = vld [vmem:[#allocation5 + $0xf1c] sm:$0xff]
    %v627 = vld [vmem:[#allocation5 + $0xf24] sm:$0xff]
    %v628 = vld [vmem:[#allocation5 + $0xf2c] sm:$0xf]
    %v629 = vld [vmem:[#allocation5 + $0xf30] sm:$0xff]
    %v630 = vld [vmem:[#allocation5 + $0xf38] sm:$0xff]
    %v631 = vld [vmem:[#allocation5 + $0xf40] sm:$0xff]
    %v632 = vld [vmem:[#allocation5 + $0xf48] sm:$0xff]
    %v633 = vld [vmem:[#allocation5 + $0xf50] sm:$0xf]
    %v634 = vld [vmem:[#allocation5 + $0xf54] sm:$0xff]
    %v635 = vld [vmem:[#allocation5 + $0xf5c] sm:$0xff]
    %v636 = vld [vmem:[#allocation5 + $0xf64] sm:$0xff]
    %v637 = vld [vmem:[#allocation5 + $0xf6c] sm:$0xff]
    %v638 = vld [vmem:[#allocation5 + $0xf74] sm:$0xf]
    %v639 = vld [vmem:[#allocation5 + $0xf78] sm:$0xff]
    %v640 = vld [vmem:[#allocation5 + $0xf80] sm:$0xff]
    %v641 = vld [vmem:[#allocation5 + $0xf88] sm:$0xff]
    %v642 = vld [vmem:[#allocation5 + $0xf90] sm:$0xff]
    %v643 = vld [vmem:[#allocation5 + $0xf98] sm:$0xf]
    %v644 = vld [vmem:[#allocation5 + $0xf9c] sm:$0xff]
    %v645 = vld [vmem:[#allocation5 + $0xfa4] sm:$0xff]
    %v646 = vld [vmem:[#allocation5 + $0xfac] sm:$0xff]
    %v647 = vld [vmem:[#allocation5 + $0xfb4] sm:$0xff]
    %v648 = vld [vmem:[#allocation5 + $0xfbc] sm:$0xf]
    %v649 = vld [vmem:[#allocation5 + $0xfc0] sm:$0xff]
    %v650 = vld [vmem:[#allocation5 + $0xfc8] sm:$0xff]
    %v651 = vld [vmem:[#allocation5 + $0xfd0] sm:$0xff]
    %v652 = vld [vmem:[#allocation5 + $0xfd8] sm:$0xff]
    %v653 = vld [vmem:[#allocation5 + $0xfe0] sm:$0xf]
    %v654 = vld [vmem:[#allocation5 + $0xfe4] sm:$0xff]
    %v655 = vld [vmem:[#allocation5 + $0xfec] sm:$0xff]
    %v656 = vld [vmem:[#allocation5 + $0xff4] sm:$0xff]
    %v657 = vld [vmem:[#allocation5 + $0xffc] sm:$0xff]
    %v658 = vld [vmem:[#allocation5 + $0x1004] sm:$0xf]
    %v659 = vld [vmem:[#allocation5 + $0x1008] sm:$0xff]
    %v660 = vld [vmem:[#allocation5 + $0x1010] sm:$0xff]
    %v661 = vld [vmem:[#allocation5 + $0x1018] sm:$0xff]
    %v662 = vld [vmem:[#allocation5 + $0x1020] sm:$0xff]
    %v663 = vld [vmem:[#allocation5 + $0x1028] sm:$0xf]
    %v664 = vld [vmem:[#allocation5 + $0x102c] sm:$0xff]
    %v665 = vld [vmem:[#allocation5 + $0x1034] sm:$0xff]
    %v666 = vld [vmem:[#allocation5 + $0x103c] sm:$0xff]
    %v667 = vld [vmem:[#allocation5 + $0x1044] sm:$0xff]
    %v668 = vld [vmem:[#allocation5 + $0x104c] sm:$0xf]
    %v669 = vld [vmem:[#allocation5 + $0x1050] sm:$0xff]
    %v670 = vld [vmem:[#allocation5 + $0x1058] sm:$0xff]
    %v671 = vld [vmem:[#allocation5 + $0x1060] sm:$0xff]
    %v672 = vld [vmem:[#allocation5 + $0x1068] sm:$0xff]
    %v673 = vld [vmem:[#allocation5 + $0x1070] sm:$0xf]
    %v674 = vld [vmem:[#allocation5 + $0x1074] sm:$0xff]
    %v675 = vld [vmem:[#allocation5 + $0x107c] sm:$0xff]
    %v676 = vld [vmem:[#allocation5 + $0x1084] sm:$0xff]
    %v677 = vld [vmem:[#allocation5 + $0x108c] sm:$0xff]
    %v678 = vld [vmem:[#allocation5 + $0x1094] sm:$0xf]
    %v679 = vld [vmem:[#allocation5 + $0x1098] sm:$0xff]
    %v680 = vld [vmem:[#allocation5 + $0x10a0] sm:$0xff]
    %v681 = vld [vmem:[#allocation5 + $0x10a8] sm:$0xff]
    %v682 = vld [vmem:[#allocation5 + $0x10b0] sm:$0xff]
    %v683 = vld [vmem:[#allocation5 + $0x10b8] sm:$0xf]
    %v684 = vld [vmem:[#allocation5 + $0x10bc] sm:$0xff]
    %v685 = vld [vmem:[#allocation5 + $0x10c4] sm:$0xff]
    %v686 = vld [vmem:[#allocation5 + $0x10cc] sm:$0xff]
    %v687 = vld [vmem:[#allocation5 + $0x10d4] sm:$0xff]
    %v688 = vld [vmem:[#allocation5 + $0x10dc] sm:$0xf]
    %v689 = vld [vmem:[#allocation5 + $0x10e0] sm:$0xff]
    %v690 = vld [vmem:[#allocation5 + $0x10e8] sm:$0xff]
    %v691 = vld [vmem:[#allocation5 + $0x10f0] sm:$0xff]
    %v692 = vld [vmem:[#allocation5 + $0x10f8] sm:$0xff]
    %v693 = vld [vmem:[#allocation5 + $0x1100] sm:$0xf]
    %v694 = vld [vmem:[#allocation5 + $0x1104] sm:$0xff]
    %v695 = vld [vmem:[#allocation5 + $0x110c] sm:$0xff]
    %v696 = vld [vmem:[#allocation5 + $0x1114] sm:$0xff]
    %v697 = vld [vmem:[#allocation5 + $0x111c] sm:$0xff]
    %v698 = vld [vmem:[#allocation5 + $0x1124] sm:$0xf]
    %v699 = vld [vmem:[#allocation5 + $0x1128] sm:$0xff]
    %v700 = vld [vmem:[#allocation5 + $0x1130] sm:$0xff]
    %v701 = vld [vmem:[#allocation5 + $0x1138] sm:$0xff]
    %v702 = vld [vmem:[#allocation5 + $0x1140] sm:$0xff]
    %v703 = vld [vmem:[#allocation5 + $0x1148] sm:$0xf]
    %v704 = vld [vmem:[#allocation5 + $0x114c] sm:$0xff]
    %v705 = vld [vmem:[#allocation5 + $0x1154] sm:$0xff]
    %v706 = vld [vmem:[#allocation5 + $0x115c] sm:$0xff]
    %v707 = vld [vmem:[#allocation5 + $0x1164] sm:$0xff]
    %v708 = vld [vmem:[#allocation5 + $0x116c] sm:$0xf]
    %v709 = vld [vmem:[#allocation5 + $0x1170] sm:$0xff]
    %v710 = vld [vmem:[#allocation5 + $0x1178] sm:$0xff]
    %v711 = vld [vmem:[#allocation5 + $0x1180] sm:$0xff]
    %v712 = vld [vmem:[#allocation5 + $0x1188] sm:$0xff]
    %v713 = vld [vmem:[#allocation5 + $0x1190] sm:$0xf]
    %v714 = vld [vmem:[#allocation5 + $0x1194] sm:$0xff]
    %v715 = vld [vmem:[#allocation5 + $0x119c] sm:$0xff]
    %v716 = vld [vmem:[#allocation5 + $0x11a4] sm:$0xff]
    %v717 = vld [vmem:[#allocation5 + $0x11ac] sm:$0xff]
    %v718 = vld [vmem:[#allocation5 + $0x11b4] sm:$0xf]
    %v719 = vld [vmem:[#allocation5 + $0x11b8] sm:$0xff]
    %v720 = vld [vmem:[#allocation5 + $0x11c0] sm:$0xff]
    %v721 = vld [vmem:[#allocation5 + $0x11c8] sm:$0xff]
    %v722 = vld [vmem:[#allocation5 + $0x11d0] sm:$0xff]
    %v723 = vld [vmem:[#allocation5 + $0x11d8] sm:$0xf]
    %v724 = vld [vmem:[#allocation5 + $0x11dc] sm:$0xff]
    %v725 = vld [vmem:[#allocation5 + $0x11e4] sm:$0xff]
    %v726 = vld [vmem:[#allocation5 + $0x11ec] sm:$0xff]
    %v727 = vld [vmem:[#allocation5 + $0x11f4] sm:$0xff]
    %v728 = vld [vmem:[#allocation5 + $0x11fc] sm:$0xf]
    %v729 = vld [vmem:[#allocation5 + $0x1200] sm:$0xff]
    %v730 = vld [vmem:[#allocation5 + $0x1208] sm:$0xff]
    %v731 = vld [vmem:[#allocation5 + $0x1210] sm:$0xff]
    %v732 = vld [vmem:[#allocation5 + $0x1218] sm:$0xff]
    %v733 = vld [vmem:[#allocation5 + $0x1220] sm:$0xf]
    %v734 = vld [vmem:[#allocation5 + $0x1224] sm:$0xff]
    %v735 = vld [vmem:[#allocation5 + $0x122c] sm:$0xff]
    %v736 = vld [vmem:[#allocation5 + $0x1234] sm:$0xff]
    %v737 = vld [vmem:[#allocation5 + $0x123c] sm:$0xff]
    %v738 = vld [vmem:[#allocation5 + $0x1244] sm:$0xf]
    %v739 = vld [vmem:[#allocation5 + $0x1248] sm:$0xff]
    %v740 = vld [vmem:[#allocation5 + $0x1250] sm:$0xff]
    %v741 = vld [vmem:[#allocation5 + $0x1258] sm:$0xff]
    %v742 = vld [vmem:[#allocation5 + $0x1260] sm:$0xff]
    %v743 = vld [vmem:[#allocation5 + $0x1268] sm:$0xf]
    %v744 = vld [vmem:[#allocation5 + $0x126c] sm:$0xff]
    %v745 = vld [vmem:[#allocation5 + $0x1274] sm:$0xff]
    %v746 = vld [vmem:[#allocation5 + $0x127c] sm:$0xff]
    %v747 = vld [vmem:[#allocation5 + $0x1284] sm:$0xff]
    %v748 = vld [vmem:[#allocation5 + $0x128c] sm:$0xf]
    %v749 = vld [vmem:[#allocation5 + $0x1290] sm:$0xff]
    %v750 = vld [vmem:[#allocation5 + $0x1298] sm:$0xff]
    %v751 = vld [vmem:[#allocation5 + $0x12a0] sm:$0xff]
    %v752 = vld [vmem:[#allocation5 + $0x12a8] sm:$0xff]
    %v753 = vld [vmem:[#allocation5 + $0x12b0] sm:$0xf]
    %v754 = vld [vmem:[#allocation5 + $0x12b4] sm:$0xff]
    %v755 = vld [vmem:[#allocation5 + $0x12bc] sm:$0xff]
    %v756 = vld [vmem:[#allocation5 + $0x12c4] sm:$0xff]
    %v757 = vld [vmem:[#allocation5 + $0x12cc] sm:$0xff]
    %v758 = vld [vmem:[#allocation5 + $0x12d4] sm:$0xf]
    %v759 = vld [vmem:[#allocation5 + $0x12d8] sm:$0xff]
    %v760 = vld [vmem:[#allocation5 + $0x12e0] sm:$0xff]
    %v761 = vld [vmem:[#allocation5 + $0x12e8] sm:$0xff]
    %v762 = vld [vmem:[#allocation5 + $0x12f0] sm:$0xff]
    %v763 = vld [vmem:[#allocation5 + $0x12f8] sm:$0xf]
    %v764 = vld [vmem:[#allocation5 + $0x12fc] sm:$0xff]
    %v765 = vld [vmem:[#allocation5 + $0x1304] sm:$0xff]
    %v766 = vld [vmem:[#allocation5 + $0x130c] sm:$0xff]
    %v767 = vld [vmem:[#allocation5 + $0x1314] sm:$0xff]
    %v768 = vld [vmem:[#allocation5 + $0x131c] sm:$0xf]
    %v769 = vld [vmem:[#allocation5 + $0x1320] sm:$0xff]
    %v770 = vld [vmem:[#allocation5 + $0x1328] sm:$0xff]
    %v771 = vld [vmem:[#allocation5 + $0x1330] sm:$0xff]
    %v772 = vld [vmem:[#allocation5 + $0x1338] sm:$0xff]
    %v773 = vld [vmem:[#allocation5 + $0x1340] sm:$0xf]
    %v774 = vld [vmem:[#allocation5 + $0x1344] sm:$0xff]
    %v775 = vld [vmem:[#allocation5 + $0x134c] sm:$0xff]
    %v776 = vld [vmem:[#allocation5 + $0x1354] sm:$0xff]
    %v777 = vld [vmem:[#allocation5 + $0x135c] sm:$0xff]
    %v778 = vld [vmem:[#allocation5 + $0x1364] sm:$0xf]
    %v779 = vld [vmem:[#allocation5 + $0x1368] sm:$0xff]
    %v780 = vld [vmem:[#allocation5 + $0x1370] sm:$0xff]
    %v781 = vld [vmem:[#allocation5 + $0x1378] sm:$0xff]
    %v782 = vld [vmem:[#allocation5 + $0x1380] sm:$0xff]
    %v783 = vld [vmem:[#allocation5 + $0x1388] sm:$0xf]
    %v784 = vld [vmem:[#allocation5 + $0x138c] sm:$0xff]
    %v785 = vld [vmem:[#allocation5 + $0x1394] sm:$0xff]
    %v786 = vld [vmem:[#allocation5 + $0x139c] sm:$0xff]
    %v787 = vld [vmem:[#allocation5 + $0x13a4] sm:$0xff]
    %v788 = vld [vmem:[#allocation5 + $0x13ac] sm:$0xf]
    %v789 = vld [vmem:[#allocation5 + $0x13b0] sm:$0xff]
    %v790 = vld [vmem:[#allocation5 + $0x13b8] sm:$0xff]
    %v791 = vld [vmem:[#allocation5 + $0x13c0] sm:$0xff]
    %v792 = vld [vmem:[#allocation5 + $0x13c8] sm:$0xff]
    %v793 = vld [vmem:[#allocation5 + $0x13d0] sm:$0xf]
    %v794 = vld [vmem:[#allocation5 + $0x13d4] sm:$0xff]
    %v795 = vld [vmem:[#allocation5 + $0x13dc] sm:$0xff]
    %v796 = vld [vmem:[#allocation5 + $0x13e4] sm:$0xff]
    %v797 = vld [vmem:[#allocation5 + $0x13ec] sm:$0xff]
    %v798 = vld [vmem:[#allocation5 + $0x13f4] sm:$0xf]
    %v799 = vld [vmem:[#allocation5 + $0x13f8] sm:$0xff]
    %v800 = vld [vmem:[#allocation5 + $0x1400] sm:$0xff]
    %v801 = vld [vmem:[#allocation5 + $0x1408] sm:$0xff]
    %v802 = vld [vmem:[#allocation5 + $0x1410] sm:$0xff]
    %v803 = vld [vmem:[#allocation5 + $0x1418] sm:$0xf]
    %v804 = vld [vmem:[#allocation5 + $0x141c] sm:$0xff]
    %v805 = vld [vmem:[#allocation5 + $0x1424] sm:$0xff]
    %v806 = vld [vmem:[#allocation5 + $0x142c] sm:$0xff]
    %v807 = vld [vmem:[#allocation5 + $0x1434] sm:$0xff]
    %v808 = vld [vmem:[#allocation5 + $0x143c] sm:$0xf]
    %v809 = vld [vmem:[#allocation7] sm:$0xff]
    %v810 = vld [vmem:[#allocation7 + $0x8] sm:$0x1]
    %v813 = vlaneseq
    %v814 = vshrl.u32 %v813, 7
    %v815 = vsub.s32 0, %v814
    %v816 = vrot.slane %v809, %v815
    %v817 = vlaneseq
    %v818 = vshrl.u32 %v817, 7
    %v819 = vsub.s32 1, %v818
    %v820 = vrot.slane %v809, %v819
    %v821 = vlaneseq
    %v822 = vshrl.u32 %v821, 7
    %v823 = vsub.s32 2, %v822
    %v824 = vrot.slane %v809, %v823
    %v825 = vlaneseq
    %v826 = vshrl.u32 %v825, 7
    %v827 = vsub.s32 3, %v826
    %v828 = vrot.slane %v809, %v827
    %v829 = vlaneseq
    %v830 = vshrl.u32 %v829, 7
    %v831 = vsub.s32 4, %v830
    %v832 = vrot.slane %v809, %v831
    %v833 = vlaneseq
    %v834 = vshrl.u32 %v833, 7
    %v835 = vsub.s32 5, %v834
    %v836 = vrot.slane %v809, %v835
    %v837 = vlaneseq
    %v838 = vshrl.u32 %v837, 7
    %v839 = vsub.s32 6, %v838
    %v840 = vrot.slane %v809, %v839
    %v841 = vlaneseq
    %v842 = vshrl.u32 %v841, 7
    %v843 = vsub.s32 7, %v842
    %v844 = vrot.slane %v809, %v843
    %v845 = vlaneseq
    %v846 = vshrl.u32 %v845, 7
    %v847 = vsub.s32 0, %v846
    %v848 = vrot.slane %v810, %v847
    %v863 = vunpack.c.l.b16 %v84
    %v864 = vunpack.c.h.b16 %v84
    %v865 = vunpack.c.l.b16 %v85
    %v866 = vunpack.c.h.b16 %v85
    %v867 = vunpack.c.l.b16 %v86
    %v868 = vunpack.c.h.b16 %v86
    %v869 = vunpack.c.l.b16 %v87
    %v870 = vunpack.c.h.b16 %v87
    %v871 = vunpack.c.l.b16 %v88
    %v872 = vpack.c.b16 %v863, %v863
    %v873 = vpack.c.b16 %v864, %v864
    %v874 = vpack.c.b16 %v865, %v865
    %v875 = vpack.c.b16 %v866, %v866
    %v876 = vpack.c.b16 %v867, %v867
    %v877 = vpack.c.b16 %v868, %v868
    %v878 = vpack.c.b16 %v869, %v869
    %v879 = vpack.c.b16 %v870, %v870
    %v880 = vpack.c.b16 %v871, %v871
    %v1610 = vunpack.c.l.b16 %v89
    %v1611 = vunpack.c.h.b16 %v89
    %v1612 = vunpack.c.l.b16 %v90
    %v1613 = vunpack.c.h.b16 %v90
    %v1614 = vunpack.c.l.b16 %v91
    %v1615 = vunpack.c.h.b16 %v91
    %v1616 = vunpack.c.l.b16 %v92
    %v1617 = vunpack.c.h.b16 %v92
    %v1618 = vunpack.c.l.b16 %v93
    %v1619 = vunpack.c.l.b16 %v94
    %v1620 = vunpack.c.h.b16 %v94
    %v1621 = vunpack.c.l.b16 %v95
    %v1622 = vunpack.c.h.b16 %v95
    %v1623 = vunpack.c.l.b16 %v96
    %v1624 = vunpack.c.h.b16 %v96
    %v1625 = vunpack.c.l.b16 %v97
    %v1626 = vunpack.c.h.b16 %v97
    %v1627 = vunpack.c.l.b16 %v98
    %v1628 = vunpack.c.l.b16 %v99
    %v1629 = vunpack.c.h.b16 %v99
    %v1630 = vunpack.c.l.b16 %v100
    %v1631 = vunpack.c.h.b16 %v100
    %v1632 = vunpack.c.l.b16 %v101
    %v1633 = vunpack.c.h.b16 %v101
    %v1634 = vunpack.c.l.b16 %v102
    %v1635 = vunpack.c.h.b16 %v102
    %v1636 = vunpack.c.l.b16 %v103
    %v1637 = vunpack.c.l.b16 %v104
    %v1638 = vunpack.c.h.b16 %v104
    %v1639 = vunpack.c.l.b16 %v105
    %v1640 = vunpack.c.h.b16 %v105
    %v1641 = vunpack.c.l.b16 %v106
    %v1642 = vunpack.c.h.b16 %v106
    %v1643 = vunpack.c.l.b16 %v107
    %v1644 = vunpack.c.h.b16 %v107
    %v1645 = vunpack.c.l.b16 %v108
    %v1646 = vunpack.c.l.b16 %v109
    %v1647 = vunpack.c.h.b16 %v109
    %v1648 = vunpack.c.l.b16 %v110
    %v1649 = vunpack.c.h.b16 %v110
    %v1650 = vunpack.c.l.b16 %v111
    %v1651 = vunpack.c.h.b16 %v111
    %v1652 = vunpack.c.l.b16 %v112
    %v1653 = vunpack.c.h.b16 %v112
    %v1654 = vunpack.c.l.b16 %v113
    %v1655 = vunpack.c.l.b16 %v114
    %v1656 = vunpack.c.h.b16 %v114
    %v1657 = vunpack.c.l.b16 %v115
    %v1658 = vunpack.c.h.b16 %v115
    %v1659 = vunpack.c.l.b16 %v116
    %v1660 = vunpack.c.h.b16 %v116
    %v1661 = vunpack.c.l.b16 %v117
    %v1662 = vunpack.c.h.b16 %v117
    %v1663 = vunpack.c.l.b16 %v118
    %v1664 = vunpack.c.l.b16 %v119
    %v1665 = vunpack.c.h.b16 %v119
    %v1666 = vunpack.c.l.b16 %v120
    %v1667 = vunpack.c.h.b16 %v120
    %v1668 = vunpack.c.l.b16 %v121
    %v1669 = vunpack.c.h.b16 %v121
    %v1670 = vunpack.c.l.b16 %v122
    %v1671 = vunpack.c.h.b16 %v122
    %v1672 = vunpack.c.l.b16 %v123
    %v1673 = vunpack.c.l.b16 %v124
    %v1674 = vunpack.c.h.b16 %v124
    %v1675 = vunpack.c.l.b16 %v125
    %v1676 = vunpack.c.h.b16 %v125
    %v1677 = vunpack.c.l.b16 %v126
    %v1678 = vunpack.c.h.b16 %v126
    %v1679 = vunpack.c.l.b16 %v127
    %v1680 = vunpack.c.h.b16 %v127
    %v1681 = vunpack.c.l.b16 %v128
    %v1682 = vunpack.c.l.b16 %v129
    %v1683 = vunpack.c.h.b16 %v129
    %v1684 = vunpack.c.l.b16 %v130
    %v1685 = vunpack.c.h.b16 %v130
    %v1686 = vunpack.c.l.b16 %v131
    %v1687 = vunpack.c.h.b16 %v131
    %v1688 = vunpack.c.l.b16 %v132
    %v1689 = vunpack.c.h.b16 %v132
    %v1690 = vunpack.c.l.b16 %v133
    %v1691 = vunpack.c.l.b16 %v134
    %v1692 = vunpack.c.h.b16 %v134
    %v1693 = vunpack.c.l.b16 %v135
    %v1694 = vunpack.c.h.b16 %v135
    %v1695 = vunpack.c.l.b16 %v136
    %v1696 = vunpack.c.h.b16 %v136
    %v1697 = vunpack.c.l.b16 %v137
    %v1698 = vunpack.c.h.b16 %v137
    %v1699 = vunpack.c.l.b16 %v138
    %v1700 = vunpack.c.l.b16 %v139
    %v1701 = vunpack.c.h.b16 %v139
    %v1702 = vunpack.c.l.b16 %v140
    %v1703 = vunpack.c.h.b16 %v140
    %v1704 = vunpack.c.l.b16 %v141
    %v1705 = vunpack.c.h.b16 %v141
    %v1706 = vunpack.c.l.b16 %v142
    %v1707 = vunpack.c.h.b16 %v142
    %v1708 = vunpack.c.l.b16 %v143
    %v1709 = vunpack.c.l.b16 %v144
    %v1710 = vunpack.c.h.b16 %v144
    %v1711 = vunpack.c.l.b16 %v145
    %v1712 = vunpack.c.h.b16 %v145
    %v1713 = vunpack.c.l.b16 %v146
    %v1714 = vunpack.c.h.b16 %v146
    %v1715 = vunpack.c.l.b16 %v147
    %v1716 = vunpack.c.h.b16 %v147
    %v1717 = vunpack.c.l.b16 %v148
    %v1718 = vunpack.c.l.b16 %v149
    %v1719 = vunpack.c.h.b16 %v149
    %v1720 = vunpack.c.l.b16 %v150
    %v1721 = vunpack.c.h.b16 %v150
    %v1722 = vunpack.c.l.b16 %v151
    %v1723 = vunpack.c.h.b16 %v151
    %v1724 = vunpack.c.l.b16 %v152
    %v1725 = vunpack.c.h.b16 %v152
    %v1726 = vunpack.c.l.b16 %v153
    %v1727 = vunpack.c.l.b16 %v154
    %v1728 = vunpack.c.h.b16 %v154
    %v1729 = vunpack.c.l.b16 %v155
    %v1730 = vunpack.c.h.b16 %v155
    %v1731 = vunpack.c.l.b16 %v156
    %v1732 = vunpack.c.h.b16 %v156
    %v1733 = vunpack.c.l.b16 %v157
    %v1734 = vunpack.c.h.b16 %v157
    %v1735 = vunpack.c.l.b16 %v158
    %v1736 = vunpack.c.l.b16 %v159
    %v1737 = vunpack.c.h.b16 %v159
    %v1738 = vunpack.c.l.b16 %v160
    %v1739 = vunpack.c.h.b16 %v160
    %v1740 = vunpack.c.l.b16 %v161
    %v1741 = vunpack.c.h.b16 %v161
    %v1742 = vunpack.c.l.b16 %v162
    %v1743 = vunpack.c.h.b16 %v162
    %v1744 = vunpack.c.l.b16 %v163
    %v1745 = vunpack.c.l.b16 %v164
    %v1746 = vunpack.c.h.b16 %v164
    %v1747 = vunpack.c.l.b16 %v165
    %v1748 = vunpack.c.h.b16 %v165
    %v1749 = vunpack.c.l.b16 %v166
    %v1750 = vunpack.c.h.b16 %v166
    %v1751 = vunpack.c.l.b16 %v167
    %v1752 = vunpack.c.h.b16 %v167
    %v1753 = vunpack.c.l.b16 %v168
    %v1754 = vunpack.c.l.b16 %v169
    %v1755 = vunpack.c.h.b16 %v169
    %v1756 = vunpack.c.l.b16 %v170
    %v1757 = vunpack.c.h.b16 %v170
    %v1758 = vunpack.c.l.b16 %v171
    %v1759 = vunpack.c.h.b16 %v171
    %v1760 = vunpack.c.l.b16 %v172
    %v1761 = vunpack.c.h.b16 %v172
    %v1762 = vunpack.c.l.b16 %v173
    %v1763 = vunpack.c.l.b16 %v174
    %v1764 = vunpack.c.h.b16 %v174
    %v1765 = vunpack.c.l.b16 %v175
    %v1766 = vunpack.c.h.b16 %v175
    %v1767 = vunpack.c.l.b16 %v176
    %v1768 = vunpack.c.h.b16 %v176
    %v1769 = vunpack.c.l.b16 %v177
    %v1770 = vunpack.c.h.b16 %v177
    %v1771 = vunpack.c.l.b16 %v178
    %v1772 = vunpack.c.l.b16 %v179
    %v1773 = vunpack.c.h.b16 %v179
    %v1774 = vunpack.c.l.b16 %v180
    %v1775 = vunpack.c.h.b16 %v180
    %v1776 = vunpack.c.l.b16 %v181
    %v1777 = vunpack.c.h.b16 %v181
    %v1778 = vunpack.c.l.b16 %v182
    %v1779 = vunpack.c.h.b16 %v182
    %v1780 = vunpack.c.l.b16 %v183
    %v1781 = vunpack.c.l.b16 %v184
    %v1782 = vunpack.c.h.b16 %v184
    %v1783 = vunpack.c.l.b16 %v185
    %v1784 = vunpack.c.h.b16 %v185
    %v1785 = vunpack.c.l.b16 %v186
    %v1786 = vunpack.c.h.b16 %v186
    %v1787 = vunpack.c.l.b16 %v187
    %v1788 = vunpack.c.h.b16 %v187
    %v1789 = vunpack.c.l.b16 %v188
    %v1790 = vunpack.c.l.b16 %v189
    %v1791 = vunpack.c.h.b16 %v189
    %v1792 = vunpack.c.l.b16 %v190
    %v1793 = vunpack.c.h.b16 %v190
    %v1794 = vunpack.c.l.b16 %v191
    %v1795 = vunpack.c.h.b16 %v191
    %v1796 = vunpack.c.l.b16 %v192
    %v1797 = vunpack.c.h.b16 %v192
    %v1798 = vunpack.c.l.b16 %v193
    %v1799 = vunpack.c.l.b16 %v194
    %v1800 = vunpack.c.h.b16 %v194
    %v1801 = vunpack.c.l.b16 %v195
    %v1802 = vunpack.c.h.b16 %v195
    %v1803 = vunpack.c.l.b16 %v196
    %v1804 = vunpack.c.h.b16 %v196
    %v1805 = vunpack.c.l.b16 %v197
    %v1806 = vunpack.c.h.b16 %v197
    %v1807 = vunpack.c.l.b16 %v198
    %v1808 = vunpack.c.l.b16 %v199
    %v1809 = vunpack.c.h.b16 %v199
    %v1810 = vunpack.c.l.b16 %v200
    %v1811 = vunpack.c.h.b16 %v200
    %v1812 = vunpack.c.l.b16 %v201
    %v1813 = vunpack.c.h.b16 %v201
    %v1814 = vunpack.c.l.b16 %v202
    %v1815 = vunpack.c.h.b16 %v202
    %v1816 = vunpack.c.l.b16 %v203
    %v1817 = vunpack.c.l.b16 %v204
    %v1818 = vunpack.c.h.b16 %v204
    %v1819 = vunpack.c.l.b16 %v205
    %v1820 = vunpack.c.h.b16 %v205
    %v1821 = vunpack.c.l.b16 %v206
    %v1822 = vunpack.c.h.b16 %v206
    %v1823 = vunpack.c.l.b16 %v207
    %v1824 = vunpack.c.h.b16 %v207
    %v1825 = vunpack.c.l.b16 %v208
    %v1826 = vunpack.c.l.b16 %v209
    %v1827 = vunpack.c.h.b16 %v209
    %v1828 = vunpack.c.l.b16 %v210
    %v1829 = vunpack.c.h.b16 %v210
    %v1830 = vunpack.c.l.b16 %v211
    %v1831 = vunpack.c.h.b16 %v211
    %v1832 = vunpack.c.l.b16 %v212
    %v1833 = vunpack.c.h.b16 %v212
    %v1834 = vunpack.c.l.b16 %v213
    %v1835 = vunpack.c.l.b16 %v214
    %v1836 = vunpack.c.h.b16 %v214
    %v1837 = vunpack.c.l.b16 %v215
    %v1838 = vunpack.c.h.b16 %v215
    %v1839 = vunpack.c.l.b16 %v216
    %v1840 = vunpack.c.h.b16 %v216
    %v1841 = vunpack.c.l.b16 %v217
    %v1842 = vunpack.c.h.b16 %v217
    %v1843 = vunpack.c.l.b16 %v218
    %v1844 = vunpack.c.l.b16 %v219
    %v1845 = vunpack.c.h.b16 %v219
    %v1846 = vunpack.c.l.b16 %v220
    %v1847 = vunpack.c.h.b16 %v220
    %v1848 = vunpack.c.l.b16 %v221
    %v1849 = vunpack.c.h.b16 %v221
    %v1850 = vunpack.c.l.b16 %v222
    %v1851 = vunpack.c.h.b16 %v222
    %v1852 = vunpack.c.l.b16 %v223
    %v1853 = vunpack.c.l.b16 %v224
    %v1854 = vunpack.c.h.b16 %v224
    %v1855 = vunpack.c.l.b16 %v225
    %v1856 = vunpack.c.h.b16 %v225
    %v1857 = vunpack.c.l.b16 %v226
    %v1858 = vunpack.c.h.b16 %v226
    %v1859 = vunpack.c.l.b16 %v227
    %v1860 = vunpack.c.h.b16 %v227
    %v1861 = vunpack.c.l.b16 %v228
    %v1862 = vunpack.c.l.b16 %v229
    %v1863 = vunpack.c.h.b16 %v229
    %v1864 = vunpack.c.l.b16 %v230
    %v1865 = vunpack.c.h.b16 %v230
    %v1866 = vunpack.c.l.b16 %v231
    %v1867 = vunpack.c.h.b16 %v231
    %v1868 = vunpack.c.l.b16 %v232
    %v1869 = vunpack.c.h.b16 %v232
    %v1870 = vunpack.c.l.b16 %v233
    %v1871 = vunpack.c.l.b16 %v234
    %v1872 = vunpack.c.h.b16 %v234
    %v1873 = vunpack.c.l.b16 %v235
    %v1874 = vunpack.c.h.b16 %v235
    %v1875 = vunpack.c.l.b16 %v236
    %v1876 = vunpack.c.h.b16 %v236
    %v1877 = vunpack.c.l.b16 %v237
    %v1878 = vunpack.c.h.b16 %v237
    %v1879 = vunpack.c.l.b16 %v238
    %v1880 = vunpack.c.l.b16 %v239
    %v1881 = vunpack.c.h.b16 %v239
    %v1882 = vunpack.c.l.b16 %v240
    %v1883 = vunpack.c.h.b16 %v240
    %v1884 = vunpack.c.l.b16 %v241
    %v1885 = vunpack.c.h.b16 %v241
    %v1886 = vunpack.c.l.b16 %v242
    %v1887 = vunpack.c.h.b16 %v242
    %v1888 = vunpack.c.l.b16 %v243
    %v1889 = vunpack.c.l.b16 %v244
    %v1890 = vunpack.c.h.b16 %v244
    %v1891 = vunpack.c.l.b16 %v245
    %v1892 = vunpack.c.h.b16 %v245
    %v1893 = vunpack.c.l.b16 %v246
    %v1894 = vunpack.c.h.b16 %v246
    %v1895 = vunpack.c.l.b16 %v247
    %v1896 = vunpack.c.h.b16 %v247
    %v1897 = vunpack.c.l.b16 %v248
    %v1898 = vunpack.c.l.b16 %v249
    %v1899 = vunpack.c.h.b16 %v249
    %v1900 = vunpack.c.l.b16 %v250
    %v1901 = vunpack.c.h.b16 %v250
    %v1902 = vunpack.c.l.b16 %v251
    %v1903 = vunpack.c.h.b16 %v251
    %v1904 = vunpack.c.l.b16 %v252
    %v1905 = vunpack.c.h.b16 %v252
    %v1906 = vunpack.c.l.b16 %v253
    %v1907 = vunpack.c.l.b16 %v254
    %v1908 = vunpack.c.h.b16 %v254
    %v1909 = vunpack.c.l.b16 %v255
    %v1910 = vunpack.c.h.b16 %v255
    %v1911 = vunpack.c.l.b16 %v256
    %v1912 = vunpack.c.h.b16 %v256
    %v1913 = vunpack.c.l.b16 %v257
    %v1914 = vunpack.c.h.b16 %v257
    %v1915 = vunpack.c.l.b16 %v258
    %v1916 = vunpack.c.l.b16 %v259
    %v1917 = vunpack.c.h.b16 %v259
    %v1918 = vunpack.c.l.b16 %v260
    %v1919 = vunpack.c.h.b16 %v260
    %v1920 = vunpack.c.l.b16 %v261
    %v1921 = vunpack.c.h.b16 %v261
    %v1922 = vunpack.c.l.b16 %v262
    %v1923 = vunpack.c.h.b16 %v262
    %v1924 = vunpack.c.l.b16 %v263
    %v1925 = vunpack.c.l.b16 %v264
    %v1926 = vunpack.c.h.b16 %v264
    %v1927 = vunpack.c.l.b16 %v265
    %v1928 = vunpack.c.h.b16 %v265
    %v1929 = vunpack.c.l.b16 %v266
    %v1930 = vunpack.c.h.b16 %v266
    %v1931 = vunpack.c.l.b16 %v267
    %v1932 = vunpack.c.h.b16 %v267
    %v1933 = vunpack.c.l.b16 %v268
    %v1934 = vunpack.c.l.b16 %v269
    %v1935 = vunpack.c.h.b16 %v269
    %v1936 = vunpack.c.l.b16 %v270
    %v1937 = vunpack.c.h.b16 %v270
    %v1938 = vunpack.c.l.b16 %v271
    %v1939 = vunpack.c.h.b16 %v271
    %v1940 = vunpack.c.l.b16 %v272
    %v1941 = vunpack.c.h.b16 %v272
    %v1942 = vunpack.c.l.b16 %v273
    %v1943 = vunpack.c.l.b16 %v274
    %v1944 = vunpack.c.h.b16 %v274
    %v1945 = vunpack.c.l.b16 %v275
    %v1946 = vunpack.c.h.b16 %v275
    %v1947 = vunpack.c.l.b16 %v276
    %v1948 = vunpack.c.h.b16 %v276
    %v1949 = vunpack.c.l.b16 %v277
    %v1950 = vunpack.c.h.b16 %v277
    %v1951 = vunpack.c.l.b16 %v278
    %v1952 = vunpack.c.l.b16 %v279
    %v1953 = vunpack.c.h.b16 %v279
    %v1954 = vunpack.c.l.b16 %v280
    %v1955 = vunpack.c.h.b16 %v280
    %v1956 = vunpack.c.l.b16 %v281
    %v1957 = vunpack.c.h.b16 %v281
    %v1958 = vunpack.c.l.b16 %v282
    %v1959 = vunpack.c.h.b16 %v282
    %v1960 = vunpack.c.l.b16 %v283
    %v1961 = vunpack.c.l.b16 %v284
    %v1962 = vunpack.c.h.b16 %v284
    %v1963 = vunpack.c.l.b16 %v285
    %v1964 = vunpack.c.h.b16 %v285
    %v1965 = vunpack.c.l.b16 %v286
    %v1966 = vunpack.c.h.b16 %v286
    %v1967 = vunpack.c.l.b16 %v287
    %v1968 = vunpack.c.h.b16 %v287
    %v1969 = vunpack.c.l.b16 %v288
    %v1970 = vunpack.c.l.b16 %v289
    %v1971 = vunpack.c.h.b16 %v289
    %v1972 = vunpack.c.l.b16 %v290
    %v1973 = vunpack.c.h.b16 %v290
    %v1974 = vunpack.c.l.b16 %v291
    %v1975 = vunpack.c.h.b16 %v291
    %v1976 = vunpack.c.l.b16 %v292
    %v1977 = vunpack.c.h.b16 %v292
    %v1978 = vunpack.c.l.b16 %v293
    %v1979 = vunpack.c.l.b16 %v294
    %v1980 = vunpack.c.h.b16 %v294
    %v1981 = vunpack.c.l.b16 %v295
    %v1982 = vunpack.c.h.b16 %v295
    %v1983 = vunpack.c.l.b16 %v296
    %v1984 = vunpack.c.h.b16 %v296
    %v1985 = vunpack.c.l.b16 %v297
    %v1986 = vunpack.c.h.b16 %v297
    %v1987 = vunpack.c.l.b16 %v298
    %v1988 = vunpack.c.l.b16 %v299
    %v1989 = vunpack.c.h.b16 %v299
    %v1990 = vunpack.c.l.b16 %v300
    %v1991 = vunpack.c.h.b16 %v300
    %v1992 = vunpack.c.l.b16 %v301
    %v1993 = vunpack.c.h.b16 %v301
    %v1994 = vunpack.c.l.b16 %v302
    %v1995 = vunpack.c.h.b16 %v302
    %v1996 = vunpack.c.l.b16 %v303
    %v1997 = vunpack.c.l.b16 %v304
    %v1998 = vunpack.c.h.b16 %v304
    %v1999 = vunpack.c.l.b16 %v305
    %v2000 = vunpack.c.h.b16 %v305
    %v2001 = vunpack.c.l.b16 %v306
    %v2002 = vunpack.c.h.b16 %v306
    %v2003 = vunpack.c.l.b16 %v307
    %v2004 = vunpack.c.h.b16 %v307
    %v2005 = vunpack.c.l.b16 %v308
    %v2006 = vunpack.c.l.b16 %v309
    %v2007 = vunpack.c.h.b16 %v309
    %v2008 = vunpack.c.l.b16 %v310
    %v2009 = vunpack.c.h.b16 %v310
    %v2010 = vunpack.c.l.b16 %v311
    %v2011 = vunpack.c.h.b16 %v311
    %v2012 = vunpack.c.l.b16 %v312
    %v2013 = vunpack.c.h.b16 %v312
    %v2014 = vunpack.c.l.b16 %v313
    %v2015 = vunpack.c.l.b16 %v314
    %v2016 = vunpack.c.h.b16 %v314
    %v2017 = vunpack.c.l.b16 %v315
    %v2018 = vunpack.c.h.b16 %v315
    %v2019 = vunpack.c.l.b16 %v316
    %v2020 = vunpack.c.h.b16 %v316
    %v2021 = vunpack.c.l.b16 %v317
    %v2022 = vunpack.c.h.b16 %v317
    %v2023 = vunpack.c.l.b16 %v318
    %v2024 = vunpack.c.l.b16 %v319
    %v2025 = vunpack.c.h.b16 %v319
    %v2026 = vunpack.c.l.b16 %v320
    %v2027 = vunpack.c.h.b16 %v320
    %v2028 = vunpack.c.l.b16 %v321
    %v2029 = vunpack.c.h.b16 %v321
    %v2030 = vunpack.c.l.b16 %v322
    %v2031 = vunpack.c.h.b16 %v322
    %v2032 = vunpack.c.l.b16 %v323
    %v2033 = vunpack.c.l.b16 %v324
    %v2034 = vunpack.c.h.b16 %v324
    %v2035 = vunpack.c.l.b16 %v325
    %v2036 = vunpack.c.h.b16 %v325
    %v2037 = vunpack.c.l.b16 %v326
    %v2038 = vunpack.c.h.b16 %v326
    %v2039 = vunpack.c.l.b16 %v327
    %v2040 = vunpack.c.h.b16 %v327
    %v2041 = vunpack.c.l.b16 %v328
    %v2042 = vunpack.c.l.b16 %v329
    %v2043 = vunpack.c.h.b16 %v329
    %v2044 = vunpack.c.l.b16 %v330
    %v2045 = vunpack.c.h.b16 %v330
    %v2046 = vunpack.c.l.b16 %v331
    %v2047 = vunpack.c.h.b16 %v331
    %v2048 = vunpack.c.l.b16 %v332
    %v2049 = vunpack.c.h.b16 %v332
    %v2050 = vunpack.c.l.b16 %v333
    %v2051 = vunpack.c.l.b16 %v334
    %v2052 = vunpack.c.h.b16 %v334
    %v2053 = vunpack.c.l.b16 %v335
    %v2054 = vunpack.c.h.b16 %v335
    %v2055 = vunpack.c.l.b16 %v336
    %v2056 = vunpack.c.h.b16 %v336
    %v2057 = vunpack.c.l.b16 %v337
    %v2058 = vunpack.c.h.b16 %v337
    %v2059 = vunpack.c.l.b16 %v338
    %v2060 = vunpack.c.l.b16 %v339
    %v2061 = vunpack.c.h.b16 %v339
    %v2062 = vunpack.c.l.b16 %v340
    %v2063 = vunpack.c.h.b16 %v340
    %v2064 = vunpack.c.l.b16 %v341
    %v2065 = vunpack.c.h.b16 %v341
    %v2066 = vunpack.c.l.b16 %v342
    %v2067 = vunpack.c.h.b16 %v342
    %v2068 = vunpack.c.l.b16 %v343
    %v2069 = vunpack.c.l.b16 %v344
    %v2070 = vunpack.c.h.b16 %v344
    %v2071 = vunpack.c.l.b16 %v345
    %v2072 = vunpack.c.h.b16 %v345
    %v2073 = vunpack.c.l.b16 %v346
    %v2074 = vunpack.c.h.b16 %v346
    %v2075 = vunpack.c.l.b16 %v347
    %v2076 = vunpack.c.h.b16 %v347
    %v2077 = vunpack.c.l.b16 %v348
    %v2078 = vunpack.c.l.b16 %v349
    %v2079 = vunpack.c.h.b16 %v349
    %v2080 = vunpack.c.l.b16 %v350
    %v2081 = vunpack.c.h.b16 %v350
    %v2082 = vunpack.c.l.b16 %v351
    %v2083 = vunpack.c.h.b16 %v351
    %v2084 = vunpack.c.l.b16 %v352
    %v2085 = vunpack.c.h.b16 %v352
    %v2086 = vunpack.c.l.b16 %v353
    %v2087 = vunpack.c.l.b16 %v354
    %v2088 = vunpack.c.h.b16 %v354
    %v2089 = vunpack.c.l.b16 %v355
    %v2090 = vunpack.c.h.b16 %v355
    %v2091 = vunpack.c.l.b16 %v356
    %v2092 = vunpack.c.h.b16 %v356
    %v2093 = vunpack.c.l.b16 %v357
    %v2094 = vunpack.c.h.b16 %v357
    %v2095 = vunpack.c.l.b16 %v358
    %v2096 = vunpack.c.l.b16 %v359
    %v2097 = vunpack.c.h.b16 %v359
    %v2098 = vunpack.c.l.b16 %v360
    %v2099 = vunpack.c.h.b16 %v360
    %v2100 = vunpack.c.l.b16 %v361
    %v2101 = vunpack.c.h.b16 %v361
    %v2102 = vunpack.c.l.b16 %v362
    %v2103 = vunpack.c.h.b16 %v362
    %v2104 = vunpack.c.l.b16 %v363
    %v2105 = vunpack.c.l.b16 %v364
    %v2106 = vunpack.c.h.b16 %v364
    %v2107 = vunpack.c.l.b16 %v365
    %v2108 = vunpack.c.h.b16 %v365
    %v2109 = vunpack.c.l.b16 %v366
    %v2110 = vunpack.c.h.b16 %v366
    %v2111 = vunpack.c.l.b16 %v367
    %v2112 = vunpack.c.h.b16 %v367
    %v2113 = vunpack.c.l.b16 %v368
    %v2114 = vunpack.c.l.b16 %v369
    %v2115 = vunpack.c.h.b16 %v369
    %v2116 = vunpack.c.l.b16 %v370
    %v2117 = vunpack.c.h.b16 %v370
    %v2118 = vunpack.c.l.b16 %v371
    %v2119 = vunpack.c.h.b16 %v371
    %v2120 = vunpack.c.l.b16 %v372
    %v2121 = vunpack.c.h.b16 %v372
    %v2122 = vunpack.c.l.b16 %v373
    %v2123 = vunpack.c.l.b16 %v374
    %v2124 = vunpack.c.h.b16 %v374
    %v2125 = vunpack.c.l.b16 %v375
    %v2126 = vunpack.c.h.b16 %v375
    %v2127 = vunpack.c.l.b16 %v376
    %v2128 = vunpack.c.h.b16 %v376
    %v2129 = vunpack.c.l.b16 %v377
    %v2130 = vunpack.c.h.b16 %v377
    %v2131 = vunpack.c.l.b16 %v378
    %v2132 = vunpack.c.l.b16 %v379
    %v2133 = vunpack.c.h.b16 %v379
    %v2134 = vunpack.c.l.b16 %v380
    %v2135 = vunpack.c.h.b16 %v380
    %v2136 = vunpack.c.l.b16 %v381
    %v2137 = vunpack.c.h.b16 %v381
    %v2138 = vunpack.c.l.b16 %v382
    %v2139 = vunpack.c.h.b16 %v382
    %v2140 = vunpack.c.l.b16 %v383
    %v2141 = vunpack.c.l.b16 %v384
    %v2142 = vunpack.c.h.b16 %v384
    %v2143 = vunpack.c.l.b16 %v385
    %v2144 = vunpack.c.h.b16 %v385
    %v2145 = vunpack.c.l.b16 %v386
    %v2146 = vunpack.c.h.b16 %v386
    %v2147 = vunpack.c.l.b16 %v387
    %v2148 = vunpack.c.h.b16 %v387
    %v2149 = vunpack.c.l.b16 %v388
    %v2150 = vunpack.c.l.b16 %v389
    %v2151 = vunpack.c.h.b16 %v389
    %v2152 = vunpack.c.l.b16 %v390
    %v2153 = vunpack.c.h.b16 %v390
    %v2154 = vunpack.c.l.b16 %v391
    %v2155 = vunpack.c.h.b16 %v391
    %v2156 = vunpack.c.l.b16 %v392
    %v2157 = vunpack.c.h.b16 %v392
    %v2158 = vunpack.c.l.b16 %v393
    %v2159 = vunpack.c.l.b16 %v394
    %v2160 = vunpack.c.h.b16 %v394
    %v2161 = vunpack.c.l.b16 %v395
    %v2162 = vunpack.c.h.b16 %v395
    %v2163 = vunpack.c.l.b16 %v396
    %v2164 = vunpack.c.h.b16 %v396
    %v2165 = vunpack.c.l.b16 %v397
    %v2166 = vunpack.c.h.b16 %v397
    %v2167 = vunpack.c.l.b16 %v398
    %v2168 = vunpack.c.l.b16 %v399
    %v2169 = vunpack.c.h.b16 %v399
    %v2170 = vunpack.c.l.b16 %v400
    %v2171 = vunpack.c.h.b16 %v400
    %v2172 = vunpack.c.l.b16 %v401
    %v2173 = vunpack.c.h.b16 %v401
    %v2174 = vunpack.c.l.b16 %v402
    %v2175 = vunpack.c.h.b16 %v402
    %v2176 = vunpack.c.l.b16 %v403
    %v2177 = vunpack.c.l.b16 %v404
    %v2178 = vunpack.c.h.b16 %v404
    %v2179 = vunpack.c.l.b16 %v405
    %v2180 = vunpack.c.h.b16 %v405
    %v2181 = vunpack.c.l.b16 %v406
    %v2182 = vunpack.c.h.b16 %v406
    %v2183 = vunpack.c.l.b16 %v407
    %v2184 = vunpack.c.h.b16 %v407
    %v2185 = vunpack.c.l.b16 %v408
    %v2186 = vunpack.c.l.b16 %v409
    %v2187 = vunpack.c.h.b16 %v409
    %v2188 = vunpack.c.l.b16 %v410
    %v2189 = vunpack.c.h.b16 %v410
    %v2190 = vunpack.c.l.b16 %v411
    %v2191 = vunpack.c.h.b16 %v411
    %v2192 = vunpack.c.l.b16 %v412
    %v2193 = vunpack.c.h.b16 %v412
    %v2194 = vunpack.c.l.b16 %v413
    %v2195 = vunpack.c.l.b16 %v414
    %v2196 = vunpack.c.h.b16 %v414
    %v2197 = vunpack.c.l.b16 %v415
    %v2198 = vunpack.c.h.b16 %v415
    %v2199 = vunpack.c.l.b16 %v416
    %v2200 = vunpack.c.h.b16 %v416
    %v2201 = vunpack.c.l.b16 %v417
    %v2202 = vunpack.c.h.b16 %v417
    %v2203 = vunpack.c.l.b16 %v418
    %v2204 = vunpack.c.l.b16 %v419
    %v2205 = vunpack.c.h.b16 %v419
    %v2206 = vunpack.c.l.b16 %v420
    %v2207 = vunpack.c.h.b16 %v420
    %v2208 = vunpack.c.l.b16 %v421
    %v2209 = vunpack.c.h.b16 %v421
    %v2210 = vunpack.c.l.b16 %v422
    %v2211 = vunpack.c.h.b16 %v422
    %v2212 = vunpack.c.l.b16 %v423
    %v2213 = vunpack.c.l.b16 %v424
    %v2214 = vunpack.c.h.b16 %v424
    %v2215 = vunpack.c.l.b16 %v425
    %v2216 = vunpack.c.h.b16 %v425
    %v2217 = vunpack.c.l.b16 %v426
    %v2218 = vunpack.c.h.b16 %v426
    %v2219 = vunpack.c.l.b16 %v427
    %v2220 = vunpack.c.h.b16 %v427
    %v2221 = vunpack.c.l.b16 %v428
    %v2222 = vunpack.c.l.b16 %v429
    %v2223 = vunpack.c.h.b16 %v429
    %v2224 = vunpack.c.l.b16 %v430
    %v2225 = vunpack.c.h.b16 %v430
    %v2226 = vunpack.c.l.b16 %v431
    %v2227 = vunpack.c.h.b16 %v431
    %v2228 = vunpack.c.l.b16 %v432
    %v2229 = vunpack.c.h.b16 %v432
    %v2230 = vunpack.c.l.b16 %v433
    %v2231 = vunpack.c.l.b16 %v434
    %v2232 = vunpack.c.h.b16 %v434
    %v2233 = vunpack.c.l.b16 %v435
    %v2234 = vunpack.c.h.b16 %v435
    %v2235 = vunpack.c.l.b16 %v436
    %v2236 = vunpack.c.h.b16 %v436
    %v2237 = vunpack.c.l.b16 %v437
    %v2238 = vunpack.c.h.b16 %v437
    %v2239 = vunpack.c.l.b16 %v438
    %v2240 = vunpack.c.l.b16 %v439
    %v2241 = vunpack.c.h.b16 %v439
    %v2242 = vunpack.c.l.b16 %v440
    %v2243 = vunpack.c.h.b16 %v440
    %v2244 = vunpack.c.l.b16 %v441
    %v2245 = vunpack.c.h.b16 %v441
    %v2246 = vunpack.c.l.b16 %v442
    %v2247 = vunpack.c.h.b16 %v442
    %v2248 = vunpack.c.l.b16 %v443
    %v2249 = vunpack.c.l.b16 %v444
    %v2250 = vunpack.c.h.b16 %v444
    %v2251 = vunpack.c.l.b16 %v445
    %v2252 = vunpack.c.h.b16 %v445
    %v2253 = vunpack.c.l.b16 %v446
    %v2254 = vunpack.c.h.b16 %v446
    %v2255 = vunpack.c.l.b16 %v447
    %v2256 = vunpack.c.h.b16 %v447
    %v2257 = vunpack.c.l.b16 %v448
    %v2258 = vunpack.c.l.b16 %v449
    %v2259 = vunpack.c.h.b16 %v449
    %v2260 = vunpack.c.l.b16 %v450
    %v2261 = vunpack.c.h.b16 %v450
    %v2262 = vunpack.c.l.b16 %v451
    %v2263 = vunpack.c.h.b16 %v451
    %v2264 = vunpack.c.l.b16 %v452
    %v2265 = vunpack.c.h.b16 %v452
    %v2266 = vunpack.c.l.b16 %v453
    %v2267 = vunpack.c.l.b16 %v454
    %v2268 = vunpack.c.h.b16 %v454
    %v2269 = vunpack.c.l.b16 %v455
    %v2270 = vunpack.c.h.b16 %v455
    %v2271 = vunpack.c.l.b16 %v456
    %v2272 = vunpack.c.h.b16 %v456
    %v2273 = vunpack.c.l.b16 %v457
    %v2274 = vunpack.c.h.b16 %v457
    %v2275 = vunpack.c.l.b16 %v458
    %v2276 = vunpack.c.l.b16 %v459
    %v2277 = vunpack.c.h.b16 %v459
    %v2278 = vunpack.c.l.b16 %v460
    %v2279 = vunpack.c.h.b16 %v460
    %v2280 = vunpack.c.l.b16 %v461
    %v2281 = vunpack.c.h.b16 %v461
    %v2282 = vunpack.c.l.b16 %v462
    %v2283 = vunpack.c.h.b16 %v462
    %v2284 = vunpack.c.l.b16 %v463
    %v2285 = vunpack.c.l.b16 %v464
    %v2286 = vunpack.c.h.b16 %v464
    %v2287 = vunpack.c.l.b16 %v465
    %v2288 = vunpack.c.h.b16 %v465
    %v2289 = vunpack.c.l.b16 %v466
    %v2290 = vunpack.c.h.b16 %v466
    %v2291 = vunpack.c.l.b16 %v467
    %v2292 = vunpack.c.h.b16 %v467
    %v2293 = vunpack.c.l.b16 %v468
    %v2294 = vunpack.c.l.b16 %v469
    %v2295 = vunpack.c.h.b16 %v469
    %v2296 = vunpack.c.l.b16 %v470
    %v2297 = vunpack.c.h.b16 %v470
    %v2298 = vunpack.c.l.b16 %v471
    %v2299 = vunpack.c.h.b16 %v471
    %v2300 = vunpack.c.l.b16 %v472
    %v2301 = vunpack.c.h.b16 %v472
    %v2302 = vunpack.c.l.b16 %v473
    %v2303 = vunpack.c.l.b16 %v474
    %v2304 = vunpack.c.h.b16 %v474
    %v2305 = vunpack.c.l.b16 %v475
    %v2306 = vunpack.c.h.b16 %v475
    %v2307 = vunpack.c.l.b16 %v476
    %v2308 = vunpack.c.h.b16 %v476
    %v2309 = vunpack.c.l.b16 %v477
    %v2310 = vunpack.c.h.b16 %v477
    %v2311 = vunpack.c.l.b16 %v478
    %v2312 = vunpack.c.l.b16 %v479
    %v2313 = vunpack.c.h.b16 %v479
    %v2314 = vunpack.c.l.b16 %v480
    %v2315 = vunpack.c.h.b16 %v480
    %v2316 = vunpack.c.l.b16 %v481
    %v2317 = vunpack.c.h.b16 %v481
    %v2318 = vunpack.c.l.b16 %v482
    %v2319 = vunpack.c.h.b16 %v482
    %v2320 = vunpack.c.l.b16 %v483
    %v2321 = vunpack.c.l.b16 %v484
    %v2322 = vunpack.c.h.b16 %v484
    %v2323 = vunpack.c.l.b16 %v485
    %v2324 = vunpack.c.h.b16 %v485
    %v2325 = vunpack.c.l.b16 %v486
    %v2326 = vunpack.c.h.b16 %v486
    %v2327 = vunpack.c.l.b16 %v487
    %v2328 = vunpack.c.h.b16 %v487
    %v2329 = vunpack.c.l.b16 %v488
    %v2330 = vunpack.c.l.b16 %v489
    %v2331 = vunpack.c.h.b16 %v489
    %v2332 = vunpack.c.l.b16 %v490
    %v2333 = vunpack.c.h.b16 %v490
    %v2334 = vunpack.c.l.b16 %v491
    %v2335 = vunpack.c.h.b16 %v491
    %v2336 = vunpack.c.l.b16 %v492
    %v2337 = vunpack.c.h.b16 %v492
    %v2338 = vunpack.c.l.b16 %v493
    %v2339 = vunpack.c.l.b16 %v494
    %v2340 = vunpack.c.h.b16 %v494
    %v2341 = vunpack.c.l.b16 %v495
    %v2342 = vunpack.c.h.b16 %v495
    %v2343 = vunpack.c.l.b16 %v496
    %v2344 = vunpack.c.h.b16 %v496
    %v2345 = vunpack.c.l.b16 %v497
    %v2346 = vunpack.c.h.b16 %v497
    %v2347 = vunpack.c.l.b16 %v498
    %v2348 = vunpack.c.l.b16 %v499
    %v2349 = vunpack.c.h.b16 %v499
    %v2350 = vunpack.c.l.b16 %v500
    %v2351 = vunpack.c.h.b16 %v500
    %v2352 = vunpack.c.l.b16 %v501
    %v2353 = vunpack.c.h.b16 %v501
    %v2354 = vunpack.c.l.b16 %v502
    %v2355 = vunpack.c.h.b16 %v502
    %v2356 = vunpack.c.l.b16 %v503
    %v2357 = vunpack.c.l.b16 %v504
    %v2358 = vunpack.c.h.b16 %v504
    %v2359 = vunpack.c.l.b16 %v505
    %v2360 = vunpack.c.h.b16 %v505
    %v2361 = vunpack.c.l.b16 %v506
    %v2362 = vunpack.c.h.b16 %v506
    %v2363 = vunpack.c.l.b16 %v507
    %v2364 = vunpack.c.h.b16 %v507
    %v2365 = vunpack.c.l.b16 %v508
    %v2366 = vunpack.c.l.b16 %v509
    %v2367 = vunpack.c.h.b16 %v509
    %v2368 = vunpack.c.l.b16 %v510
    %v2369 = vunpack.c.h.b16 %v510
    %v2370 = vunpack.c.l.b16 %v511
    %v2371 = vunpack.c.h.b16 %v511
    %v2372 = vunpack.c.l.b16 %v512
    %v2373 = vunpack.c.h.b16 %v512
    %v2374 = vunpack.c.l.b16 %v513
    %v2375 = vunpack.c.l.b16 %v514
    %v2376 = vunpack.c.h.b16 %v514
    %v2377 = vunpack.c.l.b16 %v515
    %v2378 = vunpack.c.h.b16 %v515
    %v2379 = vunpack.c.l.b16 %v516
    %v2380 = vunpack.c.h.b16 %v516
    %v2381 = vunpack.c.l.b16 %v517
    %v2382 = vunpack.c.h.b16 %v517
    %v2383 = vunpack.c.l.b16 %v518
    %v2384 = vunpack.c.l.b16 %v519
    %v2385 = vunpack.c.h.b16 %v519
    %v2386 = vunpack.c.l.b16 %v520
    %v2387 = vunpack.c.h.b16 %v520
    %v2388 = vunpack.c.l.b16 %v521
    %v2389 = vunpack.c.h.b16 %v521
    %v2390 = vunpack.c.l.b16 %v522
    %v2391 = vunpack.c.h.b16 %v522
    %v2392 = vunpack.c.l.b16 %v523
    %v2393 = vunpack.c.l.b16 %v524
    %v2394 = vunpack.c.h.b16 %v524
    %v2395 = vunpack.c.l.b16 %v525
    %v2396 = vunpack.c.h.b16 %v525
    %v2397 = vunpack.c.l.b16 %v526
    %v2398 = vunpack.c.h.b16 %v526
    %v2399 = vunpack.c.l.b16 %v527
    %v2400 = vunpack.c.h.b16 %v527
    %v2401 = vunpack.c.l.b16 %v528
    %v2402 = vunpack.c.l.b16 %v529
    %v2403 = vunpack.c.h.b16 %v529
    %v2404 = vunpack.c.l.b16 %v530
    %v2405 = vunpack.c.h.b16 %v530
    %v2406 = vunpack.c.l.b16 %v531
    %v2407 = vunpack.c.h.b16 %v531
    %v2408 = vunpack.c.l.b16 %v532
    %v2409 = vunpack.c.h.b16 %v532
    %v2410 = vunpack.c.l.b16 %v533
    %v2411 = vunpack.c.l.b16 %v534
    %v2412 = vunpack.c.h.b16 %v534
    %v2413 = vunpack.c.l.b16 %v535
    %v2414 = vunpack.c.h.b16 %v535
    %v2415 = vunpack.c.l.b16 %v536
    %v2416 = vunpack.c.h.b16 %v536
    %v2417 = vunpack.c.l.b16 %v537
    %v2418 = vunpack.c.h.b16 %v537
    %v2419 = vunpack.c.l.b16 %v538
    %v2420 = vunpack.c.l.b16 %v539
    %v2421 = vunpack.c.h.b16 %v539
    %v2422 = vunpack.c.l.b16 %v540
    %v2423 = vunpack.c.h.b16 %v540
    %v2424 = vunpack.c.l.b16 %v541
    %v2425 = vunpack.c.h.b16 %v541
    %v2426 = vunpack.c.l.b16 %v542
    %v2427 = vunpack.c.h.b16 %v542
    %v2428 = vunpack.c.l.b16 %v543
    %v2429 = vunpack.c.l.b16 %v544
    %v2430 = vunpack.c.h.b16 %v544
    %v2431 = vunpack.c.l.b16 %v545
    %v2432 = vunpack.c.h.b16 %v545
    %v2433 = vunpack.c.l.b16 %v546
    %v2434 = vunpack.c.h.b16 %v546
    %v2435 = vunpack.c.l.b16 %v547
    %v2436 = vunpack.c.h.b16 %v547
    %v2437 = vunpack.c.l.b16 %v548
    %v2438 = vunpack.c.l.b16 %v549
    %v2439 = vunpack.c.h.b16 %v549
    %v2440 = vunpack.c.l.b16 %v550
    %v2441 = vunpack.c.h.b16 %v550
    %v2442 = vunpack.c.l.b16 %v551
    %v2443 = vunpack.c.h.b16 %v551
    %v2444 = vunpack.c.l.b16 %v552
    %v2445 = vunpack.c.h.b16 %v552
    %v2446 = vunpack.c.l.b16 %v553
    %v2447 = vunpack.c.l.b16 %v554
    %v2448 = vunpack.c.h.b16 %v554
    %v2449 = vunpack.c.l.b16 %v555
    %v2450 = vunpack.c.h.b16 %v555
    %v2451 = vunpack.c.l.b16 %v556
    %v2452 = vunpack.c.h.b16 %v556
    %v2453 = vunpack.c.l.b16 %v557
    %v2454 = vunpack.c.h.b16 %v557
    %v2455 = vunpack.c.l.b16 %v558
    %v2456 = vunpack.c.l.b16 %v559
    %v2457 = vunpack.c.h.b16 %v559
    %v2458 = vunpack.c.l.b16 %v560
    %v2459 = vunpack.c.h.b16 %v560
    %v2460 = vunpack.c.l.b16 %v561
    %v2461 = vunpack.c.h.b16 %v561
    %v2462 = vunpack.c.l.b16 %v562
    %v2463 = vunpack.c.h.b16 %v562
    %v2464 = vunpack.c.l.b16 %v563
    %v2465 = vunpack.c.l.b16 %v564
    %v2466 = vunpack.c.h.b16 %v564
    %v2467 = vunpack.c.l.b16 %v565
    %v2468 = vunpack.c.h.b16 %v565
    %v2469 = vunpack.c.l.b16 %v566
    %v2470 = vunpack.c.h.b16 %v566
    %v2471 = vunpack.c.l.b16 %v567
    %v2472 = vunpack.c.h.b16 %v567
    %v2473 = vunpack.c.l.b16 %v568
    %v2474 = vunpack.c.l.b16 %v569
    %v2475 = vunpack.c.h.b16 %v569
    %v2476 = vunpack.c.l.b16 %v570
    %v2477 = vunpack.c.h.b16 %v570
    %v2478 = vunpack.c.l.b16 %v571
    %v2479 = vunpack.c.h.b16 %v571
    %v2480 = vunpack.c.l.b16 %v572
    %v2481 = vunpack.c.h.b16 %v572
    %v2482 = vunpack.c.l.b16 %v573
    %v2483 = vunpack.c.l.b16 %v574
    %v2484 = vunpack.c.h.b16 %v574
    %v2485 = vunpack.c.l.b16 %v575
    %v2486 = vunpack.c.h.b16 %v575
    %v2487 = vunpack.c.l.b16 %v576
    %v2488 = vunpack.c.h.b16 %v576
    %v2489 = vunpack.c.l.b16 %v577
    %v2490 = vunpack.c.h.b16 %v577
    %v2491 = vunpack.c.l.b16 %v578
    %v2492 = vunpack.c.l.b16 %v579
    %v2493 = vunpack.c.h.b16 %v579
    %v2494 = vunpack.c.l.b16 %v580
    %v2495 = vunpack.c.h.b16 %v580
    %v2496 = vunpack.c.l.b16 %v581
    %v2497 = vunpack.c.h.b16 %v581
    %v2498 = vunpack.c.l.b16 %v582
    %v2499 = vunpack.c.h.b16 %v582
    %v2500 = vunpack.c.l.b16 %v583
    %v2501 = vunpack.c.l.b16 %v584
    %v2502 = vunpack.c.h.b16 %v584
    %v2503 = vunpack.c.l.b16 %v585
    %v2504 = vunpack.c.h.b16 %v585
    %v2505 = vunpack.c.l.b16 %v586
    %v2506 = vunpack.c.h.b16 %v586
    %v2507 = vunpack.c.l.b16 %v587
    %v2508 = vunpack.c.h.b16 %v587
    %v2509 = vunpack.c.l.b16 %v588
    %v2510 = vunpack.c.l.b16 %v589
    %v2511 = vunpack.c.h.b16 %v589
    %v2512 = vunpack.c.l.b16 %v590
    %v2513 = vunpack.c.h.b16 %v590
    %v2514 = vunpack.c.l.b16 %v591
    %v2515 = vunpack.c.h.b16 %v591
    %v2516 = vunpack.c.l.b16 %v592
    %v2517 = vunpack.c.h.b16 %v592
    %v2518 = vunpack.c.l.b16 %v593
    %v2519 = vunpack.c.l.b16 %v594
    %v2520 = vunpack.c.h.b16 %v594
    %v2521 = vunpack.c.l.b16 %v595
    %v2522 = vunpack.c.h.b16 %v595
    %v2523 = vunpack.c.l.b16 %v596
    %v2524 = vunpack.c.h.b16 %v596
    %v2525 = vunpack.c.l.b16 %v597
    %v2526 = vunpack.c.h.b16 %v597
    %v2527 = vunpack.c.l.b16 %v598
    %v2528 = vunpack.c.l.b16 %v599
    %v2529 = vunpack.c.h.b16 %v599
    %v2530 = vunpack.c.l.b16 %v600
    %v2531 = vunpack.c.h.b16 %v600
    %v2532 = vunpack.c.l.b16 %v601
    %v2533 = vunpack.c.h.b16 %v601
    %v2534 = vunpack.c.l.b16 %v602
    %v2535 = vunpack.c.h.b16 %v602
    %v2536 = vunpack.c.l.b16 %v603
    %v2537 = vunpack.c.l.b16 %v604
    %v2538 = vunpack.c.h.b16 %v604
    %v2539 = vunpack.c.l.b16 %v605
    %v2540 = vunpack.c.h.b16 %v605
    %v2541 = vunpack.c.l.b16 %v606
    %v2542 = vunpack.c.h.b16 %v606
    %v2543 = vunpack.c.l.b16 %v607
    %v2544 = vunpack.c.h.b16 %v607
    %v2545 = vunpack.c.l.b16 %v608
    %v2546 = vunpack.c.l.b16 %v609
    %v2547 = vunpack.c.h.b16 %v609
    %v2548 = vunpack.c.l.b16 %v610
    %v2549 = vunpack.c.h.b16 %v610
    %v2550 = vunpack.c.l.b16 %v611
    %v2551 = vunpack.c.h.b16 %v611
    %v2552 = vunpack.c.l.b16 %v612
    %v2553 = vunpack.c.h.b16 %v612
    %v2554 = vunpack.c.l.b16 %v613
    %v2555 = vunpack.c.l.b16 %v614
    %v2556 = vunpack.c.h.b16 %v614
    %v2557 = vunpack.c.l.b16 %v615
    %v2558 = vunpack.c.h.b16 %v615
    %v2559 = vunpack.c.l.b16 %v616
    %v2560 = vunpack.c.h.b16 %v616
    %v2561 = vunpack.c.l.b16 %v617
    %v2562 = vunpack.c.h.b16 %v617
    %v2563 = vunpack.c.l.b16 %v618
    %v2564 = vunpack.c.l.b16 %v619
    %v2565 = vunpack.c.h.b16 %v619
    %v2566 = vunpack.c.l.b16 %v620
    %v2567 = vunpack.c.h.b16 %v620
    %v2568 = vunpack.c.l.b16 %v621
    %v2569 = vunpack.c.h.b16 %v621
    %v2570 = vunpack.c.l.b16 %v622
    %v2571 = vunpack.c.h.b16 %v622
    %v2572 = vunpack.c.l.b16 %v623
    %v2573 = vunpack.c.l.b16 %v624
    %v2574 = vunpack.c.h.b16 %v624
    %v2575 = vunpack.c.l.b16 %v625
    %v2576 = vunpack.c.h.b16 %v625
    %v2577 = vunpack.c.l.b16 %v626
    %v2578 = vunpack.c.h.b16 %v626
    %v2579 = vunpack.c.l.b16 %v627
    %v2580 = vunpack.c.h.b16 %v627
    %v2581 = vunpack.c.l.b16 %v628
    %v2582 = vunpack.c.l.b16 %v629
    %v2583 = vunpack.c.h.b16 %v629
    %v2584 = vunpack.c.l.b16 %v630
    %v2585 = vunpack.c.h.b16 %v630
    %v2586 = vunpack.c.l.b16 %v631
    %v2587 = vunpack.c.h.b16 %v631
    %v2588 = vunpack.c.l.b16 %v632
    %v2589 = vunpack.c.h.b16 %v632
    %v2590 = vunpack.c.l.b16 %v633
    %v2591 = vunpack.c.l.b16 %v634
    %v2592 = vunpack.c.h.b16 %v634
    %v2593 = vunpack.c.l.b16 %v635
    %v2594 = vunpack.c.h.b16 %v635
    %v2595 = vunpack.c.l.b16 %v636
    %v2596 = vunpack.c.h.b16 %v636
    %v2597 = vunpack.c.l.b16 %v637
    %v2598 = vunpack.c.h.b16 %v637
    %v2599 = vunpack.c.l.b16 %v638
    %v2600 = vunpack.c.l.b16 %v639
    %v2601 = vunpack.c.h.b16 %v639
    %v2602 = vunpack.c.l.b16 %v640
    %v2603 = vunpack.c.h.b16 %v640
    %v2604 = vunpack.c.l.b16 %v641
    %v2605 = vunpack.c.h.b16 %v641
    %v2606 = vunpack.c.l.b16 %v642
    %v2607 = vunpack.c.h.b16 %v642
    %v2608 = vunpack.c.l.b16 %v643
    %v2609 = vunpack.c.l.b16 %v644
    %v2610 = vunpack.c.h.b16 %v644
    %v2611 = vunpack.c.l.b16 %v645
    %v2612 = vunpack.c.h.b16 %v645
    %v2613 = vunpack.c.l.b16 %v646
    %v2614 = vunpack.c.h.b16 %v646
    %v2615 = vunpack.c.l.b16 %v647
    %v2616 = vunpack.c.h.b16 %v647
    %v2617 = vunpack.c.l.b16 %v648
    %v2618 = vunpack.c.l.b16 %v649
    %v2619 = vunpack.c.h.b16 %v649
    %v2620 = vunpack.c.l.b16 %v650
    %v2621 = vunpack.c.h.b16 %v650
    %v2622 = vunpack.c.l.b16 %v651
    %v2623 = vunpack.c.h.b16 %v651
    %v2624 = vunpack.c.l.b16 %v652
    %v2625 = vunpack.c.h.b16 %v652
    %v2626 = vunpack.c.l.b16 %v653
    %v2627 = vunpack.c.l.b16 %v654
    %v2628 = vunpack.c.h.b16 %v654
    %v2629 = vunpack.c.l.b16 %v655
    %v2630 = vunpack.c.h.b16 %v655
    %v2631 = vunpack.c.l.b16 %v656
    %v2632 = vunpack.c.h.b16 %v656
    %v2633 = vunpack.c.l.b16 %v657
    %v2634 = vunpack.c.h.b16 %v657
    %v2635 = vunpack.c.l.b16 %v658
    %v2636 = vunpack.c.l.b16 %v659
    %v2637 = vunpack.c.h.b16 %v659
    %v2638 = vunpack.c.l.b16 %v660
    %v2639 = vunpack.c.h.b16 %v660
    %v2640 = vunpack.c.l.b16 %v661
    %v2641 = vunpack.c.h.b16 %v661
    %v2642 = vunpack.c.l.b16 %v662
    %v2643 = vunpack.c.h.b16 %v662
    %v2644 = vunpack.c.l.b16 %v663
    %v2645 = vunpack.c.l.b16 %v664
    %v2646 = vunpack.c.h.b16 %v664
    %v2647 = vunpack.c.l.b16 %v665
    %v2648 = vunpack.c.h.b16 %v665
    %v2649 = vunpack.c.l.b16 %v666
    %v2650 = vunpack.c.h.b16 %v666
    %v2651 = vunpack.c.l.b16 %v667
    %v2652 = vunpack.c.h.b16 %v667
    %v2653 = vunpack.c.l.b16 %v668
    %v2654 = vunpack.c.l.b16 %v669
    %v2655 = vunpack.c.h.b16 %v669
    %v2656 = vunpack.c.l.b16 %v670
    %v2657 = vunpack.c.h.b16 %v670
    %v2658 = vunpack.c.l.b16 %v671
    %v2659 = vunpack.c.h.b16 %v671
    %v2660 = vunpack.c.l.b16 %v672
    %v2661 = vunpack.c.h.b16 %v672
    %v2662 = vunpack.c.l.b16 %v673
    %v2663 = vunpack.c.l.b16 %v674
    %v2664 = vunpack.c.h.b16 %v674
    %v2665 = vunpack.c.l.b16 %v675
    %v2666 = vunpack.c.h.b16 %v675
    %v2667 = vunpack.c.l.b16 %v676
    %v2668 = vunpack.c.h.b16 %v676
    %v2669 = vunpack.c.l.b16 %v677
    %v2670 = vunpack.c.h.b16 %v677
    %v2671 = vunpack.c.l.b16 %v678
    %v2672 = vunpack.c.l.b16 %v679
    %v2673 = vunpack.c.h.b16 %v679
    %v2674 = vunpack.c.l.b16 %v680
    %v2675 = vunpack.c.h.b16 %v680
    %v2676 = vunpack.c.l.b16 %v681
    %v2677 = vunpack.c.h.b16 %v681
    %v2678 = vunpack.c.l.b16 %v682
    %v2679 = vunpack.c.h.b16 %v682
    %v2680 = vunpack.c.l.b16 %v683
    %v2681 = vunpack.c.l.b16 %v684
    %v2682 = vunpack.c.h.b16 %v684
    %v2683 = vunpack.c.l.b16 %v685
    %v2684 = vunpack.c.h.b16 %v685
    %v2685 = vunpack.c.l.b16 %v686
    %v2686 = vunpack.c.h.b16 %v686
    %v2687 = vunpack.c.l.b16 %v687
    %v2688 = vunpack.c.h.b16 %v687
    %v2689 = vunpack.c.l.b16 %v688
    %v2690 = vunpack.c.l.b16 %v689
    %v2691 = vunpack.c.h.b16 %v689
    %v2692 = vunpack.c.l.b16 %v690
    %v2693 = vunpack.c.h.b16 %v690
    %v2694 = vunpack.c.l.b16 %v691
    %v2695 = vunpack.c.h.b16 %v691
    %v2696 = vunpack.c.l.b16 %v692
    %v2697 = vunpack.c.h.b16 %v692
    %v2698 = vunpack.c.l.b16 %v693
    %v2699 = vunpack.c.l.b16 %v694
    %v2700 = vunpack.c.h.b16 %v694
    %v2701 = vunpack.c.l.b16 %v695
    %v2702 = vunpack.c.h.b16 %v695
    %v2703 = vunpack.c.l.b16 %v696
    %v2704 = vunpack.c.h.b16 %v696
    %v2705 = vunpack.c.l.b16 %v697
    %v2706 = vunpack.c.h.b16 %v697
    %v2707 = vunpack.c.l.b16 %v698
    %v2708 = vunpack.c.l.b16 %v699
    %v2709 = vunpack.c.h.b16 %v699
    %v2710 = vunpack.c.l.b16 %v700
    %v2711 = vunpack.c.h.b16 %v700
    %v2712 = vunpack.c.l.b16 %v701
    %v2713 = vunpack.c.h.b16 %v701
    %v2714 = vunpack.c.l.b16 %v702
    %v2715 = vunpack.c.h.b16 %v702
    %v2716 = vunpack.c.l.b16 %v703
    %v2717 = vunpack.c.l.b16 %v704
    %v2718 = vunpack.c.h.b16 %v704
    %v2719 = vunpack.c.l.b16 %v705
    %v2720 = vunpack.c.h.b16 %v705
    %v2721 = vunpack.c.l.b16 %v706
    %v2722 = vunpack.c.h.b16 %v706
    %v2723 = vunpack.c.l.b16 %v707
    %v2724 = vunpack.c.h.b16 %v707
    %v2725 = vunpack.c.l.b16 %v708
    %v2726 = vunpack.c.l.b16 %v709
    %v2727 = vunpack.c.h.b16 %v709
    %v2728 = vunpack.c.l.b16 %v710
    %v2729 = vunpack.c.h.b16 %v710
    %v2730 = vunpack.c.l.b16 %v711
    %v2731 = vunpack.c.h.b16 %v711
    %v2732 = vunpack.c.l.b16 %v712
    %v2733 = vunpack.c.h.b16 %v712
    %v2734 = vunpack.c.l.b16 %v713
    %v2735 = vunpack.c.l.b16 %v714
    %v2736 = vunpack.c.h.b16 %v714
    %v2737 = vunpack.c.l.b16 %v715
    %v2738 = vunpack.c.h.b16 %v715
    %v2739 = vunpack.c.l.b16 %v716
    %v2740 = vunpack.c.h.b16 %v716
    %v2741 = vunpack.c.l.b16 %v717
    %v2742 = vunpack.c.h.b16 %v717
    %v2743 = vunpack.c.l.b16 %v718
    %v2744 = vunpack.c.l.b16 %v719
    %v2745 = vunpack.c.h.b16 %v719
    %v2746 = vunpack.c.l.b16 %v720
    %v2747 = vunpack.c.h.b16 %v720
    %v2748 = vunpack.c.l.b16 %v721
    %v2749 = vunpack.c.h.b16 %v721
    %v2750 = vunpack.c.l.b16 %v722
    %v2751 = vunpack.c.h.b16 %v722
    %v2752 = vunpack.c.l.b16 %v723
    %v2753 = vunpack.c.l.b16 %v724
    %v2754 = vunpack.c.h.b16 %v724
    %v2755 = vunpack.c.l.b16 %v725
    %v2756 = vunpack.c.h.b16 %v725
    %v2757 = vunpack.c.l.b16 %v726
    %v2758 = vunpack.c.h.b16 %v726
    %v2759 = vunpack.c.l.b16 %v727
    %v2760 = vunpack.c.h.b16 %v727
    %v2761 = vunpack.c.l.b16 %v728
    %v2762 = vunpack.c.l.b16 %v729
    %v2763 = vunpack.c.h.b16 %v729
    %v2764 = vunpack.c.l.b16 %v730
    %v2765 = vunpack.c.h.b16 %v730
    %v2766 = vunpack.c.l.b16 %v731
    %v2767 = vunpack.c.h.b16 %v731
    %v2768 = vunpack.c.l.b16 %v732
    %v2769 = vunpack.c.h.b16 %v732
    %v2770 = vunpack.c.l.b16 %v733
    %v2771 = vunpack.c.l.b16 %v734
    %v2772 = vunpack.c.h.b16 %v734
    %v2773 = vunpack.c.l.b16 %v735
    %v2774 = vunpack.c.h.b16 %v735
    %v2775 = vunpack.c.l.b16 %v736
    %v2776 = vunpack.c.h.b16 %v736
    %v2777 = vunpack.c.l.b16 %v737
    %v2778 = vunpack.c.h.b16 %v737
    %v2779 = vunpack.c.l.b16 %v738
    %v2780 = vunpack.c.l.b16 %v739
    %v2781 = vunpack.c.h.b16 %v739
    %v2782 = vunpack.c.l.b16 %v740
    %v2783 = vunpack.c.h.b16 %v740
    %v2784 = vunpack.c.l.b16 %v741
    %v2785 = vunpack.c.h.b16 %v741
    %v2786 = vunpack.c.l.b16 %v742
    %v2787 = vunpack.c.h.b16 %v742
    %v2788 = vunpack.c.l.b16 %v743
    %v2789 = vunpack.c.l.b16 %v744
    %v2790 = vunpack.c.h.b16 %v744
    %v2791 = vunpack.c.l.b16 %v745
    %v2792 = vunpack.c.h.b16 %v745
    %v2793 = vunpack.c.l.b16 %v746
    %v2794 = vunpack.c.h.b16 %v746
    %v2795 = vunpack.c.l.b16 %v747
    %v2796 = vunpack.c.h.b16 %v747
    %v2797 = vunpack.c.l.b16 %v748
    %v2798 = vunpack.c.l.b16 %v749
    %v2799 = vunpack.c.h.b16 %v749
    %v2800 = vunpack.c.l.b16 %v750
    %v2801 = vunpack.c.h.b16 %v750
    %v2802 = vunpack.c.l.b16 %v751
    %v2803 = vunpack.c.h.b16 %v751
    %v2804 = vunpack.c.l.b16 %v752
    %v2805 = vunpack.c.h.b16 %v752
    %v2806 = vunpack.c.l.b16 %v753
    %v2807 = vunpack.c.l.b16 %v754
    %v2808 = vunpack.c.h.b16 %v754
    %v2809 = vunpack.c.l.b16 %v755
    %v2810 = vunpack.c.h.b16 %v755
    %v2811 = vunpack.c.l.b16 %v756
    %v2812 = vunpack.c.h.b16 %v756
    %v2813 = vunpack.c.l.b16 %v757
    %v2814 = vunpack.c.h.b16 %v757
    %v2815 = vunpack.c.l.b16 %v758
    %v2816 = vunpack.c.l.b16 %v759
    %v2817 = vunpack.c.h.b16 %v759
    %v2818 = vunpack.c.l.b16 %v760
    %v2819 = vunpack.c.h.b16 %v760
    %v2820 = vunpack.c.l.b16 %v761
    %v2821 = vunpack.c.h.b16 %v761
    %v2822 = vunpack.c.l.b16 %v762
    %v2823 = vunpack.c.h.b16 %v762
    %v2824 = vunpack.c.l.b16 %v763
    %v2825 = vunpack.c.l.b16 %v764
    %v2826 = vunpack.c.h.b16 %v764
    %v2827 = vunpack.c.l.b16 %v765
    %v2828 = vunpack.c.h.b16 %v765
    %v2829 = vunpack.c.l.b16 %v766
    %v2830 = vunpack.c.h.b16 %v766
    %v2831 = vunpack.c.l.b16 %v767
    %v2832 = vunpack.c.h.b16 %v767
    %v2833 = vunpack.c.l.b16 %v768
    %v2834 = vunpack.c.l.b16 %v769
    %v2835 = vunpack.c.h.b16 %v769
    %v2836 = vunpack.c.l.b16 %v770
    %v2837 = vunpack.c.h.b16 %v770
    %v2838 = vunpack.c.l.b16 %v771
    %v2839 = vunpack.c.h.b16 %v771
    %v2840 = vunpack.c.l.b16 %v772
    %v2841 = vunpack.c.h.b16 %v772
    %v2842 = vunpack.c.l.b16 %v773
    %v2843 = vunpack.c.l.b16 %v774
    %v2844 = vunpack.c.h.b16 %v774
    %v2845 = vunpack.c.l.b16 %v775
    %v2846 = vunpack.c.h.b16 %v775
    %v2847 = vunpack.c.l.b16 %v776
    %v2848 = vunpack.c.h.b16 %v776
    %v2849 = vunpack.c.l.b16 %v777
    %v2850 = vunpack.c.h.b16 %v777
    %v2851 = vunpack.c.l.b16 %v778
    %v2852 = vunpack.c.l.b16 %v779
    %v2853 = vunpack.c.h.b16 %v779
    %v2854 = vunpack.c.l.b16 %v780
    %v2855 = vunpack.c.h.b16 %v780
    %v2856 = vunpack.c.l.b16 %v781
    %v2857 = vunpack.c.h.b16 %v781
    %v2858 = vunpack.c.l.b16 %v782
    %v2859 = vunpack.c.h.b16 %v782
    %v2860 = vunpack.c.l.b16 %v783
    %v2861 = vunpack.c.l.b16 %v784
    %v2862 = vunpack.c.h.b16 %v784
    %v2863 = vunpack.c.l.b16 %v785
    %v2864 = vunpack.c.h.b16 %v785
    %v2865 = vunpack.c.l.b16 %v786
    %v2866 = vunpack.c.h.b16 %v786
    %v2867 = vunpack.c.l.b16 %v787
    %v2868 = vunpack.c.h.b16 %v787
    %v2869 = vunpack.c.l.b16 %v788
    %v2870 = vunpack.c.l.b16 %v789
    %v2871 = vunpack.c.h.b16 %v789
    %v2872 = vunpack.c.l.b16 %v790
    %v2873 = vunpack.c.h.b16 %v790
    %v2874 = vunpack.c.l.b16 %v791
    %v2875 = vunpack.c.h.b16 %v791
    %v2876 = vunpack.c.l.b16 %v792
    %v2877 = vunpack.c.h.b16 %v792
    %v2878 = vunpack.c.l.b16 %v793
    %v2879 = vunpack.c.l.b16 %v794
    %v2880 = vunpack.c.h.b16 %v794
    %v2881 = vunpack.c.l.b16 %v795
    %v2882 = vunpack.c.h.b16 %v795
    %v2883 = vunpack.c.l.b16 %v796
    %v2884 = vunpack.c.h.b16 %v796
    %v2885 = vunpack.c.l.b16 %v797
    %v2886 = vunpack.c.h.b16 %v797
    %v2887 = vunpack.c.l.b16 %v798
    %v2888 = vunpack.c.l.b16 %v799
    %v2889 = vunpack.c.h.b16 %v799
    %v2890 = vunpack.c.l.b16 %v800
    %v2891 = vunpack.c.h.b16 %v800
    %v2892 = vunpack.c.l.b16 %v801
    %v2893 = vunpack.c.h.b16 %v801
    %v2894 = vunpack.c.l.b16 %v802
    %v2895 = vunpack.c.h.b16 %v802
    %v2896 = vunpack.c.l.b16 %v803
    %v2897 = vunpack.c.l.b16 %v804
    %v2898 = vunpack.c.h.b16 %v804
    %v2899 = vunpack.c.l.b16 %v805
    %v2900 = vunpack.c.h.b16 %v805
    %v2901 = vunpack.c.l.b16 %v806
    %v2902 = vunpack.c.h.b16 %v806
    %v2903 = vunpack.c.l.b16 %v807
    %v2904 = vunpack.c.h.b16 %v807
    %v2905 = vunpack.c.l.b16 %v808
    %v2906 = vpack.c.b16 %v1619, %v1610
    %v2907 = vpack.c.b16 %v1620, %v1611
    %v2908 = vpack.c.b16 %v1621, %v1612
    %v2909 = vpack.c.b16 %v1622, %v1613
    %v2910 = vpack.c.b16 %v1623, %v1614
    %v2911 = vpack.c.b16 %v1624, %v1615
    %v2912 = vpack.c.b16 %v1625, %v1616
    %v2913 = vpack.c.b16 %v1626, %v1617
    %v2914 = vpack.c.b16 %v1627, %v1618
    %v2915 = vpack.c.b16 %v1637, %v1628
    %v2916 = vpack.c.b16 %v1638, %v1629
    %v2917 = vpack.c.b16 %v1639, %v1630
    %v2918 = vpack.c.b16 %v1640, %v1631
    %v2919 = vpack.c.b16 %v1641, %v1632
    %v2920 = vpack.c.b16 %v1642, %v1633
    %v2921 = vpack.c.b16 %v1643, %v1634
    %v2922 = vpack.c.b16 %v1644, %v1635
    %v2923 = vpack.c.b16 %v1645, %v1636
    %v2924 = vpack.c.b16 %v1655, %v1646
    %v2925 = vpack.c.b16 %v1656, %v1647
    %v2926 = vpack.c.b16 %v1657, %v1648
    %v2927 = vpack.c.b16 %v1658, %v1649
    %v2928 = vpack.c.b16 %v1659, %v1650
    %v2929 = vpack.c.b16 %v1660, %v1651
    %v2930 = vpack.c.b16 %v1661, %v1652
    %v2931 = vpack.c.b16 %v1662, %v1653
    %v2932 = vpack.c.b16 %v1663, %v1654
    %v2933 = vpack.c.b16 %v1673, %v1664
    %v2934 = vpack.c.b16 %v1674, %v1665
    %v2935 = vpack.c.b16 %v1675, %v1666
    %v2936 = vpack.c.b16 %v1676, %v1667
    %v2937 = vpack.c.b16 %v1677, %v1668
    %v2938 = vpack.c.b16 %v1678, %v1669
    %v2939 = vpack.c.b16 %v1679, %v1670
    %v2940 = vpack.c.b16 %v1680, %v1671
    %v2941 = vpack.c.b16 %v1681, %v1672
    %v2942 = vpack.c.b16 %v1691, %v1682
    %v2943 = vpack.c.b16 %v1692, %v1683
    %v2944 = vpack.c.b16 %v1693, %v1684
    %v2945 = vpack.c.b16 %v1694, %v1685
    %v2946 = vpack.c.b16 %v1695, %v1686
    %v2947 = vpack.c.b16 %v1696, %v1687
    %v2948 = vpack.c.b16 %v1697, %v1688
    %v2949 = vpack.c.b16 %v1698, %v1689
    %v2950 = vpack.c.b16 %v1699, %v1690
    %v2951 = vpack.c.b16 %v1709, %v1700
    %v2952 = vpack.c.b16 %v1710, %v1701
    %v2953 = vpack.c.b16 %v1711, %v1702
    %v2954 = vpack.c.b16 %v1712, %v1703
    %v2955 = vpack.c.b16 %v1713, %v1704
    %v2956 = vpack.c.b16 %v1714, %v1705
    %v2957 = vpack.c.b16 %v1715, %v1706
    %v2958 = vpack.c.b16 %v1716, %v1707
    %v2959 = vpack.c.b16 %v1717, %v1708
    %v2960 = vpack.c.b16 %v1727, %v1718
    %v2961 = vpack.c.b16 %v1728, %v1719
    %v2962 = vpack.c.b16 %v1729, %v1720
    %v2963 = vpack.c.b16 %v1730, %v1721
    %v2964 = vpack.c.b16 %v1731, %v1722
    %v2965 = vpack.c.b16 %v1732, %v1723
    %v2966 = vpack.c.b16 %v1733, %v1724
    %v2967 = vpack.c.b16 %v1734, %v1725
    %v2968 = vpack.c.b16 %v1735, %v1726
    %v2969 = vpack.c.b16 %v1745, %v1736
    %v2970 = vpack.c.b16 %v1746, %v1737
    %v2971 = vpack.c.b16 %v1747, %v1738
    %v2972 = vpack.c.b16 %v1748, %v1739
    %v2973 = vpack.c.b16 %v1749, %v1740
    %v2974 = vpack.c.b16 %v1750, %v1741
    %v2975 = vpack.c.b16 %v1751, %v1742
    %v2976 = vpack.c.b16 %v1752, %v1743
    %v2977 = vpack.c.b16 %v1753, %v1744
    %v2978 = vpack.c.b16 %v1763, %v1754
    %v2979 = vpack.c.b16 %v1764, %v1755
    %v2980 = vpack.c.b16 %v1765, %v1756
    %v2981 = vpack.c.b16 %v1766, %v1757
    %v2982 = vpack.c.b16 %v1767, %v1758
    %v2983 = vpack.c.b16 %v1768, %v1759
    %v2984 = vpack.c.b16 %v1769, %v1760
    %v2985 = vpack.c.b16 %v1770, %v1761
    %v2986 = vpack.c.b16 %v1771, %v1762
    %v2987 = vpack.c.b16 %v1781, %v1772
    %v2988 = vpack.c.b16 %v1782, %v1773
    %v2989 = vpack.c.b16 %v1783, %v1774
    %v2990 = vpack.c.b16 %v1784, %v1775
    %v2991 = vpack.c.b16 %v1785, %v1776
    %v2992 = vpack.c.b16 %v1786, %v1777
    %v2993 = vpack.c.b16 %v1787, %v1778
    %v2994 = vpack.c.b16 %v1788, %v1779
    %v2995 = vpack.c.b16 %v1789, %v1780
    %v2996 = vpack.c.b16 %v1799, %v1790
    %v2997 = vpack.c.b16 %v1800, %v1791
    %v2998 = vpack.c.b16 %v1801, %v1792
    %v2999 = vpack.c.b16 %v1802, %v1793
    %v3000 = vpack.c.b16 %v1803, %v1794
    %v3001 = vpack.c.b16 %v1804, %v1795
    %v3002 = vpack.c.b16 %v1805, %v1796
    %v3003 = vpack.c.b16 %v1806, %v1797
    %v3004 = vpack.c.b16 %v1807, %v1798
    %v3005 = vpack.c.b16 %v1817, %v1808
    %v3006 = vpack.c.b16 %v1818, %v1809
    %v3007 = vpack.c.b16 %v1819, %v1810
    %v3008 = vpack.c.b16 %v1820, %v1811
    %v3009 = vpack.c.b16 %v1821, %v1812
    %v3010 = vpack.c.b16 %v1822, %v1813
    %v3011 = vpack.c.b16 %v1823, %v1814
    %v3012 = vpack.c.b16 %v1824, %v1815
    %v3013 = vpack.c.b16 %v1825, %v1816
    %v3014 = vpack.c.b16 %v1835, %v1826
    %v3015 = vpack.c.b16 %v1836, %v1827
    %v3016 = vpack.c.b16 %v1837, %v1828
    %v3017 = vpack.c.b16 %v1838, %v1829
    %v3018 = vpack.c.b16 %v1839, %v1830
    %v3019 = vpack.c.b16 %v1840, %v1831
    %v3020 = vpack.c.b16 %v1841, %v1832
    %v3021 = vpack.c.b16 %v1842, %v1833
    %v3022 = vpack.c.b16 %v1843, %v1834
    %v3023 = vpack.c.b16 %v1853, %v1844
    %v3024 = vpack.c.b16 %v1854, %v1845
    %v3025 = vpack.c.b16 %v1855, %v1846
    %v3026 = vpack.c.b16 %v1856, %v1847
    %v3027 = vpack.c.b16 %v1857, %v1848
    %v3028 = vpack.c.b16 %v1858, %v1849
    %v3029 = vpack.c.b16 %v1859, %v1850
    %v3030 = vpack.c.b16 %v1860, %v1851
    %v3031 = vpack.c.b16 %v1861, %v1852
    %v3032 = vpack.c.b16 %v1871, %v1862
    %v3033 = vpack.c.b16 %v1872, %v1863
    %v3034 = vpack.c.b16 %v1873, %v1864
    %v3035 = vpack.c.b16 %v1874, %v1865
    %v3036 = vpack.c.b16 %v1875, %v1866
    %v3037 = vpack.c.b16 %v1876, %v1867
    %v3038 = vpack.c.b16 %v1877, %v1868
    %v3039 = vpack.c.b16 %v1878, %v1869
    %v3040 = vpack.c.b16 %v1879, %v1870
    %v3041 = vpack.c.b16 %v1889, %v1880
    %v3042 = vpack.c.b16 %v1890, %v1881
    %v3043 = vpack.c.b16 %v1891, %v1882
    %v3044 = vpack.c.b16 %v1892, %v1883
    %v3045 = vpack.c.b16 %v1893, %v1884
    %v3046 = vpack.c.b16 %v1894, %v1885
    %v3047 = vpack.c.b16 %v1895, %v1886
    %v3048 = vpack.c.b16 %v1896, %v1887
    %v3049 = vpack.c.b16 %v1897, %v1888
    %v3050 = vpack.c.b16 %v1907, %v1898
    %v3051 = vpack.c.b16 %v1908, %v1899
    %v3052 = vpack.c.b16 %v1909, %v1900
    %v3053 = vpack.c.b16 %v1910, %v1901
    %v3054 = vpack.c.b16 %v1911, %v1902
    %v3055 = vpack.c.b16 %v1912, %v1903
    %v3056 = vpack.c.b16 %v1913, %v1904
    %v3057 = vpack.c.b16 %v1914, %v1905
    %v3058 = vpack.c.b16 %v1915, %v1906
    %v3059 = vpack.c.b16 %v1925, %v1916
    %v3060 = vpack.c.b16 %v1926, %v1917
    %v3061 = vpack.c.b16 %v1927, %v1918
    %v3062 = vpack.c.b16 %v1928, %v1919
    %v3063 = vpack.c.b16 %v1929, %v1920
    %v3064 = vpack.c.b16 %v1930, %v1921
    %v3065 = vpack.c.b16 %v1931, %v1922
    %v3066 = vpack.c.b16 %v1932, %v1923
    %v3067 = vpack.c.b16 %v1933, %v1924
    %v3068 = vpack.c.b16 %v1943, %v1934
    %v3069 = vpack.c.b16 %v1944, %v1935
    %v3070 = vpack.c.b16 %v1945, %v1936
    %v3071 = vpack.c.b16 %v1946, %v1937
    %v3072 = vpack.c.b16 %v1947, %v1938
    %v3073 = vpack.c.b16 %v1948, %v1939
    %v3074 = vpack.c.b16 %v1949, %v1940
    %v3075 = vpack.c.b16 %v1950, %v1941
    %v3076 = vpack.c.b16 %v1951, %v1942
    %v3077 = vpack.c.b16 %v1961, %v1952
    %v3078 = vpack.c.b16 %v1962, %v1953
    %v3079 = vpack.c.b16 %v1963, %v1954
    %v3080 = vpack.c.b16 %v1964, %v1955
    %v3081 = vpack.c.b16 %v1965, %v1956
    %v3082 = vpack.c.b16 %v1966, %v1957
    %v3083 = vpack.c.b16 %v1967, %v1958
    %v3084 = vpack.c.b16 %v1968, %v1959
    %v3085 = vpack.c.b16 %v1969, %v1960
    %v3086 = vpack.c.b16 %v1979, %v1970
    %v3087 = vpack.c.b16 %v1980, %v1971
    %v3088 = vpack.c.b16 %v1981, %v1972
    %v3089 = vpack.c.b16 %v1982, %v1973
    %v3090 = vpack.c.b16 %v1983, %v1974
    %v3091 = vpack.c.b16 %v1984, %v1975
    %v3092 = vpack.c.b16 %v1985, %v1976
    %v3093 = vpack.c.b16 %v1986, %v1977
    %v3094 = vpack.c.b16 %v1987, %v1978
    %v3095 = vpack.c.b16 %v1997, %v1988
    %v3096 = vpack.c.b16 %v1998, %v1989
    %v3097 = vpack.c.b16 %v1999, %v1990
    %v3098 = vpack.c.b16 %v2000, %v1991
    %v3099 = vpack.c.b16 %v2001, %v1992
    %v3100 = vpack.c.b16 %v2002, %v1993
    %v3101 = vpack.c.b16 %v2003, %v1994
    %v3102 = vpack.c.b16 %v2004, %v1995
    %v3103 = vpack.c.b16 %v2005, %v1996
    %v3104 = vpack.c.b16 %v2015, %v2006
    %v3105 = vpack.c.b16 %v2016, %v2007
    %v3106 = vpack.c.b16 %v2017, %v2008
    %v3107 = vpack.c.b16 %v2018, %v2009
    %v3108 = vpack.c.b16 %v2019, %v2010
    %v3109 = vpack.c.b16 %v2020, %v2011
    %v3110 = vpack.c.b16 %v2021, %v2012
    %v3111 = vpack.c.b16 %v2022, %v2013
    %v3112 = vpack.c.b16 %v2023, %v2014
    %v3113 = vpack.c.b16 %v2033, %v2024
    %v3114 = vpack.c.b16 %v2034, %v2025
    %v3115 = vpack.c.b16 %v2035, %v2026
    %v3116 = vpack.c.b16 %v2036, %v2027
    %v3117 = vpack.c.b16 %v2037, %v2028
    %v3118 = vpack.c.b16 %v2038, %v2029
    %v3119 = vpack.c.b16 %v2039, %v2030
    %v3120 = vpack.c.b16 %v2040, %v2031
    %v3121 = vpack.c.b16 %v2041, %v2032
    %v3122 = vpack.c.b16 %v2051, %v2042
    %v3123 = vpack.c.b16 %v2052, %v2043
    %v3124 = vpack.c.b16 %v2053, %v2044
    %v3125 = vpack.c.b16 %v2054, %v2045
    %v3126 = vpack.c.b16 %v2055, %v2046
    %v3127 = vpack.c.b16 %v2056, %v2047
    %v3128 = vpack.c.b16 %v2057, %v2048
    %v3129 = vpack.c.b16 %v2058, %v2049
    %v3130 = vpack.c.b16 %v2059, %v2050
    %v3131 = vpack.c.b16 %v2069, %v2060
    %v3132 = vpack.c.b16 %v2070, %v2061
    %v3133 = vpack.c.b16 %v2071, %v2062
    %v3134 = vpack.c.b16 %v2072, %v2063
    %v3135 = vpack.c.b16 %v2073, %v2064
    %v3136 = vpack.c.b16 %v2074, %v2065
    %v3137 = vpack.c.b16 %v2075, %v2066
    %v3138 = vpack.c.b16 %v2076, %v2067
    %v3139 = vpack.c.b16 %v2077, %v2068
    %v3140 = vpack.c.b16 %v2087, %v2078
    %v3141 = vpack.c.b16 %v2088, %v2079
    %v3142 = vpack.c.b16 %v2089, %v2080
    %v3143 = vpack.c.b16 %v2090, %v2081
    %v3144 = vpack.c.b16 %v2091, %v2082
    %v3145 = vpack.c.b16 %v2092, %v2083
    %v3146 = vpack.c.b16 %v2093, %v2084
    %v3147 = vpack.c.b16 %v2094, %v2085
    %v3148 = vpack.c.b16 %v2095, %v2086
    %v3149 = vpack.c.b16 %v2105, %v2096
    %v3150 = vpack.c.b16 %v2106, %v2097
    %v3151 = vpack.c.b16 %v2107, %v2098
    %v3152 = vpack.c.b16 %v2108, %v2099
    %v3153 = vpack.c.b16 %v2109, %v2100
    %v3154 = vpack.c.b16 %v2110, %v2101
    %v3155 = vpack.c.b16 %v2111, %v2102
    %v3156 = vpack.c.b16 %v2112, %v2103
    %v3157 = vpack.c.b16 %v2113, %v2104
    %v3158 = vpack.c.b16 %v2123, %v2114
    %v3159 = vpack.c.b16 %v2124, %v2115
    %v3160 = vpack.c.b16 %v2125, %v2116
    %v3161 = vpack.c.b16 %v2126, %v2117
    %v3162 = vpack.c.b16 %v2127, %v2118
    %v3163 = vpack.c.b16 %v2128, %v2119
    %v3164 = vpack.c.b16 %v2129, %v2120
    %v3165 = vpack.c.b16 %v2130, %v2121
    %v3166 = vpack.c.b16 %v2131, %v2122
    %v3167 = vpack.c.b16 %v2141, %v2132
    %v3168 = vpack.c.b16 %v2142, %v2133
    %v3169 = vpack.c.b16 %v2143, %v2134
    %v3170 = vpack.c.b16 %v2144, %v2135
    %v3171 = vpack.c.b16 %v2145, %v2136
    %v3172 = vpack.c.b16 %v2146, %v2137
    %v3173 = vpack.c.b16 %v2147, %v2138
    %v3174 = vpack.c.b16 %v2148, %v2139
    %v3175 = vpack.c.b16 %v2149, %v2140
    %v3176 = vpack.c.b16 %v2159, %v2150
    %v3177 = vpack.c.b16 %v2160, %v2151
    %v3178 = vpack.c.b16 %v2161, %v2152
    %v3179 = vpack.c.b16 %v2162, %v2153
    %v3180 = vpack.c.b16 %v2163, %v2154
    %v3181 = vpack.c.b16 %v2164, %v2155
    %v3182 = vpack.c.b16 %v2165, %v2156
    %v3183 = vpack.c.b16 %v2166, %v2157
    %v3184 = vpack.c.b16 %v2167, %v2158
    %v3185 = vpack.c.b16 %v2177, %v2168
    %v3186 = vpack.c.b16 %v2178, %v2169
    %v3187 = vpack.c.b16 %v2179, %v2170
    %v3188 = vpack.c.b16 %v2180, %v2171
    %v3189 = vpack.c.b16 %v2181, %v2172
    %v3190 = vpack.c.b16 %v2182, %v2173
    %v3191 = vpack.c.b16 %v2183, %v2174
    %v3192 = vpack.c.b16 %v2184, %v2175
    %v3193 = vpack.c.b16 %v2185, %v2176
    %v3194 = vpack.c.b16 %v2195, %v2186
    %v3195 = vpack.c.b16 %v2196, %v2187
    %v3196 = vpack.c.b16 %v2197, %v2188
    %v3197 = vpack.c.b16 %v2198, %v2189
    %v3198 = vpack.c.b16 %v2199, %v2190
    %v3199 = vpack.c.b16 %v2200, %v2191
    %v3200 = vpack.c.b16 %v2201, %v2192
    %v3201 = vpack.c.b16 %v2202, %v2193
    %v3202 = vpack.c.b16 %v2203, %v2194
    %v3203 = vpack.c.b16 %v2213, %v2204
    %v3204 = vpack.c.b16 %v2214, %v2205
    %v3205 = vpack.c.b16 %v2215, %v2206
    %v3206 = vpack.c.b16 %v2216, %v2207
    %v3207 = vpack.c.b16 %v2217, %v2208
    %v3208 = vpack.c.b16 %v2218, %v2209
    %v3209 = vpack.c.b16 %v2219, %v2210
    %v3210 = vpack.c.b16 %v2220, %v2211
    %v3211 = vpack.c.b16 %v2221, %v2212
    %v3212 = vpack.c.b16 %v2231, %v2222
    %v3213 = vpack.c.b16 %v2232, %v2223
    %v3214 = vpack.c.b16 %v2233, %v2224
    %v3215 = vpack.c.b16 %v2234, %v2225
    %v3216 = vpack.c.b16 %v2235, %v2226
    %v3217 = vpack.c.b16 %v2236, %v2227
    %v3218 = vpack.c.b16 %v2237, %v2228
    %v3219 = vpack.c.b16 %v2238, %v2229
    %v3220 = vpack.c.b16 %v2239, %v2230
    %v3221 = vpack.c.b16 %v2249, %v2240
    %v3222 = vpack.c.b16 %v2250, %v2241
    %v3223 = vpack.c.b16 %v2251, %v2242
    %v3224 = vpack.c.b16 %v2252, %v2243
    %v3225 = vpack.c.b16 %v2253, %v2244
    %v3226 = vpack.c.b16 %v2254, %v2245
    %v3227 = vpack.c.b16 %v2255, %v2246
    %v3228 = vpack.c.b16 %v2256, %v2247
    %v3229 = vpack.c.b16 %v2257, %v2248
    %v3230 = vpack.c.b16 %v2267, %v2258
    %v3231 = vpack.c.b16 %v2268, %v2259
    %v3232 = vpack.c.b16 %v2269, %v2260
    %v3233 = vpack.c.b16 %v2270, %v2261
    %v3234 = vpack.c.b16 %v2271, %v2262
    %v3235 = vpack.c.b16 %v2272, %v2263
    %v3236 = vpack.c.b16 %v2273, %v2264
    %v3237 = vpack.c.b16 %v2274, %v2265
    %v3238 = vpack.c.b16 %v2275, %v2266
    %v3239 = vpack.c.b16 %v2285, %v2276
    %v3240 = vpack.c.b16 %v2286, %v2277
    %v3241 = vpack.c.b16 %v2287, %v2278
    %v3242 = vpack.c.b16 %v2288, %v2279
    %v3243 = vpack.c.b16 %v2289, %v2280
    %v3244 = vpack.c.b16 %v2290, %v2281
    %v3245 = vpack.c.b16 %v2291, %v2282
    %v3246 = vpack.c.b16 %v2292, %v2283
    %v3247 = vpack.c.b16 %v2293, %v2284
    %v3248 = vpack.c.b16 %v2303, %v2294
    %v3249 = vpack.c.b16 %v2304, %v2295
    %v3250 = vpack.c.b16 %v2305, %v2296
    %v3251 = vpack.c.b16 %v2306, %v2297
    %v3252 = vpack.c.b16 %v2307, %v2298
    %v3253 = vpack.c.b16 %v2308, %v2299
    %v3254 = vpack.c.b16 %v2309, %v2300
    %v3255 = vpack.c.b16 %v2310, %v2301
    %v3256 = vpack.c.b16 %v2311, %v2302
    %v3257 = vpack.c.b16 %v2321, %v2312
    %v3258 = vpack.c.b16 %v2322, %v2313
    %v3259 = vpack.c.b16 %v2323, %v2314
    %v3260 = vpack.c.b16 %v2324, %v2315
    %v3261 = vpack.c.b16 %v2325, %v2316
    %v3262 = vpack.c.b16 %v2326, %v2317
    %v3263 = vpack.c.b16 %v2327, %v2318
    %v3264 = vpack.c.b16 %v2328, %v2319
    %v3265 = vpack.c.b16 %v2329, %v2320
    %v3266 = vpack.c.b16 %v2339, %v2330
    %v3267 = vpack.c.b16 %v2340, %v2331
    %v3268 = vpack.c.b16 %v2341, %v2332
    %v3269 = vpack.c.b16 %v2342, %v2333
    %v3270 = vpack.c.b16 %v2343, %v2334
    %v3271 = vpack.c.b16 %v2344, %v2335
    %v3272 = vpack.c.b16 %v2345, %v2336
    %v3273 = vpack.c.b16 %v2346, %v2337
    %v3274 = vpack.c.b16 %v2347, %v2338
    %v3275 = vpack.c.b16 %v2357, %v2348
    %v3276 = vpack.c.b16 %v2358, %v2349
    %v3277 = vpack.c.b16 %v2359, %v2350
    %v3278 = vpack.c.b16 %v2360, %v2351
    %v3279 = vpack.c.b16 %v2361, %v2352
    %v3280 = vpack.c.b16 %v2362, %v2353
    %v3281 = vpack.c.b16 %v2363, %v2354
    %v3282 = vpack.c.b16 %v2364, %v2355
    %v3283 = vpack.c.b16 %v2365, %v2356
    %v3284 = vpack.c.b16 %v2375, %v2366
    %v3285 = vpack.c.b16 %v2376, %v2367
    %v3286 = vpack.c.b16 %v2377, %v2368
    %v3287 = vpack.c.b16 %v2378, %v2369
    %v3288 = vpack.c.b16 %v2379, %v2370
    %v3289 = vpack.c.b16 %v2380, %v2371
    %v3290 = vpack.c.b16 %v2381, %v2372
    %v3291 = vpack.c.b16 %v2382, %v2373
    %v3292 = vpack.c.b16 %v2383, %v2374
    %v3293 = vpack.c.b16 %v2393, %v2384
    %v3294 = vpack.c.b16 %v2394, %v2385
    %v3295 = vpack.c.b16 %v2395, %v2386
    %v3296 = vpack.c.b16 %v2396, %v2387
    %v3297 = vpack.c.b16 %v2397, %v2388
    %v3298 = vpack.c.b16 %v2398, %v2389
    %v3299 = vpack.c.b16 %v2399, %v2390
    %v3300 = vpack.c.b16 %v2400, %v2391
    %v3301 = vpack.c.b16 %v2401, %v2392
    %v3302 = vpack.c.b16 %v2411, %v2402
    %v3303 = vpack.c.b16 %v2412, %v2403
    %v3304 = vpack.c.b16 %v2413, %v2404
    %v3305 = vpack.c.b16 %v2414, %v2405
    %v3306 = vpack.c.b16 %v2415, %v2406
    %v3307 = vpack.c.b16 %v2416, %v2407
    %v3308 = vpack.c.b16 %v2417, %v2408
    %v3309 = vpack.c.b16 %v2418, %v2409
    %v3310 = vpack.c.b16 %v2419, %v2410
    %v3311 = vpack.c.b16 %v2429, %v2420
    %v3312 = vpack.c.b16 %v2430, %v2421
    %v3313 = vpack.c.b16 %v2431, %v2422
    %v3314 = vpack.c.b16 %v2432, %v2423
    %v3315 = vpack.c.b16 %v2433, %v2424
    %v3316 = vpack.c.b16 %v2434, %v2425
    %v3317 = vpack.c.b16 %v2435, %v2426
    %v3318 = vpack.c.b16 %v2436, %v2427
    %v3319 = vpack.c.b16 %v2437, %v2428
    %v3320 = vpack.c.b16 %v2447, %v2438
    %v3321 = vpack.c.b16 %v2448, %v2439
    %v3322 = vpack.c.b16 %v2449, %v2440
    %v3323 = vpack.c.b16 %v2450, %v2441
    %v3324 = vpack.c.b16 %v2451, %v2442
    %v3325 = vpack.c.b16 %v2452, %v2443
    %v3326 = vpack.c.b16 %v2453, %v2444
    %v3327 = vpack.c.b16 %v2454, %v2445
    %v3328 = vpack.c.b16 %v2455, %v2446
    %v3329 = vpack.c.b16 %v2465, %v2456
    %v3330 = vpack.c.b16 %v2466, %v2457
    %v3331 = vpack.c.b16 %v2467, %v2458
    %v3332 = vpack.c.b16 %v2468, %v2459
    %v3333 = vpack.c.b16 %v2469, %v2460
    %v3334 = vpack.c.b16 %v2470, %v2461
    %v3335 = vpack.c.b16 %v2471, %v2462
    %v3336 = vpack.c.b16 %v2472, %v2463
    %v3337 = vpack.c.b16 %v2473, %v2464
    %v3338 = vpack.c.b16 %v2483, %v2474
    %v3339 = vpack.c.b16 %v2484, %v2475
    %v3340 = vpack.c.b16 %v2485, %v2476
    %v3341 = vpack.c.b16 %v2486, %v2477
    %v3342 = vpack.c.b16 %v2487, %v2478
    %v3343 = vpack.c.b16 %v2488, %v2479
    %v3344 = vpack.c.b16 %v2489, %v2480
    %v3345 = vpack.c.b16 %v2490, %v2481
    %v3346 = vpack.c.b16 %v2491, %v2482
    %v3347 = vpack.c.b16 %v2501, %v2492
    %v3348 = vpack.c.b16 %v2502, %v2493
    %v3349 = vpack.c.b16 %v2503, %v2494
    %v3350 = vpack.c.b16 %v2504, %v2495
    %v3351 = vpack.c.b16 %v2505, %v2496
    %v3352 = vpack.c.b16 %v2506, %v2497
    %v3353 = vpack.c.b16 %v2507, %v2498
    %v3354 = vpack.c.b16 %v2508, %v2499
    %v3355 = vpack.c.b16 %v2509, %v2500
    %v3356 = vpack.c.b16 %v2519, %v2510
    %v3357 = vpack.c.b16 %v2520, %v2511
    %v3358 = vpack.c.b16 %v2521, %v2512
    %v3359 = vpack.c.b16 %v2522, %v2513
    %v3360 = vpack.c.b16 %v2523, %v2514
    %v3361 = vpack.c.b16 %v2524, %v2515
    %v3362 = vpack.c.b16 %v2525, %v2516
    %v3363 = vpack.c.b16 %v2526, %v2517
    %v3364 = vpack.c.b16 %v2527, %v2518
    %v3365 = vpack.c.b16 %v2537, %v2528
    %v3366 = vpack.c.b16 %v2538, %v2529
    %v3367 = vpack.c.b16 %v2539, %v2530
    %v3368 = vpack.c.b16 %v2540, %v2531
    %v3369 = vpack.c.b16 %v2541, %v2532
    %v3370 = vpack.c.b16 %v2542, %v2533
    %v3371 = vpack.c.b16 %v2543, %v2534
    %v3372 = vpack.c.b16 %v2544, %v2535
    %v3373 = vpack.c.b16 %v2545, %v2536
    %v3374 = vpack.c.b16 %v2555, %v2546
    %v3375 = vpack.c.b16 %v2556, %v2547
    %v3376 = vpack.c.b16 %v2557, %v2548
    %v3377 = vpack.c.b16 %v2558, %v2549
    %v3378 = vpack.c.b16 %v2559, %v2550
    %v3379 = vpack.c.b16 %v2560, %v2551
    %v3380 = vpack.c.b16 %v2561, %v2552
    %v3381 = vpack.c.b16 %v2562, %v2553
    %v3382 = vpack.c.b16 %v2563, %v2554
    %v3383 = vpack.c.b16 %v2573, %v2564
    %v3384 = vpack.c.b16 %v2574, %v2565
    %v3385 = vpack.c.b16 %v2575, %v2566
    %v3386 = vpack.c.b16 %v2576, %v2567
    %v3387 = vpack.c.b16 %v2577, %v2568
    %v3388 = vpack.c.b16 %v2578, %v2569
    %v3389 = vpack.c.b16 %v2579, %v2570
    %v3390 = vpack.c.b16 %v2580, %v2571
    %v3391 = vpack.c.b16 %v2581, %v2572
    %v3392 = vpack.c.b16 %v2591, %v2582
    %v3393 = vpack.c.b16 %v2592, %v2583
    %v3394 = vpack.c.b16 %v2593, %v2584
    %v3395 = vpack.c.b16 %v2594, %v2585
    %v3396 = vpack.c.b16 %v2595, %v2586
    %v3397 = vpack.c.b16 %v2596, %v2587
    %v3398 = vpack.c.b16 %v2597, %v2588
    %v3399 = vpack.c.b16 %v2598, %v2589
    %v3400 = vpack.c.b16 %v2599, %v2590
    %v3401 = vpack.c.b16 %v2609, %v2600
    %v3402 = vpack.c.b16 %v2610, %v2601
    %v3403 = vpack.c.b16 %v2611, %v2602
    %v3404 = vpack.c.b16 %v2612, %v2603
    %v3405 = vpack.c.b16 %v2613, %v2604
    %v3406 = vpack.c.b16 %v2614, %v2605
    %v3407 = vpack.c.b16 %v2615, %v2606
    %v3408 = vpack.c.b16 %v2616, %v2607
    %v3409 = vpack.c.b16 %v2617, %v2608
    %v3410 = vpack.c.b16 %v2627, %v2618
    %v3411 = vpack.c.b16 %v2628, %v2619
    %v3412 = vpack.c.b16 %v2629, %v2620
    %v3413 = vpack.c.b16 %v2630, %v2621
    %v3414 = vpack.c.b16 %v2631, %v2622
    %v3415 = vpack.c.b16 %v2632, %v2623
    %v3416 = vpack.c.b16 %v2633, %v2624
    %v3417 = vpack.c.b16 %v2634, %v2625
    %v3418 = vpack.c.b16 %v2635, %v2626
    %v3419 = vpack.c.b16 %v2645, %v2636
    %v3420 = vpack.c.b16 %v2646, %v2637
    %v3421 = vpack.c.b16 %v2647, %v2638
    %v3422 = vpack.c.b16 %v2648, %v2639
    %v3423 = vpack.c.b16 %v2649, %v2640
    %v3424 = vpack.c.b16 %v2650, %v2641
    %v3425 = vpack.c.b16 %v2651, %v2642
    %v3426 = vpack.c.b16 %v2652, %v2643
    %v3427 = vpack.c.b16 %v2653, %v2644
    %v3428 = vpack.c.b16 %v2663, %v2654
    %v3429 = vpack.c.b16 %v2664, %v2655
    %v3430 = vpack.c.b16 %v2665, %v2656
    %v3431 = vpack.c.b16 %v2666, %v2657
    %v3432 = vpack.c.b16 %v2667, %v2658
    %v3433 = vpack.c.b16 %v2668, %v2659
    %v3434 = vpack.c.b16 %v2669, %v2660
    %v3435 = vpack.c.b16 %v2670, %v2661
    %v3436 = vpack.c.b16 %v2671, %v2662
    %v3437 = vpack.c.b16 %v2681, %v2672
    %v3438 = vpack.c.b16 %v2682, %v2673
    %v3439 = vpack.c.b16 %v2683, %v2674
    %v3440 = vpack.c.b16 %v2684, %v2675
    %v3441 = vpack.c.b16 %v2685, %v2676
    %v3442 = vpack.c.b16 %v2686, %v2677
    %v3443 = vpack.c.b16 %v2687, %v2678
    %v3444 = vpack.c.b16 %v2688, %v2679
    %v3445 = vpack.c.b16 %v2689, %v2680
    %v3446 = vpack.c.b16 %v2699, %v2690
    %v3447 = vpack.c.b16 %v2700, %v2691
    %v3448 = vpack.c.b16 %v2701, %v2692
    %v3449 = vpack.c.b16 %v2702, %v2693
    %v3450 = vpack.c.b16 %v2703, %v2694
    %v3451 = vpack.c.b16 %v2704, %v2695
    %v3452 = vpack.c.b16 %v2705, %v2696
    %v3453 = vpack.c.b16 %v2706, %v2697
    %v3454 = vpack.c.b16 %v2707, %v2698
    %v3455 = vpack.c.b16 %v2717, %v2708
    %v3456 = vpack.c.b16 %v2718, %v2709
    %v3457 = vpack.c.b16 %v2719, %v2710
    %v3458 = vpack.c.b16 %v2720, %v2711
    %v3459 = vpack.c.b16 %v2721, %v2712
    %v3460 = vpack.c.b16 %v2722, %v2713
    %v3461 = vpack.c.b16 %v2723, %v2714
    %v3462 = vpack.c.b16 %v2724, %v2715
    %v3463 = vpack.c.b16 %v2725, %v2716
    %v3464 = vpack.c.b16 %v2735, %v2726
    %v3465 = vpack.c.b16 %v2736, %v2727
    %v3466 = vpack.c.b16 %v2737, %v2728
    %v3467 = vpack.c.b16 %v2738, %v2729
    %v3468 = vpack.c.b16 %v2739, %v2730
    %v3469 = vpack.c.b16 %v2740, %v2731
    %v3470 = vpack.c.b16 %v2741, %v2732
    %v3471 = vpack.c.b16 %v2742, %v2733
    %v3472 = vpack.c.b16 %v2743, %v2734
    %v3473 = vpack.c.b16 %v2753, %v2744
    %v3474 = vpack.c.b16 %v2754, %v2745
    %v3475 = vpack.c.b16 %v2755, %v2746
    %v3476 = vpack.c.b16 %v2756, %v2747
    %v3477 = vpack.c.b16 %v2757, %v2748
    %v3478 = vpack.c.b16 %v2758, %v2749
    %v3479 = vpack.c.b16 %v2759, %v2750
    %v3480 = vpack.c.b16 %v2760, %v2751
    %v3481 = vpack.c.b16 %v2761, %v2752
    %v3482 = vpack.c.b16 %v2771, %v2762
    %v3483 = vpack.c.b16 %v2772, %v2763
    %v3484 = vpack.c.b16 %v2773, %v2764
    %v3485 = vpack.c.b16 %v2774, %v2765
    %v3486 = vpack.c.b16 %v2775, %v2766
    %v3487 = vpack.c.b16 %v2776, %v2767
    %v3488 = vpack.c.b16 %v2777, %v2768
    %v3489 = vpack.c.b16 %v2778, %v2769
    %v3490 = vpack.c.b16 %v2779, %v2770
    %v3491 = vpack.c.b16 %v2789, %v2780
    %v3492 = vpack.c.b16 %v2790, %v2781
    %v3493 = vpack.c.b16 %v2791, %v2782
    %v3494 = vpack.c.b16 %v2792, %v2783
    %v3495 = vpack.c.b16 %v2793, %v2784
    %v3496 = vpack.c.b16 %v2794, %v2785
    %v3497 = vpack.c.b16 %v2795, %v2786
    %v3498 = vpack.c.b16 %v2796, %v2787
    %v3499 = vpack.c.b16 %v2797, %v2788
    %v3500 = vpack.c.b16 %v2807, %v2798
    %v3501 = vpack.c.b16 %v2808, %v2799
    %v3502 = vpack.c.b16 %v2809, %v2800
    %v3503 = vpack.c.b16 %v2810, %v2801
    %v3504 = vpack.c.b16 %v2811, %v2802
    %v3505 = vpack.c.b16 %v2812, %v2803
    %v3506 = vpack.c.b16 %v2813, %v2804
    %v3507 = vpack.c.b16 %v2814, %v2805
    %v3508 = vpack.c.b16 %v2815, %v2806
    %v3509 = vpack.c.b16 %v2825, %v2816
    %v3510 = vpack.c.b16 %v2826, %v2817
    %v3511 = vpack.c.b16 %v2827, %v2818
    %v3512 = vpack.c.b16 %v2828, %v2819
    %v3513 = vpack.c.b16 %v2829, %v2820
    %v3514 = vpack.c.b16 %v2830, %v2821
    %v3515 = vpack.c.b16 %v2831, %v2822
    %v3516 = vpack.c.b16 %v2832, %v2823
    %v3517 = vpack.c.b16 %v2833, %v2824
    %v3518 = vpack.c.b16 %v2843, %v2834
    %v3519 = vpack.c.b16 %v2844, %v2835
    %v3520 = vpack.c.b16 %v2845, %v2836
    %v3521 = vpack.c.b16 %v2846, %v2837
    %v3522 = vpack.c.b16 %v2847, %v2838
    %v3523 = vpack.c.b16 %v2848, %v2839
    %v3524 = vpack.c.b16 %v2849, %v2840
    %v3525 = vpack.c.b16 %v2850, %v2841
    %v3526 = vpack.c.b16 %v2851, %v2842
    %v3527 = vpack.c.b16 %v2861, %v2852
    %v3528 = vpack.c.b16 %v2862, %v2853
    %v3529 = vpack.c.b16 %v2863, %v2854
    %v3530 = vpack.c.b16 %v2864, %v2855
    %v3531 = vpack.c.b16 %v2865, %v2856
    %v3532 = vpack.c.b16 %v2866, %v2857
    %v3533 = vpack.c.b16 %v2867, %v2858
    %v3534 = vpack.c.b16 %v2868, %v2859
    %v3535 = vpack.c.b16 %v2869, %v2860
    %v3536 = vpack.c.b16 %v2879, %v2870
    %v3537 = vpack.c.b16 %v2880, %v2871
    %v3538 = vpack.c.b16 %v2881, %v2872
    %v3539 = vpack.c.b16 %v2882, %v2873
    %v3540 = vpack.c.b16 %v2883, %v2874
    %v3541 = vpack.c.b16 %v2884, %v2875
    %v3542 = vpack.c.b16 %v2885, %v2876
    %v3543 = vpack.c.b16 %v2886, %v2877
    %v3544 = vpack.c.b16 %v2887, %v2878
    %v3545 = vpack.c.b16 %v2897, %v2888
    %v3546 = vpack.c.b16 %v2898, %v2889
    %v3547 = vpack.c.b16 %v2899, %v2890
    %v3548 = vpack.c.b16 %v2900, %v2891
    %v3549 = vpack.c.b16 %v2901, %v2892
    %v3550 = vpack.c.b16 %v2902, %v2893
    %v3551 = vpack.c.b16 %v2903, %v2894
    %v3552 = vpack.c.b16 %v2904, %v2895
    %v3553 = vpack.c.b16 %v2905, %v2896
    %4202 = vmatprep.subr.bf16.mxu0 %v2970
    %4203 = vmatpush1.bf16.msra.mxu0 %v2969
    %4204 = vmatprep.subr.bf16.mxu0 %v2961
    %4205 = vmatpush1.bf16.msra.mxu0 %v2960
    %4206 = vmatprep.subr.bf16.mxu0 %v2952
    %4207 = vmatpush1.bf16.msra.mxu0 %v2951
    %4208 = vmatprep.subr.bf16.mxu0 %v2943
    %4209 = vmatpush1.bf16.msra.mxu0 %v2942
    %4210 = vmatprep.subr.bf16.mxu0 %v2934
    %4211 = vmatpush1.bf16.msra.mxu0 %v2933
    %4212 = vmatprep.subr.bf16.mxu0 %v2925
    %4213 = vmatpush1.bf16.msra.mxu0 %v2924
    %4214 = vmatprep.subr.bf16.mxu0 %v2916
    %4215 = vmatpush1.bf16.msra.mxu0 %v2915
    %4216 = vmatprep.subr.bf16.mxu0 %v2907
    %4217 = vmatpush1.bf16.msra.mxu0 %v2906
    %4218 = vmatprep.subr.bf16.mxu0 %v3042
    %4219 = vmatpush2.bf16.msra.mxu0 %v3041
    %4220 = vmatprep.subr.bf16.mxu0 %v3033
    %4221 = vmatpush2.bf16.msra.mxu0 %v3032
    %4222 = vmatprep.subr.bf16.mxu0 %v3024
    %4223 = vmatpush2.bf16.msra.mxu0 %v3023
    %4224 = vmatprep.subr.bf16.mxu0 %v3015
    %4225 = vmatpush2.bf16.msra.mxu0 %v3014
    %4226 = vmatprep.subr.bf16.mxu0 %v3006
    %4227 = vmatpush2.bf16.msra.mxu0 %v3005
    %4228 = vmatprep.subr.bf16.mxu0 %v2997
    %4229 = vmatpush2.bf16.msra.mxu0 %v2996
    %4230 = vmatprep.subr.bf16.mxu0 %v2988
    %4231 = vmatpush2.bf16.msra.mxu0 %v2987
    %4232 = vmatprep.subr.bf16.mxu0 %v2979
    %4233 = vmatpush2.bf16.msra.mxu0 %v2978
    %4234 = vmatprep.mubr.bf16.mxu0 %v873
    %4235 = vmatmul.mubr.bf16.gmra.mxu0 %v872
    %v4236 = vpop.f32.mrf.mxu0
    %v4237 = vadd.f32 %v816, %v4236
    %v4238 = vpop.f32.mrf.mxu0
    %v4239 = vadd.f32 %v820, %v4238
    %v4240 = vpop.f32.mrf.mxu0
    %v4241 = vpop.f32.mrf.mxu0
    %4242 = vdwg.mxu0
    %4243 = vmatprep.subr.bf16.mxu0 %v3114
    %4244 = vmatpush1.bf16.msra.mxu0 %v3113
    %4245 = vmatprep.subr.bf16.mxu0 %v3105
    %4246 = vmatpush1.bf16.msra.mxu0 %v3104
    %4247 = vmatprep.subr.bf16.mxu0 %v3096
    %4248 = vmatpush1.bf16.msra.mxu0 %v3095
    %4249 = vmatprep.subr.bf16.mxu0 %v3087
    %4250 = vmatpush1.bf16.msra.mxu0 %v3086
    %4251 = vmatprep.subr.bf16.mxu0 %v3078
    %4252 = vmatpush1.bf16.msra.mxu0 %v3077
    %4253 = vmatprep.subr.bf16.mxu0 %v3069
    %4254 = vmatpush1.bf16.msra.mxu0 %v3068
    %4255 = vmatprep.subr.bf16.mxu0 %v3060
    %4256 = vmatpush1.bf16.msra.mxu0 %v3059
    %4257 = vmatprep.subr.bf16.mxu0 %v3051
    %4258 = vmatpush1.bf16.msra.mxu0 %v3050
    %4259 = vmatprep.subr.bf16.mxu0 %v3186
    %4260 = vmatpush2.bf16.msra.mxu0 %v3185
    %4261 = vmatprep.subr.bf16.mxu0 %v3177
    %4262 = vmatpush2.bf16.msra.mxu0 %v3176
    %4263 = vmatprep.subr.bf16.mxu0 %v3168
    %4264 = vmatpush2.bf16.msra.mxu0 %v3167
    %4265 = vmatprep.subr.bf16.mxu0 %v3159
    %4266 = vmatpush2.bf16.msra.mxu0 %v3158
    %4267 = vmatprep.subr.bf16.mxu0 %v3150
    %4268 = vmatpush2.bf16.msra.mxu0 %v3149
    %4269 = vmatprep.subr.bf16.mxu0 %v3141
    %4270 = vmatpush2.bf16.msra.mxu0 %v3140
    %4271 = vmatprep.subr.bf16.mxu0 %v3132
    %4272 = vmatpush2.bf16.msra.mxu0 %v3131
    %4273 = vmatprep.subr.bf16.mxu0 %v3123
    %4274 = vmatpush2.bf16.msra.mxu0 %v3122
    %4275 = vmatprep.mubr.bf16.mxu0 %v875
    %4276 = vmatmul.mubr.bf16.gmra.mxu0 %v874
    %v4277 = vpop.f32.mrf.mxu0
    %v4278 = vadd.f32 %v4237, %v4277
    %v4279 = vpop.f32.mrf.mxu0
    %v4280 = vadd.f32 %v4239, %v4279
    %v4281 = vpop.f32.mrf.mxu0
    %v4282 = vpop.f32.mrf.mxu0
    %4283 = vdwg.mxu0
    %4284 = vmatprep.subr.bf16.mxu0 %v3258
    %4285 = vmatpush1.bf16.msra.mxu0 %v3257
    %4286 = vmatprep.subr.bf16.mxu0 %v3249
    %4287 = vmatpush1.bf16.msra.mxu0 %v3248
    %4288 = vmatprep.subr.bf16.mxu0 %v3240
    %4289 = vmatpush1.bf16.msra.mxu0 %v3239
    %4290 = vmatprep.subr.bf16.mxu0 %v3231
    %4291 = vmatpush1.bf16.msra.mxu0 %v3230
    %4292 = vmatprep.subr.bf16.mxu0 %v3222
    %4293 = vmatpush1.bf16.msra.mxu0 %v3221
    %4294 = vmatprep.subr.bf16.mxu0 %v3213
    %4295 = vmatpush1.bf16.msra.mxu0 %v3212
    %4296 = vmatprep.subr.bf16.mxu0 %v3204
    %4297 = vmatpush1.bf16.msra.mxu0 %v3203
    %4298 = vmatprep.subr.bf16.mxu0 %v3195
    %4299 = vmatpush1.bf16.msra.mxu0 %v3194
    %4300 = vmatprep.subr.bf16.mxu0 %v3330
    %4301 = vmatpush2.bf16.msra.mxu0 %v3329
    %4302 = vmatprep.subr.bf16.mxu0 %v3321
    %4303 = vmatpush2.bf16.msra.mxu0 %v3320
    %4304 = vmatprep.subr.bf16.mxu0 %v3312
    %4305 = vmatpush2.bf16.msra.mxu0 %v3311
    %4306 = vmatprep.subr.bf16.mxu0 %v3303
    %4307 = vmatpush2.bf16.msra.mxu0 %v3302
    %4308 = vmatprep.subr.bf16.mxu0 %v3294
    %4309 = vmatpush2.bf16.msra.mxu0 %v3293
    %4310 = vmatprep.subr.bf16.mxu0 %v3285
    %4311 = vmatpush2.bf16.msra.mxu0 %v3284
    %4312 = vmatprep.subr.bf16.mxu0 %v3276
    %4313 = vmatpush2.bf16.msra.mxu0 %v3275
    %4314 = vmatprep.subr.bf16.mxu0 %v3267
    %4315 = vmatpush2.bf16.msra.mxu0 %v3266
    %4316 = vmatprep.mubr.bf16.mxu0 %v877
    %4317 = vmatmul.mubr.bf16.gmra.mxu0 %v876
    %v4318 = vpop.f32.mrf.mxu0
    %v4319 = vadd.f32 %v4278, %v4318
    %v4320 = vpop.f32.mrf.mxu0
    %v4321 = vadd.f32 %v4280, %v4320
    %v4322 = vpop.f32.mrf.mxu0
    %v4323 = vpop.f32.mrf.mxu0
    %4324 = vdwg.mxu0
    %4325 = vmatprep.subr.bf16.mxu0 %v3402
    %4326 = vmatpush1.bf16.msra.mxu0 %v3401
    %4327 = vmatprep.subr.bf16.mxu0 %v3393
    %4328 = vmatpush1.bf16.msra.mxu0 %v3392
    %4329 = vmatprep.subr.bf16.mxu0 %v3384
    %4330 = vmatpush1.bf16.msra.mxu0 %v3383
    %4331 = vmatprep.subr.bf16.mxu0 %v3375
    %4332 = vmatpush1.bf16.msra.mxu0 %v3374
    %4333 = vmatprep.subr.bf16.mxu0 %v3366
    %4334 = vmatpush1.bf16.msra.mxu0 %v3365
    %4335 = vmatprep.subr.bf16.mxu0 %v3357
    %4336 = vmatpush1.bf16.msra.mxu0 %v3356
    %4337 = vmatprep.subr.bf16.mxu0 %v3348
    %4338 = vmatpush1.bf16.msra.mxu0 %v3347
    %4339 = vmatprep.subr.bf16.mxu0 %v3339
    %4340 = vmatpush1.bf16.msra.mxu0 %v3338
    %4341 = vmatprep.subr.bf16.mxu0 %v3474
    %4342 = vmatpush2.bf16.msra.mxu0 %v3473
    %4343 = vmatprep.subr.bf16.mxu0 %v3465
    %4344 = vmatpush2.bf16.msra.mxu0 %v3464
    %4345 = vmatprep.subr.bf16.mxu0 %v3456
    %4346 = vmatpush2.bf16.msra.mxu0 %v3455
    %4347 = vmatprep.subr.bf16.mxu0 %v3447
    %4348 = vmatpush2.bf16.msra.mxu0 %v3446
    %4349 = vmatprep.subr.bf16.mxu0 %v3438
    %4350 = vmatpush2.bf16.msra.mxu0 %v3437
    %4351 = vmatprep.subr.bf16.mxu0 %v3429
    %4352 = vmatpush2.bf16.msra.mxu0 %v3428
    %4353 = vmatprep.subr.bf16.mxu0 %v3420
    %4354 = vmatpush2.bf16.msra.mxu0 %v3419
    %4355 = vmatprep.subr.bf16.mxu0 %v3411
    %4356 = vmatpush2.bf16.msra.mxu0 %v3410
    %4357 = vmatprep.mubr.bf16.mxu0 %v879
    %4358 = vmatmul.mubr.bf16.gmra.mxu0 %v878
    %v4359 = vpop.f32.mrf.mxu0
    %v4360 = vadd.f32 %v4319, %v4359
    %v4361 = vpop.f32.mrf.mxu0
    %v4362 = vadd.f32 %v4321, %v4361
    %v4363 = vpop.f32.mrf.mxu0
    %v4364 = vpop.f32.mrf.mxu0
    %4365 = vdwg.mxu0
    %4366 = vmatprep.subr.bf16.mxu0 %v3546
    %4367 = vmatpush1.bf16.msra.mxu0 %v3545
    %4368 = vmatprep.subr.bf16.mxu0 %v3537
    %4369 = vmatpush1.bf16.msra.mxu0 %v3536
    %4370 = vmatprep.subr.bf16.mxu0 %v3528
    %4371 = vmatpush1.bf16.msra.mxu0 %v3527
    %4372 = vmatprep.subr.bf16.mxu0 %v3519
    %4373 = vmatpush1.bf16.msra.mxu0 %v3518
    %4374 = vmatprep.subr.bf16.mxu0 %v3510
    %4375 = vmatpush1.bf16.msra.mxu0 %v3509
    %4376 = vmatprep.subr.bf16.mxu0 %v3501
    %4377 = vmatpush1.bf16.msra.mxu0 %v3500
    %4378 = vmatprep.subr.bf16.mxu0 %v3492
    %4379 = vmatpush1.bf16.msra.mxu0 %v3491
    %4380 = vmatprep.subr.bf16.mxu0 %v3483
    %4381 = vmatpush1.bf16.msra.mxu0 %v3482
    %4382 = vmatprep.subr.bf16.mxu0 0
    %4383 = vmatpush2.bf16.msra.mxu0 0
    %4384 = vmatprep.subr.bf16.mxu0 0
    %4385 = vmatpush2.bf16.msra.mxu0 0
    %4386 = vmatprep.subr.bf16.mxu0 0
    %4387 = vmatpush2.bf16.msra.mxu0 0
    %4388 = vmatprep.subr.bf16.mxu0 0
    %4389 = vmatpush2.bf16.msra.mxu0 0
    %4390 = vmatprep.subr.bf16.mxu0 0
    %4391 = vmatpush2.bf16.msra.mxu0 0
    %4392 = vmatprep.subr.bf16.mxu0 0
    %4393 = vmatpush2.bf16.msra.mxu0 0
    %4394 = vmatprep.subr.bf16.mxu0 0
    %4395 = vmatpush2.bf16.msra.mxu0 0
    %4396 = vmatprep.subr.bf16.mxu0 0
    %4397 = vmatpush2.bf16.msra.mxu0 0
    %4398 = vmatprep.mubr.bf16.mxu0 0
    %4399 = vmatmul.mubr.bf16.gmra.mxu0 %v880
    %v4400 = vpop.f32.mrf.mxu0
    %v4401 = vadd.f32 %v4360, %v4400
    %v4402 = vpop.f32.mrf.mxu0
    %v4403 = vadd.f32 %v4362, %v4402
    %v4404 = vpop.f32.mrf.mxu0
    %v4405 = vpop.f32.mrf.mxu0
    %4406 = vdwg.mxu0
    %4407 = vmatprep.subr.bf16.mxu0 %v2972
    %4408 = vmatpush1.bf16.msra.mxu0 %v2971
    %4409 = vmatprep.subr.bf16.mxu0 %v2963
    %4410 = vmatpush1.bf16.msra.mxu0 %v2962
    %4411 = vmatprep.subr.bf16.mxu0 %v2954
    %4412 = vmatpush1.bf16.msra.mxu0 %v2953
    %4413 = vmatprep.subr.bf16.mxu0 %v2945
    %4414 = vmatpush1.bf16.msra.mxu0 %v2944
    %4415 = vmatprep.subr.bf16.mxu0 %v2936
    %4416 = vmatpush1.bf16.msra.mxu0 %v2935
    %4417 = vmatprep.subr.bf16.mxu0 %v2927
    %4418 = vmatpush1.bf16.msra.mxu0 %v2926
    %4419 = vmatprep.subr.bf16.mxu0 %v2918
    %4420 = vmatpush1.bf16.msra.mxu0 %v2917
    %4421 = vmatprep.subr.bf16.mxu0 %v2909
    %4422 = vmatpush1.bf16.msra.mxu0 %v2908
    %4423 = vmatprep.subr.bf16.mxu0 %v3044
    %4424 = vmatpush2.bf16.msra.mxu0 %v3043
    %4425 = vmatprep.subr.bf16.mxu0 %v3035
    %4426 = vmatpush2.bf16.msra.mxu0 %v3034
    %4427 = vmatprep.subr.bf16.mxu0 %v3026
    %4428 = vmatpush2.bf16.msra.mxu0 %v3025
    %4429 = vmatprep.subr.bf16.mxu0 %v3017
    %4430 = vmatpush2.bf16.msra.mxu0 %v3016
    %4431 = vmatprep.subr.bf16.mxu0 %v3008
    %4432 = vmatpush2.bf16.msra.mxu0 %v3007
    %4433 = vmatprep.subr.bf16.mxu0 %v2999
    %4434 = vmatpush2.bf16.msra.mxu0 %v2998
    %4435 = vmatprep.subr.bf16.mxu0 %v2990
    %4436 = vmatpush2.bf16.msra.mxu0 %v2989
    %4437 = vmatprep.subr.bf16.mxu0 %v2981
    %4438 = vmatpush2.bf16.msra.mxu0 %v2980
    %4439 = vmatprep.mubr.bf16.mxu0 %v873
    %4440 = vmatmul.mubr.bf16.gmra.mxu0 %v872
    %v4441 = vpop.f32.mrf.mxu0
    %v4442 = vadd.f32 %v824, %v4441
    %v4443 = vpop.f32.mrf.mxu0
    %v4444 = vadd.f32 %v828, %v4443
    %v4445 = vpop.f32.mrf.mxu0
    %v4446 = vpop.f32.mrf.mxu0
    %4447 = vdwg.mxu0
    %4448 = vmatprep.subr.bf16.mxu0 %v3116
    %4449 = vmatpush1.bf16.msra.mxu0 %v3115
    %4450 = vmatprep.subr.bf16.mxu0 %v3107
    %4451 = vmatpush1.bf16.msra.mxu0 %v3106
    %4452 = vmatprep.subr.bf16.mxu0 %v3098
    %4453 = vmatpush1.bf16.msra.mxu0 %v3097
    %4454 = vmatprep.subr.bf16.mxu0 %v3089
    %4455 = vmatpush1.bf16.msra.mxu0 %v3088
    %4456 = vmatprep.subr.bf16.mxu0 %v3080
    %4457 = vmatpush1.bf16.msra.mxu0 %v3079
    %4458 = vmatprep.subr.bf16.mxu0 %v3071
    %4459 = vmatpush1.bf16.msra.mxu0 %v3070
    %4460 = vmatprep.subr.bf16.mxu0 %v3062
    %4461 = vmatpush1.bf16.msra.mxu0 %v3061
    %4462 = vmatprep.subr.bf16.mxu0 %v3053
    %4463 = vmatpush1.bf16.msra.mxu0 %v3052
    %4464 = vmatprep.subr.bf16.mxu0 %v3188
    %4465 = vmatpush2.bf16.msra.mxu0 %v3187
    %4466 = vmatprep.subr.bf16.mxu0 %v3179
    %4467 = vmatpush2.bf16.msra.mxu0 %v3178
    %4468 = vmatprep.subr.bf16.mxu0 %v3170
    %4469 = vmatpush2.bf16.msra.mxu0 %v3169
    %4470 = vmatprep.subr.bf16.mxu0 %v3161
    %4471 = vmatpush2.bf16.msra.mxu0 %v3160
    %4472 = vmatprep.subr.bf16.mxu0 %v3152
    %4473 = vmatpush2.bf16.msra.mxu0 %v3151
    %4474 = vmatprep.subr.bf16.mxu0 %v3143
    %4475 = vmatpush2.bf16.msra.mxu0 %v3142
    %4476 = vmatprep.subr.bf16.mxu0 %v3134
    %4477 = vmatpush2.bf16.msra.mxu0 %v3133
    %4478 = vmatprep.subr.bf16.mxu0 %v3125
    %4479 = vmatpush2.bf16.msra.mxu0 %v3124
    %4480 = vmatprep.mubr.bf16.mxu0 %v875
    %4481 = vmatmul.mubr.bf16.gmra.mxu0 %v874
    %v4482 = vpop.f32.mrf.mxu0
    %v4483 = vadd.f32 %v4442, %v4482
    %v4484 = vpop.f32.mrf.mxu0
    %v4485 = vadd.f32 %v4444, %v4484
    %v4486 = vpop.f32.mrf.mxu0
    %v4487 = vpop.f32.mrf.mxu0
    %4488 = vdwg.mxu0
    %4489 = vmatprep.subr.bf16.mxu0 %v3260
    %4490 = vmatpush1.bf16.msra.mxu0 %v3259
    %4491 = vmatprep.subr.bf16.mxu0 %v3251
    %4492 = vmatpush1.bf16.msra.mxu0 %v3250
    %4493 = vmatprep.subr.bf16.mxu0 %v3242
    %4494 = vmatpush1.bf16.msra.mxu0 %v3241
    %4495 = vmatprep.subr.bf16.mxu0 %v3233
    %4496 = vmatpush1.bf16.msra.mxu0 %v3232
    %4497 = vmatprep.subr.bf16.mxu0 %v3224
    %4498 = vmatpush1.bf16.msra.mxu0 %v3223
    %4499 = vmatprep.subr.bf16.mxu0 %v3215
    %4500 = vmatpush1.bf16.msra.mxu0 %v3214
    %4501 = vmatprep.subr.bf16.mxu0 %v3206
    %4502 = vmatpush1.bf16.msra.mxu0 %v3205
    %4503 = vmatprep.subr.bf16.mxu0 %v3197
    %4504 = vmatpush1.bf16.msra.mxu0 %v3196
    %4505 = vmatprep.subr.bf16.mxu0 %v3332
    %4506 = vmatpush2.bf16.msra.mxu0 %v3331
    %4507 = vmatprep.subr.bf16.mxu0 %v3323
    %4508 = vmatpush2.bf16.msra.mxu0 %v3322
    %4509 = vmatprep.subr.bf16.mxu0 %v3314
    %4510 = vmatpush2.bf16.msra.mxu0 %v3313
    %4511 = vmatprep.subr.bf16.mxu0 %v3305
    %4512 = vmatpush2.bf16.msra.mxu0 %v3304
    %4513 = vmatprep.subr.bf16.mxu0 %v3296
    %4514 = vmatpush2.bf16.msra.mxu0 %v3295
    %4515 = vmatprep.subr.bf16.mxu0 %v3287
    %4516 = vmatpush2.bf16.msra.mxu0 %v3286
    %4517 = vmatprep.subr.bf16.mxu0 %v3278
    %4518 = vmatpush2.bf16.msra.mxu0 %v3277
    %4519 = vmatprep.subr.bf16.mxu0 %v3269
    %4520 = vmatpush2.bf16.msra.mxu0 %v3268
    %4521 = vmatprep.mubr.bf16.mxu0 %v877
    %4522 = vmatmul.mubr.bf16.gmra.mxu0 %v876
    %v4523 = vpop.f32.mrf.mxu0
    %v4524 = vadd.f32 %v4483, %v4523
    %v4525 = vpop.f32.mrf.mxu0
    %v4526 = vadd.f32 %v4485, %v4525
    %v4527 = vpop.f32.mrf.mxu0
    %v4528 = vpop.f32.mrf.mxu0
    %4529 = vdwg.mxu0
    %4530 = vmatprep.subr.bf16.mxu0 %v3404
    %4531 = vmatpush1.bf16.msra.mxu0 %v3403
    %4532 = vmatprep.subr.bf16.mxu0 %v3395
    %4533 = vmatpush1.bf16.msra.mxu0 %v3394
    %4534 = vmatprep.subr.bf16.mxu0 %v3386
    %4535 = vmatpush1.bf16.msra.mxu0 %v3385
    %4536 = vmatprep.subr.bf16.mxu0 %v3377
    %4537 = vmatpush1.bf16.msra.mxu0 %v3376
    %4538 = vmatprep.subr.bf16.mxu0 %v3368
    %4539 = vmatpush1.bf16.msra.mxu0 %v3367
    %4540 = vmatprep.subr.bf16.mxu0 %v3359
    %4541 = vmatpush1.bf16.msra.mxu0 %v3358
    %4542 = vmatprep.subr.bf16.mxu0 %v3350
    %4543 = vmatpush1.bf16.msra.mxu0 %v3349
    %4544 = vmatprep.subr.bf16.mxu0 %v3341
    %4545 = vmatpush1.bf16.msra.mxu0 %v3340
    %4546 = vmatprep.subr.bf16.mxu0 %v3476
    %4547 = vmatpush2.bf16.msra.mxu0 %v3475
    %4548 = vmatprep.subr.bf16.mxu0 %v3467
    %4549 = vmatpush2.bf16.msra.mxu0 %v3466
    %4550 = vmatprep.subr.bf16.mxu0 %v3458
    %4551 = vmatpush2.bf16.msra.mxu0 %v3457
    %4552 = vmatprep.subr.bf16.mxu0 %v3449
    %4553 = vmatpush2.bf16.msra.mxu0 %v3448
    %4554 = vmatprep.subr.bf16.mxu0 %v3440
    %4555 = vmatpush2.bf16.msra.mxu0 %v3439
    %4556 = vmatprep.subr.bf16.mxu0 %v3431
    %4557 = vmatpush2.bf16.msra.mxu0 %v3430
    %4558 = vmatprep.subr.bf16.mxu0 %v3422
    %4559 = vmatpush2.bf16.msra.mxu0 %v3421
    %4560 = vmatprep.subr.bf16.mxu0 %v3413
    %4561 = vmatpush2.bf16.msra.mxu0 %v3412
    %4562 = vmatprep.mubr.bf16.mxu0 %v879
    %4563 = vmatmul.mubr.bf16.gmra.mxu0 %v878
    %v4564 = vpop.f32.mrf.mxu0
    %v4565 = vadd.f32 %v4524, %v4564
    %v4566 = vpop.f32.mrf.mxu0
    %v4567 = vadd.f32 %v4526, %v4566
    %v4568 = vpop.f32.mrf.mxu0
    %v4569 = vpop.f32.mrf.mxu0
    %4570 = vdwg.mxu0
    %4571 = vmatprep.subr.bf16.mxu0 %v3548
    %4572 = vmatpush1.bf16.msra.mxu0 %v3547
    %4573 = vmatprep.subr.bf16.mxu0 %v3539
    %4574 = vmatpush1.bf16.msra.mxu0 %v3538
    %4575 = vmatprep.subr.bf16.mxu0 %v3530
    %4576 = vmatpush1.bf16.msra.mxu0 %v3529
    %4577 = vmatprep.subr.bf16.mxu0 %v3521
    %4578 = vmatpush1.bf16.msra.mxu0 %v3520
    %4579 = vmatprep.subr.bf16.mxu0 %v3512
    %4580 = vmatpush1.bf16.msra.mxu0 %v3511
    %4581 = vmatprep.subr.bf16.mxu0 %v3503
    %4582 = vmatpush1.bf16.msra.mxu0 %v3502
    %4583 = vmatprep.subr.bf16.mxu0 %v3494
    %4584 = vmatpush1.bf16.msra.mxu0 %v3493
    %4585 = vmatprep.subr.bf16.mxu0 %v3485
    %4586 = vmatpush1.bf16.msra.mxu0 %v3484
    %4587 = vmatprep.subr.bf16.mxu0 0
    %4588 = vmatpush2.bf16.msra.mxu0 0
    %4589 = vmatprep.subr.bf16.mxu0 0
    %4590 = vmatpush2.bf16.msra.mxu0 0
    %4591 = vmatprep.subr.bf16.mxu0 0
    %4592 = vmatpush2.bf16.msra.mxu0 0
    %4593 = vmatprep.subr.bf16.mxu0 0
    %4594 = vmatpush2.bf16.msra.mxu0 0
    %4595 = vmatprep.subr.bf16.mxu0 0
    %4596 = vmatpush2.bf16.msra.mxu0 0
    %4597 = vmatprep.subr.bf16.mxu0 0
    %4598 = vmatpush2.bf16.msra.mxu0 0
    %4599 = vmatprep.subr.bf16.mxu0 0
    %4600 = vmatpush2.bf16.msra.mxu0 0
    %4601 = vmatprep.subr.bf16.mxu0 0
    %4602 = vmatpush2.bf16.msra.mxu0 0
    %4603 = vmatprep.mubr.bf16.mxu0 0
    %4604 = vmatmul.mubr.bf16.gmra.mxu0 %v880
    %v4605 = vpop.f32.mrf.mxu0
    %v4606 = vadd.f32 %v4565, %v4605
    %v4607 = vpop.f32.mrf.mxu0
    %v4608 = vadd.f32 %v4567, %v4607
    %v4609 = vpop.f32.mrf.mxu0
    %v4610 = vpop.f32.mrf.mxu0
    %4611 = vdwg.mxu0
    %4612 = vmatprep.subr.bf16.mxu0 %v2974
    %4613 = vmatpush1.bf16.msra.mxu0 %v2973
    %4614 = vmatprep.subr.bf16.mxu0 %v2965
    %4615 = vmatpush1.bf16.msra.mxu0 %v2964
    %4616 = vmatprep.subr.bf16.mxu0 %v2956
    %4617 = vmatpush1.bf16.msra.mxu0 %v2955
    %4618 = vmatprep.subr.bf16.mxu0 %v2947
    %4619 = vmatpush1.bf16.msra.mxu0 %v2946
    %4620 = vmatprep.subr.bf16.mxu0 %v2938
    %4621 = vmatpush1.bf16.msra.mxu0 %v2937
    %4622 = vmatprep.subr.bf16.mxu0 %v2929
    %4623 = vmatpush1.bf16.msra.mxu0 %v2928
    %4624 = vmatprep.subr.bf16.mxu0 %v2920
    %4625 = vmatpush1.bf16.msra.mxu0 %v2919
    %4626 = vmatprep.subr.bf16.mxu0 %v2911
    %4627 = vmatpush1.bf16.msra.mxu0 %v2910
    %4628 = vmatprep.subr.bf16.mxu0 %v3046
    %4629 = vmatpush2.bf16.msra.mxu0 %v3045
    %4630 = vmatprep.subr.bf16.mxu0 %v3037
    %4631 = vmatpush2.bf16.msra.mxu0 %v3036
    %4632 = vmatprep.subr.bf16.mxu0 %v3028
    %4633 = vmatpush2.bf16.msra.mxu0 %v3027
    %4634 = vmatprep.subr.bf16.mxu0 %v3019
    %4635 = vmatpush2.bf16.msra.mxu0 %v3018
    %4636 = vmatprep.subr.bf16.mxu0 %v3010
    %4637 = vmatpush2.bf16.msra.mxu0 %v3009
    %4638 = vmatprep.subr.bf16.mxu0 %v3001
    %4639 = vmatpush2.bf16.msra.mxu0 %v3000
    %4640 = vmatprep.subr.bf16.mxu0 %v2992
    %4641 = vmatpush2.bf16.msra.mxu0 %v2991
    %4642 = vmatprep.subr.bf16.mxu0 %v2983
    %4643 = vmatpush2.bf16.msra.mxu0 %v2982
    %4644 = vmatprep.mubr.bf16.mxu0 %v873
    %4645 = vmatmul.mubr.bf16.gmra.mxu0 %v872
    %v4646 = vpop.f32.mrf.mxu0
    %v4647 = vadd.f32 %v832, %v4646
    %v4648 = vpop.f32.mrf.mxu0
    %v4649 = vadd.f32 %v836, %v4648
    %v4650 = vpop.f32.mrf.mxu0
    %v4651 = vpop.f32.mrf.mxu0
    %4652 = vdwg.mxu0
    %4653 = vmatprep.subr.bf16.mxu0 %v3118
    %4654 = vmatpush1.bf16.msra.mxu0 %v3117
    %4655 = vmatprep.subr.bf16.mxu0 %v3109
    %4656 = vmatpush1.bf16.msra.mxu0 %v3108
    %4657 = vmatprep.subr.bf16.mxu0 %v3100
    %4658 = vmatpush1.bf16.msra.mxu0 %v3099
    %4659 = vmatprep.subr.bf16.mxu0 %v3091
    %4660 = vmatpush1.bf16.msra.mxu0 %v3090
    %4661 = vmatprep.subr.bf16.mxu0 %v3082
    %4662 = vmatpush1.bf16.msra.mxu0 %v3081
    %4663 = vmatprep.subr.bf16.mxu0 %v3073
    %4664 = vmatpush1.bf16.msra.mxu0 %v3072
    %4665 = vmatprep.subr.bf16.mxu0 %v3064
    %4666 = vmatpush1.bf16.msra.mxu0 %v3063
    %4667 = vmatprep.subr.bf16.mxu0 %v3055
    %4668 = vmatpush1.bf16.msra.mxu0 %v3054
    %4669 = vmatprep.subr.bf16.mxu0 %v3190
    %4670 = vmatpush2.bf16.msra.mxu0 %v3189
    %4671 = vmatprep.subr.bf16.mxu0 %v3181
    %4672 = vmatpush2.bf16.msra.mxu0 %v3180
    %4673 = vmatprep.subr.bf16.mxu0 %v3172
    %4674 = vmatpush2.bf16.msra.mxu0 %v3171
    %4675 = vmatprep.subr.bf16.mxu0 %v3163
    %4676 = vmatpush2.bf16.msra.mxu0 %v3162
    %4677 = vmatprep.subr.bf16.mxu0 %v3154
    %4678 = vmatpush2.bf16.msra.mxu0 %v3153
    %4679 = vmatprep.subr.bf16.mxu0 %v3145
    %4680 = vmatpush2.bf16.msra.mxu0 %v3144
    %4681 = vmatprep.subr.bf16.mxu0 %v3136
    %4682 = vmatpush2.bf16.msra.mxu0 %v3135
    %4683 = vmatprep.subr.bf16.mxu0 %v3127
    %4684 = vmatpush2.bf16.msra.mxu0 %v3126
    %4685 = vmatprep.mubr.bf16.mxu0 %v875
    %4686 = vmatmul.mubr.bf16.gmra.mxu0 %v874
    %v4687 = vpop.f32.mrf.mxu0
    %v4688 = vadd.f32 %v4647, %v4687
    %v4689 = vpop.f32.mrf.mxu0
    %v4690 = vadd.f32 %v4649, %v4689
    %v4691 = vpop.f32.mrf.mxu0
    %v4692 = vpop.f32.mrf.mxu0
    %4693 = vdwg.mxu0
    %4694 = vmatprep.subr.bf16.mxu0 %v3262
    %4695 = vmatpush1.bf16.msra.mxu0 %v3261
    %4696 = vmatprep.subr.bf16.mxu0 %v3253
    %4697 = vmatpush1.bf16.msra.mxu0 %v3252
    %4698 = vmatprep.subr.bf16.mxu0 %v3244
    %4699 = vmatpush1.bf16.msra.mxu0 %v3243
    %4700 = vmatprep.subr.bf16.mxu0 %v3235
    %4701 = vmatpush1.bf16.msra.mxu0 %v3234
    %4702 = vmatprep.subr.bf16.mxu0 %v3226
    %4703 = vmatpush1.bf16.msra.mxu0 %v3225
    %4704 = vmatprep.subr.bf16.mxu0 %v3217
    %4705 = vmatpush1.bf16.msra.mxu0 %v3216
    %4706 = vmatprep.subr.bf16.mxu0 %v3208
    %4707 = vmatpush1.bf16.msra.mxu0 %v3207
    %4708 = vmatprep.subr.bf16.mxu0 %v3199
    %4709 = vmatpush1.bf16.msra.mxu0 %v3198
    %4710 = vmatprep.subr.bf16.mxu0 %v3334
    %4711 = vmatpush2.bf16.msra.mxu0 %v3333
    %4712 = vmatprep.subr.bf16.mxu0 %v3325
    %4713 = vmatpush2.bf16.msra.mxu0 %v3324
    %4714 = vmatprep.subr.bf16.mxu0 %v3316
    %4715 = vmatpush2.bf16.msra.mxu0 %v3315
    %4716 = vmatprep.subr.bf16.mxu0 %v3307
    %4717 = vmatpush2.bf16.msra.mxu0 %v3306
    %4718 = vmatprep.subr.bf16.mxu0 %v3298
    %4719 = vmatpush2.bf16.msra.mxu0 %v3297
    %4720 = vmatprep.subr.bf16.mxu0 %v3289
    %4721 = vmatpush2.bf16.msra.mxu0 %v3288
    %4722 = vmatprep.subr.bf16.mxu0 %v3280
    %4723 = vmatpush2.bf16.msra.mxu0 %v3279
    %4724 = vmatprep.subr.bf16.mxu0 %v3271
    %4725 = vmatpush2.bf16.msra.mxu0 %v3270
    %4726 = vmatprep.mubr.bf16.mxu0 %v877
    %4727 = vmatmul.mubr.bf16.gmra.mxu0 %v876
    %v4728 = vpop.f32.mrf.mxu0
    %v4729 = vadd.f32 %v4688, %v4728
    %v4730 = vpop.f32.mrf.mxu0
    %v4731 = vadd.f32 %v4690, %v4730
    %v4732 = vpop.f32.mrf.mxu0
    %v4733 = vpop.f32.mrf.mxu0
    %4734 = vdwg.mxu0
    %4735 = vmatprep.subr.bf16.mxu0 %v3406
    %4736 = vmatpush1.bf16.msra.mxu0 %v3405
    %4737 = vmatprep.subr.bf16.mxu0 %v3397
    %4738 = vmatpush1.bf16.msra.mxu0 %v3396
    %4739 = vmatprep.subr.bf16.mxu0 %v3388
    %4740 = vmatpush1.bf16.msra.mxu0 %v3387
    %4741 = vmatprep.subr.bf16.mxu0 %v3379
    %4742 = vmatpush1.bf16.msra.mxu0 %v3378
    %4743 = vmatprep.subr.bf16.mxu0 %v3370
    %4744 = vmatpush1.bf16.msra.mxu0 %v3369
    %4745 = vmatprep.subr.bf16.mxu0 %v3361
    %4746 = vmatpush1.bf16.msra.mxu0 %v3360
    %4747 = vmatprep.subr.bf16.mxu0 %v3352
    %4748 = vmatpush1.bf16.msra.mxu0 %v3351
    %4749 = vmatprep.subr.bf16.mxu0 %v3343
    %4750 = vmatpush1.bf16.msra.mxu0 %v3342
    %4751 = vmatprep.subr.bf16.mxu0 %v3478
    %4752 = vmatpush2.bf16.msra.mxu0 %v3477
    %4753 = vmatprep.subr.bf16.mxu0 %v3469
    %4754 = vmatpush2.bf16.msra.mxu0 %v3468
    %4755 = vmatprep.subr.bf16.mxu0 %v3460
    %4756 = vmatpush2.bf16.msra.mxu0 %v3459
    %4757 = vmatprep.subr.bf16.mxu0 %v3451
    %4758 = vmatpush2.bf16.msra.mxu0 %v3450
    %4759 = vmatprep.subr.bf16.mxu0 %v3442
    %4760 = vmatpush2.bf16.msra.mxu0 %v3441
    %4761 = vmatprep.subr.bf16.mxu0 %v3433
    %4762 = vmatpush2.bf16.msra.mxu0 %v3432
    %4763 = vmatprep.subr.bf16.mxu0 %v3424
    %4764 = vmatpush2.bf16.msra.mxu0 %v3423
    %4765 = vmatprep.subr.bf16.mxu0 %v3415
    %4766 = vmatpush2.bf16.msra.mxu0 %v3414
    %4767 = vmatprep.mubr.bf16.mxu0 %v879
    %4768 = vmatmul.mubr.bf16.gmra.mxu0 %v878
    %v4769 = vpop.f32.mrf.mxu0
    %v4770 = vadd.f32 %v4729, %v4769
    %v4771 = vpop.f32.mrf.mxu0
    %v4772 = vadd.f32 %v4731, %v4771
    %v4773 = vpop.f32.mrf.mxu0
    %v4774 = vpop.f32.mrf.mxu0
    %4775 = vdwg.mxu0
    %4776 = vmatprep.subr.bf16.mxu0 %v3550
    %4777 = vmatpush1.bf16.msra.mxu0 %v3549
    %4778 = vmatprep.subr.bf16.mxu0 %v3541
    %4779 = vmatpush1.bf16.msra.mxu0 %v3540
    %4780 = vmatprep.subr.bf16.mxu0 %v3532
    %4781 = vmatpush1.bf16.msra.mxu0 %v3531
    %4782 = vmatprep.subr.bf16.mxu0 %v3523
    %4783 = vmatpush1.bf16.msra.mxu0 %v3522
    %4784 = vmatprep.subr.bf16.mxu0 %v3514
    %4785 = vmatpush1.bf16.msra.mxu0 %v3513
    %4786 = vmatprep.subr.bf16.mxu0 %v3505
    %4787 = vmatpush1.bf16.msra.mxu0 %v3504
    %4788 = vmatprep.subr.bf16.mxu0 %v3496
    %4789 = vmatpush1.bf16.msra.mxu0 %v3495
    %4790 = vmatprep.subr.bf16.mxu0 %v3487
    %4791 = vmatpush1.bf16.msra.mxu0 %v3486
    %4792 = vmatprep.subr.bf16.mxu0 0
    %4793 = vmatpush2.bf16.msra.mxu0 0
    %4794 = vmatprep.subr.bf16.mxu0 0
    %4795 = vmatpush2.bf16.msra.mxu0 0
    %4796 = vmatprep.subr.bf16.mxu0 0
    %4797 = vmatpush2.bf16.msra.mxu0 0
    %4798 = vmatprep.subr.bf16.mxu0 0
    %4799 = vmatpush2.bf16.msra.mxu0 0
    %4800 = vmatprep.subr.bf16.mxu0 0
    %4801 = vmatpush2.bf16.msra.mxu0 0
    %4802 = vmatprep.subr.bf16.mxu0 0
    %4803 = vmatpush2.bf16.msra.mxu0 0
    %4804 = vmatprep.subr.bf16.mxu0 0
    %4805 = vmatpush2.bf16.msra.mxu0 0
    %4806 = vmatprep.subr.bf16.mxu0 0
    %4807 = vmatpush2.bf16.msra.mxu0 0
    %4808 = vmatprep.mubr.bf16.mxu0 0
    %4809 = vmatmul.mubr.bf16.gmra.mxu0 %v880
    %v4810 = vpop.f32.mrf.mxu0
    %v4811 = vadd.f32 %v4770, %v4810
    %v4812 = vpop.f32.mrf.mxu0
    %v4813 = vadd.f32 %v4772, %v4812
    %v4814 = vpop.f32.mrf.mxu0
    %v4815 = vpop.f32.mrf.mxu0
    %4816 = vdwg.mxu0
    %4817 = vmatprep.subr.bf16.mxu0 %v2976
    %4818 = vmatpush1.bf16.msra.mxu0 %v2975
    %4819 = vmatprep.subr.bf16.mxu0 %v2967
    %4820 = vmatpush1.bf16.msra.mxu0 %v2966
    %4821 = vmatprep.subr.bf16.mxu0 %v2958
    %4822 = vmatpush1.bf16.msra.mxu0 %v2957
    %4823 = vmatprep.subr.bf16.mxu0 %v2949
    %4824 = vmatpush1.bf16.msra.mxu0 %v2948
    %4825 = vmatprep.subr.bf16.mxu0 %v2940
    %4826 = vmatpush1.bf16.msra.mxu0 %v2939
    %4827 = vmatprep.subr.bf16.mxu0 %v2931
    %4828 = vmatpush1.bf16.msra.mxu0 %v2930
    %4829 = vmatprep.subr.bf16.mxu0 %v2922
    %4830 = vmatpush1.bf16.msra.mxu0 %v2921
    %4831 = vmatprep.subr.bf16.mxu0 %v2913
    %4832 = vmatpush1.bf16.msra.mxu0 %v2912
    %4833 = vmatprep.subr.bf16.mxu0 %v3048
    %4834 = vmatpush2.bf16.msra.mxu0 %v3047
    %4835 = vmatprep.subr.bf16.mxu0 %v3039
    %4836 = vmatpush2.bf16.msra.mxu0 %v3038
    %4837 = vmatprep.subr.bf16.mxu0 %v3030
    %4838 = vmatpush2.bf16.msra.mxu0 %v3029
    %4839 = vmatprep.subr.bf16.mxu0 %v3021
    %4840 = vmatpush2.bf16.msra.mxu0 %v3020
    %4841 = vmatprep.subr.bf16.mxu0 %v3012
    %4842 = vmatpush2.bf16.msra.mxu0 %v3011
    %4843 = vmatprep.subr.bf16.mxu0 %v3003
    %4844 = vmatpush2.bf16.msra.mxu0 %v3002
    %4845 = vmatprep.subr.bf16.mxu0 %v2994
    %4846 = vmatpush2.bf16.msra.mxu0 %v2993
    %4847 = vmatprep.subr.bf16.mxu0 %v2985
    %4848 = vmatpush2.bf16.msra.mxu0 %v2984
    %4849 = vmatprep.mubr.bf16.mxu0 %v873
    %4850 = vmatmul.mubr.bf16.gmra.mxu0 %v872
    %v4851 = vpop.f32.mrf.mxu0
    %v4852 = vadd.f32 %v840, %v4851
    %v4853 = vpop.f32.mrf.mxu0
    %v4854 = vadd.f32 %v844, %v4853
    %v4855 = vpop.f32.mrf.mxu0
    %v4856 = vpop.f32.mrf.mxu0
    %4857 = vdwg.mxu0
    %4858 = vmatprep.subr.bf16.mxu0 %v3120
    %4859 = vmatpush1.bf16.msra.mxu0 %v3119
    %4860 = vmatprep.subr.bf16.mxu0 %v3111
    %4861 = vmatpush1.bf16.msra.mxu0 %v3110
    %4862 = vmatprep.subr.bf16.mxu0 %v3102
    %4863 = vmatpush1.bf16.msra.mxu0 %v3101
    %4864 = vmatprep.subr.bf16.mxu0 %v3093
    %4865 = vmatpush1.bf16.msra.mxu0 %v3092
    %4866 = vmatprep.subr.bf16.mxu0 %v3084
    %4867 = vmatpush1.bf16.msra.mxu0 %v3083
    %4868 = vmatprep.subr.bf16.mxu0 %v3075
    %4869 = vmatpush1.bf16.msra.mxu0 %v3074
    %4870 = vmatprep.subr.bf16.mxu0 %v3066
    %4871 = vmatpush1.bf16.msra.mxu0 %v3065
    %4872 = vmatprep.subr.bf16.mxu0 %v3057
    %4873 = vmatpush1.bf16.msra.mxu0 %v3056
    %4874 = vmatprep.subr.bf16.mxu0 %v3192
    %4875 = vmatpush2.bf16.msra.mxu0 %v3191
    %4876 = vmatprep.subr.bf16.mxu0 %v3183
    %4877 = vmatpush2.bf16.msra.mxu0 %v3182
    %4878 = vmatprep.subr.bf16.mxu0 %v3174
    %4879 = vmatpush2.bf16.msra.mxu0 %v3173
    %4880 = vmatprep.subr.bf16.mxu0 %v3165
    %4881 = vmatpush2.bf16.msra.mxu0 %v3164
    %4882 = vmatprep.subr.bf16.mxu0 %v3156
    %4883 = vmatpush2.bf16.msra.mxu0 %v3155
    %4884 = vmatprep.subr.bf16.mxu0 %v3147
    %4885 = vmatpush2.bf16.msra.mxu0 %v3146
    %4886 = vmatprep.subr.bf16.mxu0 %v3138
    %4887 = vmatpush2.bf16.msra.mxu0 %v3137
    %4888 = vmatprep.subr.bf16.mxu0 %v3129
    %4889 = vmatpush2.bf16.msra.mxu0 %v3128
    %4890 = vmatprep.mubr.bf16.mxu0 %v875
    %4891 = vmatmul.mubr.bf16.gmra.mxu0 %v874
    %v4892 = vpop.f32.mrf.mxu0
    %v4893 = vadd.f32 %v4852, %v4892
    %v4894 = vpop.f32.mrf.mxu0
    %v4895 = vadd.f32 %v4854, %v4894
    %v4896 = vpop.f32.mrf.mxu0
    %v4897 = vpop.f32.mrf.mxu0
    %4898 = vdwg.mxu0
    %4899 = vmatprep.subr.bf16.mxu0 %v3264
    %4900 = vmatpush1.bf16.msra.mxu0 %v3263
    %4901 = vmatprep.subr.bf16.mxu0 %v3255
    %4902 = vmatpush1.bf16.msra.mxu0 %v3254
    %4903 = vmatprep.subr.bf16.mxu0 %v3246
    %4904 = vmatpush1.bf16.msra.mxu0 %v3245
    %4905 = vmatprep.subr.bf16.mxu0 %v3237
    %4906 = vmatpush1.bf16.msra.mxu0 %v3236
    %4907 = vmatprep.subr.bf16.mxu0 %v3228
    %4908 = vmatpush1.bf16.msra.mxu0 %v3227
    %4909 = vmatprep.subr.bf16.mxu0 %v3219
    %4910 = vmatpush1.bf16.msra.mxu0 %v3218
    %4911 = vmatprep.subr.bf16.mxu0 %v3210
    %4912 = vmatpush1.bf16.msra.mxu0 %v3209
    %4913 = vmatprep.subr.bf16.mxu0 %v3201
    %4914 = vmatpush1.bf16.msra.mxu0 %v3200
    %4915 = vmatprep.subr.bf16.mxu0 %v3336
    %4916 = vmatpush2.bf16.msra.mxu0 %v3335
    %4917 = vmatprep.subr.bf16.mxu0 %v3327
    %4918 = vmatpush2.bf16.msra.mxu0 %v3326
    %4919 = vmatprep.subr.bf16.mxu0 %v3318
    %4920 = vmatpush2.bf16.msra.mxu0 %v3317
    %4921 = vmatprep.subr.bf16.mxu0 %v3309
    %4922 = vmatpush2.bf16.msra.mxu0 %v3308
    %4923 = vmatprep.subr.bf16.mxu0 %v3300
    %4924 = vmatpush2.bf16.msra.mxu0 %v3299
    %4925 = vmatprep.subr.bf16.mxu0 %v3291
    %4926 = vmatpush2.bf16.msra.mxu0 %v3290
    %4927 = vmatprep.subr.bf16.mxu0 %v3282
    %4928 = vmatpush2.bf16.msra.mxu0 %v3281
    %4929 = vmatprep.subr.bf16.mxu0 %v3273
    %4930 = vmatpush2.bf16.msra.mxu0 %v3272
    %4931 = vmatprep.mubr.bf16.mxu0 %v877
    %4932 = vmatmul.mubr.bf16.gmra.mxu0 %v876
    %v4933 = vpop.f32.mrf.mxu0
    %v4934 = vadd.f32 %v4893, %v4933
    %v4935 = vpop.f32.mrf.mxu0
    %v4936 = vadd.f32 %v4895, %v4935
    %v4937 = vpop.f32.mrf.mxu0
    %v4938 = vpop.f32.mrf.mxu0
    %4939 = vdwg.mxu0
    %4940 = vmatprep.subr.bf16.mxu0 %v3408
    %4941 = vmatpush1.bf16.msra.mxu0 %v3407
    %4942 = vmatprep.subr.bf16.mxu0 %v3399
    %4943 = vmatpush1.bf16.msra.mxu0 %v3398
    %4944 = vmatprep.subr.bf16.mxu0 %v3390
    %4945 = vmatpush1.bf16.msra.mxu0 %v3389
    %4946 = vmatprep.subr.bf16.mxu0 %v3381
    %4947 = vmatpush1.bf16.msra.mxu0 %v3380
    %4948 = vmatprep.subr.bf16.mxu0 %v3372
    %4949 = vmatpush1.bf16.msra.mxu0 %v3371
    %4950 = vmatprep.subr.bf16.mxu0 %v3363
    %4951 = vmatpush1.bf16.msra.mxu0 %v3362
    %4952 = vmatprep.subr.bf16.mxu0 %v3354
    %4953 = vmatpush1.bf16.msra.mxu0 %v3353
    %4954 = vmatprep.subr.bf16.mxu0 %v3345
    %4955 = vmatpush1.bf16.msra.mxu0 %v3344
    %4956 = vmatprep.subr.bf16.mxu0 %v3480
    %4957 = vmatpush2.bf16.msra.mxu0 %v3479
    %4958 = vmatprep.subr.bf16.mxu0 %v3471
    %4959 = vmatpush2.bf16.msra.mxu0 %v3470
    %4960 = vmatprep.subr.bf16.mxu0 %v3462
    %4961 = vmatpush2.bf16.msra.mxu0 %v3461
    %4962 = vmatprep.subr.bf16.mxu0 %v3453
    %4963 = vmatpush2.bf16.msra.mxu0 %v3452
    %4964 = vmatprep.subr.bf16.mxu0 %v3444
    %4965 = vmatpush2.bf16.msra.mxu0 %v3443
    %4966 = vmatprep.subr.bf16.mxu0 %v3435
    %4967 = vmatpush2.bf16.msra.mxu0 %v3434
    %4968 = vmatprep.subr.bf16.mxu0 %v3426
    %4969 = vmatpush2.bf16.msra.mxu0 %v3425
    %4970 = vmatprep.subr.bf16.mxu0 %v3417
    %4971 = vmatpush2.bf16.msra.mxu0 %v3416
    %4972 = vmatprep.mubr.bf16.mxu0 %v879
    %4973 = vmatmul.mubr.bf16.gmra.mxu0 %v878
    %v4974 = vpop.f32.mrf.mxu0
    %v4975 = vadd.f32 %v4934, %v4974
    %v4976 = vpop.f32.mrf.mxu0
    %v4977 = vadd.f32 %v4936, %v4976
    %v4978 = vpop.f32.mrf.mxu0
    %v4979 = vpop.f32.mrf.mxu0
    %4980 = vdwg.mxu0
    %4981 = vmatprep.subr.bf16.mxu0 %v3552
    %4982 = vmatpush1.bf16.msra.mxu0 %v3551
    %4983 = vmatprep.subr.bf16.mxu0 %v3543
    %4984 = vmatpush1.bf16.msra.mxu0 %v3542
    %4985 = vmatprep.subr.bf16.mxu0 %v3534
    %4986 = vmatpush1.bf16.msra.mxu0 %v3533
    %4987 = vmatprep.subr.bf16.mxu0 %v3525
    %4988 = vmatpush1.bf16.msra.mxu0 %v3524
    %4989 = vmatprep.subr.bf16.mxu0 %v3516
    %4990 = vmatpush1.bf16.msra.mxu0 %v3515
    %4991 = vmatprep.subr.bf16.mxu0 %v3507
    %4992 = vmatpush1.bf16.msra.mxu0 %v3506
    %4993 = vmatprep.subr.bf16.mxu0 %v3498
    %4994 = vmatpush1.bf16.msra.mxu0 %v3497
    %4995 = vmatprep.subr.bf16.mxu0 %v3489
    %4996 = vmatpush1.bf16.msra.mxu0 %v3488
    %4997 = vmatprep.subr.bf16.mxu0 0
    %4998 = vmatpush2.bf16.msra.mxu0 0
    %4999 = vmatprep.subr.bf16.mxu0 0
    %5000 = vmatpush2.bf16.msra.mxu0 0
    %5001 = vmatprep.subr.bf16.mxu0 0
    %5002 = vmatpush2.bf16.msra.mxu0 0
    %5003 = vmatprep.subr.bf16.mxu0 0
    %5004 = vmatpush2.bf16.msra.mxu0 0
    %5005 = vmatprep.subr.bf16.mxu0 0
    %5006 = vmatpush2.bf16.msra.mxu0 0
    %5007 = vmatprep.subr.bf16.mxu0 0
    %5008 = vmatpush2.bf16.msra.mxu0 0
    %5009 = vmatprep.subr.bf16.mxu0 0
    %5010 = vmatpush2.bf16.msra.mxu0 0
    %5011 = vmatprep.subr.bf16.mxu0 0
    %5012 = vmatpush2.bf16.msra.mxu0 0
    %5013 = vmatprep.mubr.bf16.mxu0 0
    %5014 = vmatmul.mubr.bf16.gmra.mxu0 %v880
    %v5015 = vpop.f32.mrf.mxu0
    %v5016 = vadd.f32 %v4975, %v5015
    %v5017 = vpop.f32.mrf.mxu0
    %v5018 = vadd.f32 %v4977, %v5017
    %v5019 = vpop.f32.mrf.mxu0
    %v5020 = vpop.f32.mrf.mxu0
    %5021 = vdwg.mxu0
    %5022 = vmatprep.subr.bf16.mxu0 0
    %5023 = vmatpush1.bf16.msra.mxu0 %v2977
    %5024 = vmatprep.subr.bf16.mxu0 0
    %5025 = vmatpush1.bf16.msra.mxu0 %v2968
    %5026 = vmatprep.subr.bf16.mxu0 0
    %5027 = vmatpush1.bf16.msra.mxu0 %v2959
    %5028 = vmatprep.subr.bf16.mxu0 0
    %5029 = vmatpush1.bf16.msra.mxu0 %v2950
    %5030 = vmatprep.subr.bf16.mxu0 0
    %5031 = vmatpush1.bf16.msra.mxu0 %v2941
    %5032 = vmatprep.subr.bf16.mxu0 0
    %5033 = vmatpush1.bf16.msra.mxu0 %v2932
    %5034 = vmatprep.subr.bf16.mxu0 0
    %5035 = vmatpush1.bf16.msra.mxu0 %v2923
    %5036 = vmatprep.subr.bf16.mxu0 0
    %5037 = vmatpush1.bf16.msra.mxu0 %v2914
    %5038 = vmatprep.subr.bf16.mxu0 0
    %5039 = vmatpush2.bf16.msra.mxu0 %v3049
    %5040 = vmatprep.subr.bf16.mxu0 0
    %5041 = vmatpush2.bf16.msra.mxu0 %v3040
    %5042 = vmatprep.subr.bf16.mxu0 0
    %5043 = vmatpush2.bf16.msra.mxu0 %v3031
    %5044 = vmatprep.subr.bf16.mxu0 0
    %5045 = vmatpush2.bf16.msra.mxu0 %v3022
    %5046 = vmatprep.subr.bf16.mxu0 0
    %5047 = vmatpush2.bf16.msra.mxu0 %v3013
    %5048 = vmatprep.subr.bf16.mxu0 0
    %5049 = vmatpush2.bf16.msra.mxu0 %v3004
    %5050 = vmatprep.subr.bf16.mxu0 0
    %5051 = vmatpush2.bf16.msra.mxu0 %v2995
    %5052 = vmatprep.subr.bf16.mxu0 0
    %5053 = vmatpush2.bf16.msra.mxu0 %v2986
    %5054 = vmatprep.mubr.bf16.mxu0 %v873
    %5055 = vmatmul.mubr.bf16.gmra.mxu0 %v872
    %v5056 = vpop.f32.mrf.mxu0
    %v5057 = vadd.f32 %v848, %v5056
    %v5058 = vpop.f32.mrf.mxu0
    %v5059 = vpop.f32.mrf.mxu0
    %v5060 = vpop.f32.mrf.mxu0
    %5061 = vdwg.mxu0
    %5062 = vmatprep.subr.bf16.mxu0 0
    %5063 = vmatpush1.bf16.msra.mxu0 %v3121
    %5064 = vmatprep.subr.bf16.mxu0 0
    %5065 = vmatpush1.bf16.msra.mxu0 %v3112
    %5066 = vmatprep.subr.bf16.mxu0 0
    %5067 = vmatpush1.bf16.msra.mxu0 %v3103
    %5068 = vmatprep.subr.bf16.mxu0 0
    %5069 = vmatpush1.bf16.msra.mxu0 %v3094
    %5070 = vmatprep.subr.bf16.mxu0 0
    %5071 = vmatpush1.bf16.msra.mxu0 %v3085
    %5072 = vmatprep.subr.bf16.mxu0 0
    %5073 = vmatpush1.bf16.msra.mxu0 %v3076
    %5074 = vmatprep.subr.bf16.mxu0 0
    %5075 = vmatpush1.bf16.msra.mxu0 %v3067
    %5076 = vmatprep.subr.bf16.mxu0 0
    %5077 = vmatpush1.bf16.msra.mxu0 %v3058
    %5078 = vmatprep.subr.bf16.mxu0 0
    %5079 = vmatpush2.bf16.msra.mxu0 %v3193
    %5080 = vmatprep.subr.bf16.mxu0 0
    %5081 = vmatpush2.bf16.msra.mxu0 %v3184
    %5082 = vmatprep.subr.bf16.mxu0 0
    %5083 = vmatpush2.bf16.msra.mxu0 %v3175
    %5084 = vmatprep.subr.bf16.mxu0 0
    %5085 = vmatpush2.bf16.msra.mxu0 %v3166
    %5086 = vmatprep.subr.bf16.mxu0 0
    %5087 = vmatpush2.bf16.msra.mxu0 %v3157
    %5088 = vmatprep.subr.bf16.mxu0 0
    %5089 = vmatpush2.bf16.msra.mxu0 %v3148
    %5090 = vmatprep.subr.bf16.mxu0 0
    %5091 = vmatpush2.bf16.msra.mxu0 %v3139
    %5092 = vmatprep.subr.bf16.mxu0 0
    %5093 = vmatpush2.bf16.msra.mxu0 %v3130
    %5094 = vmatprep.mubr.bf16.mxu0 %v875
    %5095 = vmatmul.mubr.bf16.gmra.mxu0 %v874
    %v5096 = vpop.f32.mrf.mxu0
    %v5097 = vadd.f32 %v5057, %v5096
    %v5098 = vpop.f32.mrf.mxu0
    %v5099 = vpop.f32.mrf.mxu0
    %v5100 = vpop.f32.mrf.mxu0
    %5101 = vdwg.mxu0
    %5102 = vmatprep.subr.bf16.mxu0 0
    %5103 = vmatpush1.bf16.msra.mxu0 %v3265
    %5104 = vmatprep.subr.bf16.mxu0 0
    %5105 = vmatpush1.bf16.msra.mxu0 %v3256
    %5106 = vmatprep.subr.bf16.mxu0 0
    %5107 = vmatpush1.bf16.msra.mxu0 %v3247
    %5108 = vmatprep.subr.bf16.mxu0 0
    %5109 = vmatpush1.bf16.msra.mxu0 %v3238
    %5110 = vmatprep.subr.bf16.mxu0 0
    %5111 = vmatpush1.bf16.msra.mxu0 %v3229
    %5112 = vmatprep.subr.bf16.mxu0 0
    %5113 = vmatpush1.bf16.msra.mxu0 %v3220
    %5114 = vmatprep.subr.bf16.mxu0 0
    %5115 = vmatpush1.bf16.msra.mxu0 %v3211
    %5116 = vmatprep.subr.bf16.mxu0 0
    %5117 = vmatpush1.bf16.msra.mxu0 %v3202
    %5118 = vmatprep.subr.bf16.mxu0 0
    %5119 = vmatpush2.bf16.msra.mxu0 %v3337
    %5120 = vmatprep.subr.bf16.mxu0 0
    %5121 = vmatpush2.bf16.msra.mxu0 %v3328
    %5122 = vmatprep.subr.bf16.mxu0 0
    %5123 = vmatpush2.bf16.msra.mxu0 %v3319
    %5124 = vmatprep.subr.bf16.mxu0 0
    %5125 = vmatpush2.bf16.msra.mxu0 %v3310
    %5126 = vmatprep.subr.bf16.mxu0 0
    %5127 = vmatpush2.bf16.msra.mxu0 %v3301
    %5128 = vmatprep.subr.bf16.mxu0 0
    %5129 = vmatpush2.bf16.msra.mxu0 %v3292
    %5130 = vmatprep.subr.bf16.mxu0 0
    %5131 = vmatpush2.bf16.msra.mxu0 %v3283
    %5132 = vmatprep.subr.bf16.mxu0 0
    %5133 = vmatpush2.bf16.msra.mxu0 %v3274
    %5134 = vmatprep.mubr.bf16.mxu0 %v877
    %5135 = vmatmul.mubr.bf16.gmra.mxu0 %v876
    %v5136 = vpop.f32.mrf.mxu0
    %v5137 = vadd.f32 %v5097, %v5136
    %v5138 = vpop.f32.mrf.mxu0
    %v5139 = vpop.f32.mrf.mxu0
    %v5140 = vpop.f32.mrf.mxu0
    %5141 = vdwg.mxu0
    %5142 = vmatprep.subr.bf16.mxu0 0
    %5143 = vmatpush1.bf16.msra.mxu0 %v3409
    %5144 = vmatprep.subr.bf16.mxu0 0
    %5145 = vmatpush1.bf16.msra.mxu0 %v3400
    %5146 = vmatprep.subr.bf16.mxu0 0
    %5147 = vmatpush1.bf16.msra.mxu0 %v3391
    %5148 = vmatprep.subr.bf16.mxu0 0
    %5149 = vmatpush1.bf16.msra.mxu0 %v3382
    %5150 = vmatprep.subr.bf16.mxu0 0
    %5151 = vmatpush1.bf16.msra.mxu0 %v3373
    %5152 = vmatprep.subr.bf16.mxu0 0
    %5153 = vmatpush1.bf16.msra.mxu0 %v3364
    %5154 = vmatprep.subr.bf16.mxu0 0
    %5155 = vmatpush1.bf16.msra.mxu0 %v3355
    %5156 = vmatprep.subr.bf16.mxu0 0
    %5157 = vmatpush1.bf16.msra.mxu0 %v3346
    %5158 = vmatprep.subr.bf16.mxu0 0
    %5159 = vmatpush2.bf16.msra.mxu0 %v3481
    %5160 = vmatprep.subr.bf16.mxu0 0
    %5161 = vmatpush2.bf16.msra.mxu0 %v3472
    %5162 = vmatprep.subr.bf16.mxu0 0
    %5163 = vmatpush2.bf16.msra.mxu0 %v3463
    %5164 = vmatprep.subr.bf16.mxu0 0
    %5165 = vmatpush2.bf16.msra.mxu0 %v3454
    %5166 = vmatprep.subr.bf16.mxu0 0
    %5167 = vmatpush2.bf16.msra.mxu0 %v3445
    %5168 = vmatprep.subr.bf16.mxu0 0
    %5169 = vmatpush2.bf16.msra.mxu0 %v3436
    %5170 = vmatprep.subr.bf16.mxu0 0
    %5171 = vmatpush2.bf16.msra.mxu0 %v3427
    %5172 = vmatprep.subr.bf16.mxu0 0
    %5173 = vmatpush2.bf16.msra.mxu0 %v3418
    %5174 = vmatprep.mubr.bf16.mxu0 %v879
    %5175 = vmatmul.mubr.bf16.gmra.mxu0 %v878
    %v5176 = vpop.f32.mrf.mxu0
    %v5177 = vadd.f32 %v5137, %v5176
    %v5178 = vpop.f32.mrf.mxu0
    %v5179 = vpop.f32.mrf.mxu0
    %v5180 = vpop.f32.mrf.mxu0
    %5181 = vdwg.mxu0
    %5182 = vmatprep.subr.bf16.mxu0 0
    %5183 = vmatpush1.bf16.msra.mxu0 %v3553
    %5184 = vmatprep.subr.bf16.mxu0 0
    %5185 = vmatpush1.bf16.msra.mxu0 %v3544
    %5186 = vmatprep.subr.bf16.mxu0 0
    %5187 = vmatpush1.bf16.msra.mxu0 %v3535
    %5188 = vmatprep.subr.bf16.mxu0 0
    %5189 = vmatpush1.bf16.msra.mxu0 %v3526
    %5190 = vmatprep.subr.bf16.mxu0 0
    %5191 = vmatpush1.bf16.msra.mxu0 %v3517
    %5192 = vmatprep.subr.bf16.mxu0 0
    %5193 = vmatpush1.bf16.msra.mxu0 %v3508
    %5194 = vmatprep.subr.bf16.mxu0 0
    %5195 = vmatpush1.bf16.msra.mxu0 %v3499
    %5196 = vmatprep.subr.bf16.mxu0 0
    %5197 = vmatpush1.bf16.msra.mxu0 %v3490
    %5198 = vmatprep.subr.bf16.mxu0 0
    %5199 = vmatpush2.bf16.msra.mxu0 0
    %5200 = vmatprep.subr.bf16.mxu0 0
    %5201 = vmatpush2.bf16.msra.mxu0 0
    %5202 = vmatprep.subr.bf16.mxu0 0
    %5203 = vmatpush2.bf16.msra.mxu0 0
    %5204 = vmatprep.subr.bf16.mxu0 0
    %5205 = vmatpush2.bf16.msra.mxu0 0
    %5206 = vmatprep.subr.bf16.mxu0 0
    %5207 = vmatpush2.bf16.msra.mxu0 0
    %5208 = vmatprep.subr.bf16.mxu0 0
    %5209 = vmatpush2.bf16.msra.mxu0 0
    %5210 = vmatprep.subr.bf16.mxu0 0
    %5211 = vmatpush2.bf16.msra.mxu0 0
    %5212 = vmatprep.subr.bf16.mxu0 0
    %5213 = vmatpush2.bf16.msra.mxu0 0
    %5214 = vmatprep.mubr.bf16.mxu0 0
    %5215 = vmatmul.mubr.bf16.gmra.mxu0 %v880
    %v5216 = vpop.f32.mrf.mxu0
    %v5217 = vadd.f32 %v5177, %v5216
    %v5218 = vpop.f32.mrf.mxu0
    %v5219 = vpop.f32.mrf.mxu0
    %v5220 = vpop.f32.mrf.mxu0
    %5221 = vdwg.mxu0
    %v5222 = vmax.f32 %v4401, 0.0
    %v5223 = vmax.f32 %v4403, 0.0
    %v5224 = vmax.f32 %v4606, 0.0
    %v5225 = vmax.f32 %v4608, 0.0
    %v5226 = vmax.f32 %v4811, 0.0
    %v5227 = vmax.f32 %v4813, 0.0
    %v5228 = vmax.f32 %v5016, 0.0
    %v5229 = vmax.f32 %v5018, 0.0
    %v5230 = vmax.f32 %v5217, 0.0
    %v5231 = vpack.c.bf16 %v5222, %v5222
    %v5232 = vpack.c.bf16 %v5223, %v5223
    %v5233 = vpack.c.bf16 %v5224, %v5224
    %v5234 = vpack.c.bf16 %v5225, %v5225
    %v5235 = vpack.c.bf16 %v5226, %v5226
    %v5236 = vpack.c.bf16 %v5227, %v5227
    %v5237 = vpack.c.bf16 %v5228, %v5228
    %v5238 = vpack.c.bf16 %v5229, %v5229
    %v5239 = vpack.c.bf16 %v5230, %v5230
    %v5240 = vld [vmem:[#allocation8] sm:$0xf]
    %v5241 = vld [vmem:[#allocation8 + $0x4] sm:$0xf]
    %v5242 = vld [vmem:[#allocation8 + $0x8] sm:$0xf]
    %v5243 = vld [vmem:[#allocation8 + $0xc] sm:$0xf]
    %v5244 = vld [vmem:[#allocation8 + $0x10] sm:$0xf]
    %v5245 = vld [vmem:[#allocation8 + $0x14] sm:$0xf]
    %v5246 = vld [vmem:[#allocation8 + $0x18] sm:$0xf]
    %v5247 = vld [vmem:[#allocation8 + $0x1c] sm:$0xf]
    %v5248 = vld [vmem:[#allocation8 + $0x20] sm:$0xf]
    %v5249 = vld [vmem:[#allocation8 + $0x24] sm:$0xf]
    %v5250 = vld [vmem:[#allocation8 + $0x28] sm:$0xf]
    %v5251 = vld [vmem:[#allocation8 + $0x2c] sm:$0xf]
    %v5252 = vld [vmem:[#allocation8 + $0x30] sm:$0xf]
    %v5253 = vld [vmem:[#allocation8 + $0x34] sm:$0xf]
    %v5254 = vld [vmem:[#allocation8 + $0x38] sm:$0xf]
    %v5255 = vld [vmem:[#allocation8 + $0x3c] sm:$0xf]
    %v5256 = vld [vmem:[#allocation8 + $0x40] sm:$0xf]
    %v5257 = vld [vmem:[#allocation8 + $0x44] sm:$0xf]
    %v5258 = vld [vmem:[#allocation8 + $0x48] sm:$0xf]
    %v5259 = vld [vmem:[#allocation8 + $0x4c] sm:$0xf]
    %v5260 = vld [vmem:[#allocation8 + $0x50] sm:$0xf]
    %v5261 = vld [vmem:[#allocation8 + $0x54] sm:$0xf]
    %v5262 = vld [vmem:[#allocation8 + $0x58] sm:$0xf]
    %v5263 = vld [vmem:[#allocation8 + $0x5c] sm:$0xf]
    %v5264 = vld [vmem:[#allocation8 + $0x60] sm:$0xf]
    %v5265 = vld [vmem:[#allocation8 + $0x64] sm:$0xf]
    %v5266 = vld [vmem:[#allocation8 + $0x68] sm:$0xf]
    %v5267 = vld [vmem:[#allocation8 + $0x6c] sm:$0xf]
    %v5268 = vld [vmem:[#allocation8 + $0x70] sm:$0xf]
    %v5269 = vld [vmem:[#allocation8 + $0x74] sm:$0xf]
    %v5270 = vld [vmem:[#allocation8 + $0x78] sm:$0xf]
    %v5271 = vld [vmem:[#allocation8 + $0x7c] sm:$0xf]
    %v5272 = vld [vmem:[#allocation8 + $0x80] sm:$0xf]
    %v5273 = vld [vmem:[#allocation8 + $0x84] sm:$0xf]
    %v5274 = vld [vmem:[#allocation8 + $0x88] sm:$0xf]
    %v5275 = vld [vmem:[#allocation8 + $0x8c] sm:$0xf]
    %v5276 = vld [vmem:[#allocation8 + $0x90] sm:$0xf]
    %v5277 = vld [vmem:[#allocation8 + $0x94] sm:$0xf]
    %v5278 = vld [vmem:[#allocation8 + $0x98] sm:$0xf]
    %v5279 = vld [vmem:[#allocation8 + $0x9c] sm:$0xf]
    %v5280 = vld [vmem:[#allocation8 + $0xa0] sm:$0xf]
    %v5281 = vld [vmem:[#allocation8 + $0xa4] sm:$0xf]
    %v5282 = vld [vmem:[#allocation8 + $0xa8] sm:$0xf]
    %v5283 = vld [vmem:[#allocation8 + $0xac] sm:$0xf]
    %v5284 = vld [vmem:[#allocation8 + $0xb0] sm:$0xf]
    %v5285 = vld [vmem:[#allocation8 + $0xb4] sm:$0xf]
    %v5286 = vld [vmem:[#allocation8 + $0xb8] sm:$0xf]
    %v5287 = vld [vmem:[#allocation8 + $0xbc] sm:$0xf]
    %v5288 = vld [vmem:[#allocation8 + $0xc0] sm:$0xf]
    %v5289 = vld [vmem:[#allocation8 + $0xc4] sm:$0xf]
    %v5290 = vld [vmem:[#allocation8 + $0xc8] sm:$0xf]
    %v5291 = vld [vmem:[#allocation8 + $0xcc] sm:$0xf]
    %v5292 = vld [vmem:[#allocation8 + $0xd0] sm:$0xf]
    %v5293 = vld [vmem:[#allocation8 + $0xd4] sm:$0xf]
    %v5294 = vld [vmem:[#allocation8 + $0xd8] sm:$0xf]
    %v5295 = vld [vmem:[#allocation8 + $0xdc] sm:$0xf]
    %v5296 = vld [vmem:[#allocation8 + $0xe0] sm:$0xf]
    %v5297 = vld [vmem:[#allocation8 + $0xe4] sm:$0xf]
    %v5298 = vld [vmem:[#allocation8 + $0xe8] sm:$0xf]
    %v5299 = vld [vmem:[#allocation8 + $0xec] sm:$0xf]
    %v5300 = vld [vmem:[#allocation8 + $0xf0] sm:$0xf]
    %v5301 = vld [vmem:[#allocation8 + $0xf4] sm:$0xf]
    %v5302 = vld [vmem:[#allocation8 + $0xf8] sm:$0xf]
    %v5303 = vld [vmem:[#allocation8 + $0xfc] sm:$0xf]
    %v5304 = vld [vmem:[#allocation8 + $0x100] sm:$0xf]
    %v5305 = vld [vmem:[#allocation8 + $0x104] sm:$0xf]
    %v5306 = vld [vmem:[#allocation8 + $0x108] sm:$0xf]
    %v5307 = vld [vmem:[#allocation8 + $0x10c] sm:$0xf]
    %v5308 = vld [vmem:[#allocation8 + $0x110] sm:$0xf]
    %v5309 = vld [vmem:[#allocation8 + $0x114] sm:$0xf]
    %v5310 = vld [vmem:[#allocation8 + $0x118] sm:$0xf]
    %v5311 = vld [vmem:[#allocation8 + $0x11c] sm:$0xf]
    %v5312 = vld [vmem:[#allocation8 + $0x120] sm:$0xf]
    %v5313 = vld [vmem:[#allocation8 + $0x124] sm:$0xf]
    %v5314 = vld [vmem:[#allocation8 + $0x128] sm:$0xf]
    %v5315 = vld [vmem:[#allocation8 + $0x12c] sm:$0xf]
    %v5316 = vld [vmem:[#allocation8 + $0x130] sm:$0xf]
    %v5317 = vld [vmem:[#allocation8 + $0x134] sm:$0xf]
    %v5318 = vld [vmem:[#allocation8 + $0x138] sm:$0xf]
    %v5319 = vld [vmem:[#allocation8 + $0x13c] sm:$0xf]
    %v5320 = vld [vmem:[#allocation8 + $0x140] sm:$0xf]
    %v5321 = vld [vmem:[#allocation8 + $0x144] sm:$0xf]
    %v5322 = vld [vmem:[#allocation8 + $0x148] sm:$0xf]
    %v5323 = vld [vmem:[#allocation8 + $0x14c] sm:$0xf]
    %v5324 = vld [vmem:[#allocation8 + $0x150] sm:$0xf]
    %v5325 = vld [vmem:[#allocation8 + $0x154] sm:$0xf]
    %v5326 = vld [vmem:[#allocation8 + $0x158] sm:$0xf]
    %v5327 = vld [vmem:[#allocation8 + $0x15c] sm:$0xf]
    %v5328 = vld [vmem:[#allocation8 + $0x160] sm:$0xf]
    %v5329 = vld [vmem:[#allocation8 + $0x164] sm:$0xf]
    %v5330 = vld [vmem:[#allocation8 + $0x168] sm:$0xf]
    %v5331 = vld [vmem:[#allocation8 + $0x16c] sm:$0xf]
    %v5332 = vld [vmem:[#allocation8 + $0x170] sm:$0xf]
    %v5333 = vld [vmem:[#allocation8 + $0x174] sm:$0xf]
    %v5334 = vld [vmem:[#allocation8 + $0x178] sm:$0xf]
    %v5335 = vld [vmem:[#allocation8 + $0x17c] sm:$0xf]
    %v5336 = vld [vmem:[#allocation8 + $0x180] sm:$0xf]
    %v5337 = vld [vmem:[#allocation8 + $0x184] sm:$0xf]
    %v5338 = vld [vmem:[#allocation8 + $0x188] sm:$0xf]
    %v5339 = vld [vmem:[#allocation8 + $0x18c] sm:$0xf]
    %v5340 = vld [vmem:[#allocation8 + $0x190] sm:$0xf]
    %v5341 = vld [vmem:[#allocation8 + $0x194] sm:$0xf]
    %v5342 = vld [vmem:[#allocation8 + $0x198] sm:$0xf]
    %v5343 = vld [vmem:[#allocation8 + $0x19c] sm:$0xf]
    %v5344 = vld [vmem:[#allocation8 + $0x1a0] sm:$0xf]
    %v5345 = vld [vmem:[#allocation8 + $0x1a4] sm:$0xf]
    %v5346 = vld [vmem:[#allocation8 + $0x1a8] sm:$0xf]
    %v5347 = vld [vmem:[#allocation8 + $0x1ac] sm:$0xf]
    %v5348 = vld [vmem:[#allocation8 + $0x1b0] sm:$0xf]
    %v5349 = vld [vmem:[#allocation8 + $0x1b4] sm:$0xf]
    %v5350 = vld [vmem:[#allocation8 + $0x1b8] sm:$0xf]
    %v5351 = vld [vmem:[#allocation8 + $0x1bc] sm:$0xf]
    %v5352 = vld [vmem:[#allocation8 + $0x1c0] sm:$0xf]
    %v5353 = vld [vmem:[#allocation8 + $0x1c4] sm:$0xf]
    %v5354 = vld [vmem:[#allocation8 + $0x1c8] sm:$0xf]
    %v5355 = vld [vmem:[#allocation8 + $0x1cc] sm:$0xf]
    %v5356 = vld [vmem:[#allocation8 + $0x1d0] sm:$0xf]
    %v5357 = vld [vmem:[#allocation8 + $0x1d4] sm:$0xf]
    %v5358 = vld [vmem:[#allocation8 + $0x1d8] sm:$0xf]
    %v5359 = vld [vmem:[#allocation8 + $0x1dc] sm:$0xf]
    %v5360 = vld [vmem:[#allocation8 + $0x1e0] sm:$0xf]
    %v5361 = vld [vmem:[#allocation8 + $0x1e4] sm:$0xf]
    %v5362 = vld [vmem:[#allocation8 + $0x1e8] sm:$0xf]
    %v5363 = vld [vmem:[#allocation8 + $0x1ec] sm:$0xf]
    %v5364 = vld [vmem:[#allocation8 + $0x1f0] sm:$0xf]
    %v5365 = vld [vmem:[#allocation8 + $0x1f4] sm:$0xf]
    %v5366 = vld [vmem:[#allocation8 + $0x1f8] sm:$0xf]
    %v5367 = vld [vmem:[#allocation8 + $0x1fc] sm:$0xf]
    %v5368 = vld [vmem:[#allocation8 + $0x200] sm:$0xf]
    %v5369 = vld [vmem:[#allocation8 + $0x204] sm:$0xf]
    %v5370 = vld [vmem:[#allocation8 + $0x208] sm:$0xf]
    %v5371 = vld [vmem:[#allocation8 + $0x20c] sm:$0xf]
    %v5372 = vld [vmem:[#allocation8 + $0x210] sm:$0xf]
    %v5373 = vld [vmem:[#allocation8 + $0x214] sm:$0xf]
    %v5374 = vld [vmem:[#allocation8 + $0x218] sm:$0xf]
    %v5375 = vld [vmem:[#allocation8 + $0x21c] sm:$0xf]
    %v5376 = vld [vmem:[#allocation8 + $0x220] sm:$0xf]
    %v5377 = vld [vmem:[#allocation8 + $0x224] sm:$0xf]
    %v5378 = vld [vmem:[#allocation8 + $0x228] sm:$0xf]
    %v5379 = vld [vmem:[#allocation8 + $0x22c] sm:$0xf]
    %v5380 = vld [vmem:[#allocation8 + $0x230] sm:$0xf]
    %v5381 = vld [vmem:[#allocation8 + $0x234] sm:$0xf]
    %v5382 = vld [vmem:[#allocation8 + $0x238] sm:$0xf]
    %v5383 = vld [vmem:[#allocation8 + $0x23c] sm:$0xf]
    %v5384 = vld [vmem:[#allocation10] sm:$0x1]
    %v5386 = vlaneseq
    %v5387 = vshrl.u32 %v5386, 7
    %v5388 = vsub.s32 0, %v5387
    %v5389 = vrot.slane %v5384, %v5388
    %v5535 = vunpack.c.l.b16 %v5240
    %v5536 = vunpack.c.l.b16 %v5241
    %v5537 = vunpack.c.l.b16 %v5242
    %v5538 = vunpack.c.l.b16 %v5243
    %v5539 = vunpack.c.l.b16 %v5244
    %v5540 = vunpack.c.l.b16 %v5245
    %v5541 = vunpack.c.l.b16 %v5246
    %v5542 = vunpack.c.l.b16 %v5247
    %v5543 = vunpack.c.l.b16 %v5248
    %v5544 = vunpack.c.l.b16 %v5249
    %v5545 = vunpack.c.l.b16 %v5250
    %v5546 = vunpack.c.l.b16 %v5251
    %v5547 = vunpack.c.l.b16 %v5252
    %v5548 = vunpack.c.l.b16 %v5253
    %v5549 = vunpack.c.l.b16 %v5254
    %v5550 = vunpack.c.l.b16 %v5255
    %v5551 = vunpack.c.l.b16 %v5256
    %v5552 = vunpack.c.l.b16 %v5257
    %v5553 = vunpack.c.l.b16 %v5258
    %v5554 = vunpack.c.l.b16 %v5259
    %v5555 = vunpack.c.l.b16 %v5260
    %v5556 = vunpack.c.l.b16 %v5261
    %v5557 = vunpack.c.l.b16 %v5262
    %v5558 = vunpack.c.l.b16 %v5263
    %v5559 = vunpack.c.l.b16 %v5264
    %v5560 = vunpack.c.l.b16 %v5265
    %v5561 = vunpack.c.l.b16 %v5266
    %v5562 = vunpack.c.l.b16 %v5267
    %v5563 = vunpack.c.l.b16 %v5268
    %v5564 = vunpack.c.l.b16 %v5269
    %v5565 = vunpack.c.l.b16 %v5270
    %v5566 = vunpack.c.l.b16 %v5271
    %v5567 = vunpack.c.l.b16 %v5272
    %v5568 = vunpack.c.l.b16 %v5273
    %v5569 = vunpack.c.l.b16 %v5274
    %v5570 = vunpack.c.l.b16 %v5275
    %v5571 = vunpack.c.l.b16 %v5276
    %v5572 = vunpack.c.l.b16 %v5277
    %v5573 = vunpack.c.l.b16 %v5278
    %v5574 = vunpack.c.l.b16 %v5279
    %v5575 = vunpack.c.l.b16 %v5280
    %v5576 = vunpack.c.l.b16 %v5281
    %v5577 = vunpack.c.l.b16 %v5282
    %v5578 = vunpack.c.l.b16 %v5283
    %v5579 = vunpack.c.l.b16 %v5284
    %v5580 = vunpack.c.l.b16 %v5285
    %v5581 = vunpack.c.l.b16 %v5286
    %v5582 = vunpack.c.l.b16 %v5287
    %v5583 = vunpack.c.l.b16 %v5288
    %v5584 = vunpack.c.l.b16 %v5289
    %v5585 = vunpack.c.l.b16 %v5290
    %v5586 = vunpack.c.l.b16 %v5291
    %v5587 = vunpack.c.l.b16 %v5292
    %v5588 = vunpack.c.l.b16 %v5293
    %v5589 = vunpack.c.l.b16 %v5294
    %v5590 = vunpack.c.l.b16 %v5295
    %v5591 = vunpack.c.l.b16 %v5296
    %v5592 = vunpack.c.l.b16 %v5297
    %v5593 = vunpack.c.l.b16 %v5298
    %v5594 = vunpack.c.l.b16 %v5299
    %v5595 = vunpack.c.l.b16 %v5300
    %v5596 = vunpack.c.l.b16 %v5301
    %v5597 = vunpack.c.l.b16 %v5302
    %v5598 = vunpack.c.l.b16 %v5303
    %v5599 = vunpack.c.l.b16 %v5304
    %v5600 = vunpack.c.l.b16 %v5305
    %v5601 = vunpack.c.l.b16 %v5306
    %v5602 = vunpack.c.l.b16 %v5307
    %v5603 = vunpack.c.l.b16 %v5308
    %v5604 = vunpack.c.l.b16 %v5309
    %v5605 = vunpack.c.l.b16 %v5310
    %v5606 = vunpack.c.l.b16 %v5311
    %v5607 = vunpack.c.l.b16 %v5312
    %v5608 = vunpack.c.l.b16 %v5313
    %v5609 = vunpack.c.l.b16 %v5314
    %v5610 = vunpack.c.l.b16 %v5315
    %v5611 = vunpack.c.l.b16 %v5316
    %v5612 = vunpack.c.l.b16 %v5317
    %v5613 = vunpack.c.l.b16 %v5318
    %v5614 = vunpack.c.l.b16 %v5319
    %v5615 = vunpack.c.l.b16 %v5320
    %v5616 = vunpack.c.l.b16 %v5321
    %v5617 = vunpack.c.l.b16 %v5322
    %v5618 = vunpack.c.l.b16 %v5323
    %v5619 = vunpack.c.l.b16 %v5324
    %v5620 = vunpack.c.l.b16 %v5325
    %v5621 = vunpack.c.l.b16 %v5326
    %v5622 = vunpack.c.l.b16 %v5327
    %v5623 = vunpack.c.l.b16 %v5328
    %v5624 = vunpack.c.l.b16 %v5329
    %v5625 = vunpack.c.l.b16 %v5330
    %v5626 = vunpack.c.l.b16 %v5331
    %v5627 = vunpack.c.l.b16 %v5332
    %v5628 = vunpack.c.l.b16 %v5333
    %v5629 = vunpack.c.l.b16 %v5334
    %v5630 = vunpack.c.l.b16 %v5335
    %v5631 = vunpack.c.l.b16 %v5336
    %v5632 = vunpack.c.l.b16 %v5337
    %v5633 = vunpack.c.l.b16 %v5338
    %v5634 = vunpack.c.l.b16 %v5339
    %v5635 = vunpack.c.l.b16 %v5340
    %v5636 = vunpack.c.l.b16 %v5341
    %v5637 = vunpack.c.l.b16 %v5342
    %v5638 = vunpack.c.l.b16 %v5343
    %v5639 = vunpack.c.l.b16 %v5344
    %v5640 = vunpack.c.l.b16 %v5345
    %v5641 = vunpack.c.l.b16 %v5346
    %v5642 = vunpack.c.l.b16 %v5347
    %v5643 = vunpack.c.l.b16 %v5348
    %v5644 = vunpack.c.l.b16 %v5349
    %v5645 = vunpack.c.l.b16 %v5350
    %v5646 = vunpack.c.l.b16 %v5351
    %v5647 = vunpack.c.l.b16 %v5352
    %v5648 = vunpack.c.l.b16 %v5353
    %v5649 = vunpack.c.l.b16 %v5354
    %v5650 = vunpack.c.l.b16 %v5355
    %v5651 = vunpack.c.l.b16 %v5356
    %v5652 = vunpack.c.l.b16 %v5357
    %v5653 = vunpack.c.l.b16 %v5358
    %v5654 = vunpack.c.l.b16 %v5359
    %v5655 = vunpack.c.l.b16 %v5360
    %v5656 = vunpack.c.l.b16 %v5361
    %v5657 = vunpack.c.l.b16 %v5362
    %v5658 = vunpack.c.l.b16 %v5363
    %v5659 = vunpack.c.l.b16 %v5364
    %v5660 = vunpack.c.l.b16 %v5365
    %v5661 = vunpack.c.l.b16 %v5366
    %v5662 = vunpack.c.l.b16 %v5367
    %v5663 = vunpack.c.l.b16 %v5368
    %v5664 = vunpack.c.l.b16 %v5369
    %v5665 = vunpack.c.l.b16 %v5370
    %v5666 = vunpack.c.l.b16 %v5371
    %v5667 = vunpack.c.l.b16 %v5372
    %v5668 = vunpack.c.l.b16 %v5373
    %v5669 = vunpack.c.l.b16 %v5374
    %v5670 = vunpack.c.l.b16 %v5375
    %v5671 = vunpack.c.l.b16 %v5376
    %v5672 = vunpack.c.l.b16 %v5377
    %v5673 = vunpack.c.l.b16 %v5378
    %v5674 = vunpack.c.l.b16 %v5379
    %v5675 = vunpack.c.l.b16 %v5380
    %v5676 = vunpack.c.l.b16 %v5381
    %v5677 = vunpack.c.l.b16 %v5382
    %v5678 = vunpack.c.l.b16 %v5383
    %v5679 = vpack.c.b16 %v5536, %v5535
    %v5680 = vpack.c.b16 %v5538, %v5537
    %v5681 = vpack.c.b16 %v5540, %v5539
    %v5682 = vpack.c.b16 %v5542, %v5541
    %v5683 = vpack.c.b16 %v5544, %v5543
    %v5684 = vpack.c.b16 %v5546, %v5545
    %v5685 = vpack.c.b16 %v5548, %v5547
    %v5686 = vpack.c.b16 %v5550, %v5549
    %v5687 = vpack.c.b16 %v5552, %v5551
    %v5688 = vpack.c.b16 %v5554, %v5553
    %v5689 = vpack.c.b16 %v5556, %v5555
    %v5690 = vpack.c.b16 %v5558, %v5557
    %v5691 = vpack.c.b16 %v5560, %v5559
    %v5692 = vpack.c.b16 %v5562, %v5561
    %v5693 = vpack.c.b16 %v5564, %v5563
    %v5694 = vpack.c.b16 %v5566, %v5565
    %v5695 = vpack.c.b16 %v5568, %v5567
    %v5696 = vpack.c.b16 %v5570, %v5569
    %v5697 = vpack.c.b16 %v5572, %v5571
    %v5698 = vpack.c.b16 %v5574, %v5573
    %v5699 = vpack.c.b16 %v5576, %v5575
    %v5700 = vpack.c.b16 %v5578, %v5577
    %v5701 = vpack.c.b16 %v5580, %v5579
    %v5702 = vpack.c.b16 %v5582, %v5581
    %v5703 = vpack.c.b16 %v5584, %v5583
    %v5704 = vpack.c.b16 %v5586, %v5585
    %v5705 = vpack.c.b16 %v5588, %v5587
    %v5706 = vpack.c.b16 %v5590, %v5589
    %v5707 = vpack.c.b16 %v5592, %v5591
    %v5708 = vpack.c.b16 %v5594, %v5593
    %v5709 = vpack.c.b16 %v5596, %v5595
    %v5710 = vpack.c.b16 %v5598, %v5597
    %v5711 = vpack.c.b16 %v5600, %v5599
    %v5712 = vpack.c.b16 %v5602, %v5601
    %v5713 = vpack.c.b16 %v5604, %v5603
    %v5714 = vpack.c.b16 %v5606, %v5605
    %v5715 = vpack.c.b16 %v5608, %v5607
    %v5716 = vpack.c.b16 %v5610, %v5609
    %v5717 = vpack.c.b16 %v5612, %v5611
    %v5718 = vpack.c.b16 %v5614, %v5613
    %v5719 = vpack.c.b16 %v5616, %v5615
    %v5720 = vpack.c.b16 %v5618, %v5617
    %v5721 = vpack.c.b16 %v5620, %v5619
    %v5722 = vpack.c.b16 %v5622, %v5621
    %v5723 = vpack.c.b16 %v5624, %v5623
    %v5724 = vpack.c.b16 %v5626, %v5625
    %v5725 = vpack.c.b16 %v5628, %v5627
    %v5726 = vpack.c.b16 %v5630, %v5629
    %v5727 = vpack.c.b16 %v5632, %v5631
    %v5728 = vpack.c.b16 %v5634, %v5633
    %v5729 = vpack.c.b16 %v5636, %v5635
    %v5730 = vpack.c.b16 %v5638, %v5637
    %v5731 = vpack.c.b16 %v5640, %v5639
    %v5732 = vpack.c.b16 %v5642, %v5641
    %v5733 = vpack.c.b16 %v5644, %v5643
    %v5734 = vpack.c.b16 %v5646, %v5645
    %v5735 = vpack.c.b16 %v5648, %v5647
    %v5736 = vpack.c.b16 %v5650, %v5649
    %v5737 = vpack.c.b16 %v5652, %v5651
    %v5738 = vpack.c.b16 %v5654, %v5653
    %v5739 = vpack.c.b16 %v5656, %v5655
    %v5740 = vpack.c.b16 %v5658, %v5657
    %v5741 = vpack.c.b16 %v5660, %v5659
    %v5742 = vpack.c.b16 %v5662, %v5661
    %v5743 = vpack.c.b16 %v5664, %v5663
    %v5744 = vpack.c.b16 %v5666, %v5665
    %v5745 = vpack.c.b16 %v5668, %v5667
    %v5746 = vpack.c.b16 %v5670, %v5669
    %v5747 = vpack.c.b16 %v5672, %v5671
    %v5748 = vpack.c.b16 %v5674, %v5673
    %v5749 = vpack.c.b16 %v5676, %v5675
    %v5750 = vpack.c.b16 %v5678, %v5677
    %5823 = vmatprep.subr.bf16.mxu0 0
    %5824 = vmatpush1.bf16.msra.mxu0 %v5686
    %5825 = vmatprep.subr.bf16.mxu0 0
    %5826 = vmatpush1.bf16.msra.mxu0 %v5685
    %5827 = vmatprep.subr.bf16.mxu0 0
    %5828 = vmatpush1.bf16.msra.mxu0 %v5684
    %5829 = vmatprep.subr.bf16.mxu0 0
    %5830 = vmatpush1.bf16.msra.mxu0 %v5683
    %5831 = vmatprep.subr.bf16.mxu0 0
    %5832 = vmatpush1.bf16.msra.mxu0 %v5682
    %5833 = vmatprep.subr.bf16.mxu0 0
    %5834 = vmatpush1.bf16.msra.mxu0 %v5681
    %5835 = vmatprep.subr.bf16.mxu0 0
    %5836 = vmatpush1.bf16.msra.mxu0 %v5680
    %5837 = vmatprep.subr.bf16.mxu0 0
    %5838 = vmatpush1.bf16.msra.mxu0 %v5679
    %5839 = vmatprep.subr.bf16.mxu0 0
    %5840 = vmatpush2.bf16.msra.mxu0 %v5694
    %5841 = vmatprep.subr.bf16.mxu0 0
    %5842 = vmatpush2.bf16.msra.mxu0 %v5693
    %5843 = vmatprep.subr.bf16.mxu0 0
    %5844 = vmatpush2.bf16.msra.mxu0 %v5692
    %5845 = vmatprep.subr.bf16.mxu0 0
    %5846 = vmatpush2.bf16.msra.mxu0 %v5691
    %5847 = vmatprep.subr.bf16.mxu0 0
    %5848 = vmatpush2.bf16.msra.mxu0 %v5690
    %5849 = vmatprep.subr.bf16.mxu0 0
    %5850 = vmatpush2.bf16.msra.mxu0 %v5689
    %5851 = vmatprep.subr.bf16.mxu0 0
    %5852 = vmatpush2.bf16.msra.mxu0 %v5688
    %5853 = vmatprep.subr.bf16.mxu0 0
    %5854 = vmatpush2.bf16.msra.mxu0 %v5687
    %5855 = vmatprep.mubr.bf16.mxu0 %v5232
    %5856 = vmatmul.mubr.bf16.gmra.mxu0 %v5231
    %v5857 = vpop.f32.mrf.mxu0
    %v5858 = vadd.f32 %v5389, %v5857
    %v5859 = vpop.f32.mrf.mxu0
    %v5860 = vpop.f32.mrf.mxu0
    %v5861 = vpop.f32.mrf.mxu0
    %5862 = vdwg.mxu0
    %5863 = vmatprep.subr.bf16.mxu0 0
    %5864 = vmatpush1.bf16.msra.mxu0 %v5702
    %5865 = vmatprep.subr.bf16.mxu0 0
    %5866 = vmatpush1.bf16.msra.mxu0 %v5701
    %5867 = vmatprep.subr.bf16.mxu0 0
    %5868 = vmatpush1.bf16.msra.mxu0 %v5700
    %5869 = vmatprep.subr.bf16.mxu0 0
    %5870 = vmatpush1.bf16.msra.mxu0 %v5699
    %5871 = vmatprep.subr.bf16.mxu0 0
    %5872 = vmatpush1.bf16.msra.mxu0 %v5698
    %5873 = vmatprep.subr.bf16.mxu0 0
    %5874 = vmatpush1.bf16.msra.mxu0 %v5697
    %5875 = vmatprep.subr.bf16.mxu0 0
    %5876 = vmatpush1.bf16.msra.mxu0 %v5696
    %5877 = vmatprep.subr.bf16.mxu0 0
    %5878 = vmatpush1.bf16.msra.mxu0 %v5695
    %5879 = vmatprep.subr.bf16.mxu0 0
    %5880 = vmatpush2.bf16.msra.mxu0 %v5710
    %5881 = vmatprep.subr.bf16.mxu0 0
    %5882 = vmatpush2.bf16.msra.mxu0 %v5709
    %5883 = vmatprep.subr.bf16.mxu0 0
    %5884 = vmatpush2.bf16.msra.mxu0 %v5708
    %5885 = vmatprep.subr.bf16.mxu0 0
    %5886 = vmatpush2.bf16.msra.mxu0 %v5707
    %5887 = vmatprep.subr.bf16.mxu0 0
    %5888 = vmatpush2.bf16.msra.mxu0 %v5706
    %5889 = vmatprep.subr.bf16.mxu0 0
    %5890 = vmatpush2.bf16.msra.mxu0 %v5705
    %5891 = vmatprep.subr.bf16.mxu0 0
    %5892 = vmatpush2.bf16.msra.mxu0 %v5704
    %5893 = vmatprep.subr.bf16.mxu0 0
    %5894 = vmatpush2.bf16.msra.mxu0 %v5703
    %5895 = vmatprep.mubr.bf16.mxu0 %v5234
    %5896 = vmatmul.mubr.bf16.gmra.mxu0 %v5233
    %v5897 = vpop.f32.mrf.mxu0
    %v5898 = vadd.f32 %v5858, %v5897
    %v5899 = vpop.f32.mrf.mxu0
    %v5900 = vpop.f32.mrf.mxu0
    %v5901 = vpop.f32.mrf.mxu0
    %5902 = vdwg.mxu0
    %5903 = vmatprep.subr.bf16.mxu0 0
    %5904 = vmatpush1.bf16.msra.mxu0 %v5718
    %5905 = vmatprep.subr.bf16.mxu0 0
    %5906 = vmatpush1.bf16.msra.mxu0 %v5717
    %5907 = vmatprep.subr.bf16.mxu0 0
    %5908 = vmatpush1.bf16.msra.mxu0 %v5716
    %5909 = vmatprep.subr.bf16.mxu0 0
    %5910 = vmatpush1.bf16.msra.mxu0 %v5715
    %5911 = vmatprep.subr.bf16.mxu0 0
    %5912 = vmatpush1.bf16.msra.mxu0 %v5714
    %5913 = vmatprep.subr.bf16.mxu0 0
    %5914 = vmatpush1.bf16.msra.mxu0 %v5713
    %5915 = vmatprep.subr.bf16.mxu0 0
    %5916 = vmatpush1.bf16.msra.mxu0 %v5712
    %5917 = vmatprep.subr.bf16.mxu0 0
    %5918 = vmatpush1.bf16.msra.mxu0 %v5711
    %5919 = vmatprep.subr.bf16.mxu0 0
    %5920 = vmatpush2.bf16.msra.mxu0 %v5726
    %5921 = vmatprep.subr.bf16.mxu0 0
    %5922 = vmatpush2.bf16.msra.mxu0 %v5725
    %5923 = vmatprep.subr.bf16.mxu0 0
    %5924 = vmatpush2.bf16.msra.mxu0 %v5724
    %5925 = vmatprep.subr.bf16.mxu0 0
    %5926 = vmatpush2.bf16.msra.mxu0 %v5723
    %5927 = vmatprep.subr.bf16.mxu0 0
    %5928 = vmatpush2.bf16.msra.mxu0 %v5722
    %5929 = vmatprep.subr.bf16.mxu0 0
    %5930 = vmatpush2.bf16.msra.mxu0 %v5721
    %5931 = vmatprep.subr.bf16.mxu0 0
    %5932 = vmatpush2.bf16.msra.mxu0 %v5720
    %5933 = vmatprep.subr.bf16.mxu0 0
    %5934 = vmatpush2.bf16.msra.mxu0 %v5719
    %5935 = vmatprep.mubr.bf16.mxu0 %v5236
    %5936 = vmatmul.mubr.bf16.gmra.mxu0 %v5235
    %v5937 = vpop.f32.mrf.mxu0
    %v5938 = vadd.f32 %v5898, %v5937
    %v5939 = vpop.f32.mrf.mxu0
    %v5940 = vpop.f32.mrf.mxu0
    %v5941 = vpop.f32.mrf.mxu0
    %5942 = vdwg.mxu0
    %5943 = vmatprep.subr.bf16.mxu0 0
    %5944 = vmatpush1.bf16.msra.mxu0 %v5734
    %5945 = vmatprep.subr.bf16.mxu0 0
    %5946 = vmatpush1.bf16.msra.mxu0 %v5733
    %5947 = vmatprep.subr.bf16.mxu0 0
    %5948 = vmatpush1.bf16.msra.mxu0 %v5732
    %5949 = vmatprep.subr.bf16.mxu0 0
    %5950 = vmatpush1.bf16.msra.mxu0 %v5731
    %5951 = vmatprep.subr.bf16.mxu0 0
    %5952 = vmatpush1.bf16.msra.mxu0 %v5730
    %5953 = vmatprep.subr.bf16.mxu0 0
    %5954 = vmatpush1.bf16.msra.mxu0 %v5729
    %5955 = vmatprep.subr.bf16.mxu0 0
    %5956 = vmatpush1.bf16.msra.mxu0 %v5728
    %5957 = vmatprep.subr.bf16.mxu0 0
    %5958 = vmatpush1.bf16.msra.mxu0 %v5727
    %5959 = vmatprep.subr.bf16.mxu0 0
    %5960 = vmatpush2.bf16.msra.mxu0 %v5742
    %5961 = vmatprep.subr.bf16.mxu0 0
    %5962 = vmatpush2.bf16.msra.mxu0 %v5741
    %5963 = vmatprep.subr.bf16.mxu0 0
    %5964 = vmatpush2.bf16.msra.mxu0 %v5740
    %5965 = vmatprep.subr.bf16.mxu0 0
    %5966 = vmatpush2.bf16.msra.mxu0 %v5739
    %5967 = vmatprep.subr.bf16.mxu0 0
    %5968 = vmatpush2.bf16.msra.mxu0 %v5738
    %5969 = vmatprep.subr.bf16.mxu0 0
    %5970 = vmatpush2.bf16.msra.mxu0 %v5737
    %5971 = vmatprep.subr.bf16.mxu0 0
    %5972 = vmatpush2.bf16.msra.mxu0 %v5736
    %5973 = vmatprep.subr.bf16.mxu0 0
    %5974 = vmatpush2.bf16.msra.mxu0 %v5735
    %5975 = vmatprep.mubr.bf16.mxu0 %v5238
    %5976 = vmatmul.mubr.bf16.gmra.mxu0 %v5237
    %v5977 = vpop.f32.mrf.mxu0
    %v5978 = vadd.f32 %v5938, %v5977
    %v5979 = vpop.f32.mrf.mxu0
    %v5980 = vpop.f32.mrf.mxu0
    %v5981 = vpop.f32.mrf.mxu0
    %5982 = vdwg.mxu0
    %5983 = vmatprep.subr.bf16.mxu0 0
    %5984 = vmatpush1.bf16.msra.mxu0 %v5750
    %5985 = vmatprep.subr.bf16.mxu0 0
    %5986 = vmatpush1.bf16.msra.mxu0 %v5749
    %5987 = vmatprep.subr.bf16.mxu0 0
    %5988 = vmatpush1.bf16.msra.mxu0 %v5748
    %5989 = vmatprep.subr.bf16.mxu0 0
    %5990 = vmatpush1.bf16.msra.mxu0 %v5747
    %5991 = vmatprep.subr.bf16.mxu0 0
    %5992 = vmatpush1.bf16.msra.mxu0 %v5746
    %5993 = vmatprep.subr.bf16.mxu0 0
    %5994 = vmatpush1.bf16.msra.mxu0 %v5745
    %5995 = vmatprep.subr.bf16.mxu0 0
    %5996 = vmatpush1.bf16.msra.mxu0 %v5744
    %5997 = vmatprep.subr.bf16.mxu0 0
    %5998 = vmatpush1.bf16.msra.mxu0 %v5743
    %5999 = vmatprep.subr.bf16.mxu0 0
    %6000 = vmatpush2.bf16.msra.mxu0 0
    %6001 = vmatprep.subr.bf16.mxu0 0
    %6002 = vmatpush2.bf16.msra.mxu0 0
    %6003 = vmatprep.subr.bf16.mxu0 0
    %6004 = vmatpush2.bf16.msra.mxu0 0
    %6005 = vmatprep.subr.bf16.mxu0 0
    %6006 = vmatpush2.bf16.msra.mxu0 0
    %6007 = vmatprep.subr.bf16.mxu0 0
    %6008 = vmatpush2.bf16.msra.mxu0 0
    %6009 = vmatprep.subr.bf16.mxu0 0
    %6010 = vmatpush2.bf16.msra.mxu0 0
    %6011 = vmatprep.subr.bf16.mxu0 0
    %6012 = vmatpush2.bf16.msra.mxu0 0
    %6013 = vmatprep.subr.bf16.mxu0 0
    %6014 = vmatpush2.bf16.msra.mxu0 0
    %6015 = vmatprep.mubr.bf16.mxu0 0
    %6016 = vmatmul.mubr.bf16.gmra.mxu0 %v5239
    %v6017 = vpop.f32.mrf.mxu0
    %v6018 = vadd.f32 %v5978, %v6017
    %v6019 = vpop.f32.mrf.mxu0
    %v6020 = vpop.f32.mrf.mxu0
    %v6021 = vpop.f32.mrf.mxu0
    %6022 = vdwg.mxu0
    %6023 = vst [vmem:[#allocation11] sm:$0xff] %v6018
    // Predicated region
    $region42: #{tpu_custom_call.1} parent=1 // pred_check
      _
    $region43: #{tpu_custom_call.1} parent=1 // pred_check_branch
      %6025 = sbr.rel (0) target = $region45
    $region44: #{tpu_custom_call.1} parent=1 // pred_region
      %s6027 = ssub.s32 128, 128
      %6028 = vsyncadd [#allocation4], %s6027
      %s6030 = sshll.u32 [#allocation11], 4
      %s6031 = int_to_ptr.vmem [resolvable:$true] %s6030
      %6033 = dma.vmem_to_hbm [thread:$0]  %s6031, 128, %s5, [#allocation4]
    $region45: #{tpu_custom_call.1} parent=1 // pred_fallthru
      _
    // Predicated region
    $region46: #{tpu_custom_call.1} parent=1 // pred_check
      _
    $region47: #{tpu_custom_call.1} parent=1 // pred_check_branch
      %6035 = sbr.rel (0) target = $region49
    $region48: #{tpu_custom_call.1} parent=1 // pred_region
      %6036 = dma.done [#allocation4], 128
    $region49: #{tpu_custom_call.1} parent=1 // pred_fallthru
      _
    %6037 = vsyncpa [#allocation3], 1
    %6038 = vsyncpa [#allocation6], 1
    %6039 = vsyncpa [#allocation9], 1
    %6040 = vsyncpa [#allocation4], 1

</llo_original>
